<compile_context>
chip_gen: v6e
topology: v6e:2x2x1
jax: 0.10.0
libtpu: 0.0.40
codegen_flags: <defaults>
</compile_context>

<pallas_src>
import functools
import math

import jax
import jax.numpy as jnp
import numpy as np
from jax import lax
from jax.experimental import pallas as pl
from jax.experimental.pallas import tpu as pltpu


def _transformer_layer_kernel(
    x_ref,        # (B_tile, L, E)  activations, batch-first slab
    wqkv_ref,     # (E, 3E)  fused (MHA in_proj ∘ outer q/k/v Linear), (in, out), q pre-scaled
    bqkv_ref,     # (1, 3E)  f32 [bq*scale | bk | bv]
    wo_ref,       # (E, E)   out_proj weight, (in, out)
    bo_ref,       # (1, E)   f32 out_proj bias
    w1_ref,       # (E, E)   fc1 weight, (in, out)
    w2_ref,       # (E, E)   fc2 weight, (in, out)
    o_ref,        # (B_tile, L, E)
    qkv_scr,      # VMEM (B_tile*L, 3E), operand dtype
    pv_scr,       # VMEM (B_tile*L, E),  operand dtype (pre-out_proj head outputs)
    *,
    num_heads,
    head_dim,
    heads_per_group,
):
    f32 = jnp.float32
    B, L, E = x_ref.shape
    cdt = x_ref.dtype                       # matmul operand dtype (no f32 upcast)

    # (B, L, E) -> (B*L, E): free re-tiling when L % 8 == 0.
    x = x_ref[...].reshape(B * L, E)

    # Single fused projection matmul (replaces six projection matmuls);
    # bias added in f32, cast to the operand dtype ONCE on the way into scratch.
    qkv = jnp.dot(x, wqkv_ref[...], preferred_element_type=f32)
    qkv_scr[...] = (qkv + bqkv_ref[...]).astype(cdt)

    gw = heads_per_group * head_dim          # lane width of one head group
    num_groups = num_heads // heads_per_group

    # Per-sequence attention.  Loop (not Python unroll) bounds live ranges to one
    # sequence; each head group's p@v is stored lane-packed into pv_scr so the
    # out-projection can run as ONE wide matmul afterwards.
    @pl.loop(0, B)
    def _(b):
        r0 = pl.multiple_of(b * L, 8)
        for g in range(num_groups):              # static, small
            c0 = g * gw
            qg = qkv_scr[pl.ds(r0, L), c0:c0 + gw]                       # (L, gw)
            kg = qkv_scr[pl.ds(r0, L), E + c0:E + c0 + gw]
            vg = qkv_scr[pl.ds(r0, L), 2 * E + c0:2 * E + c0 + gw]
            pv_parts = []
            for h in range(heads_per_group):     # static, short (usually 1-2)
                lo = h * head_dim
                hi = lo + head_dim
                qh = qg[:, lo:hi]
                kh = kg[:, lo:hi]
                vh = vg[:, lo:hi]
                # scores: contract head dim of both operands (q already pre-scaled)
                s = lax.dot_general(qh, kh, (((1,), (1,)), ((), ())),
                                    preferred_element_type=f32)          # (L, L) f32
                s = s - jnp.max(s, axis=-1, keepdims=True)
                p = jnp.exp(s)
                inv = pl.reciprocal(jnp.sum(p, axis=-1, keepdims=True), approx=True)
                p = (p * inv).astype(cdt)
                pv_parts.append(jnp.dot(p, vh, preferred_element_type=f32))   # (L, D)
            pv_g = pv_parts[0] if heads_per_group == 1 else jnp.concatenate(pv_parts, axis=-1)
            pv_scr[pl.ds(r0, L), c0:c0 + gw] = pv_g.astype(cdt)

    # One wide out-projection over all B*L rows, then bias + residual (f32).
    attn = jnp.dot(pv_scr[...], wo_ref[...], preferred_element_type=f32)
    x1 = attn + bo_ref[...] + x_ref[...].reshape(B * L, E).astype(f32)

    # FFN (biasless): fc2(fc1(x1)) + x1, batched over all rows.
    h1 = jnp.dot(x1.astype(cdt), w1_ref[...], preferred_element_type=f32)
    y = jnp.dot(h1.astype(cdt), w2_ref[...], preferred_element_type=f32) + x1

    o_ref[...] = y.reshape(B, L, E).astype(o_ref.dtype)


def prepare_transformer_params(params, num_heads):
    """One-time host-side fusion (call ONCE, outside the per-forward path).

    Folds the outer q/k/v Linears into the MHA in_proj (f32), pre-scales the q block
    by 1/sqrt(head_dim), pre-transposes everything to (in, out) and concatenates the
    three projections into one (E, 3E) weight.
    """
    (wq, wk, wv, wiq, wik, wiv, biq, bik, biv, wo, bo, w1, w2) = params
    E = wq.shape[0]
    assert E % num_heads == 0
    head_dim = E // num_heads
    scale = 1.0 / math.sqrt(head_dim)
    pdt = wq.dtype
    f32 = jnp.float32

    wq_eff = (wiq.astype(f32) @ wq.astype(f32)) * scale        # (out, in), scale folded
    wk_eff = wik.astype(f32) @ wk.astype(f32)
    wv_eff = wiv.astype(f32) @ wv.astype(f32)
    w_qkv = jnp.concatenate([wq_eff.T, wk_eff.T, wv_eff.T], axis=1).astype(pdt)   # (E, 3E)
    b_qkv = jnp.concatenate([biq.astype(f32) * scale,
                             bik.astype(f32),
                             biv.astype(f32)]).reshape(1, 3 * E)
    wo_t = wo.T.astype(pdt)
    bo_r = bo.reshape(1, E).astype(f32)
    w1_t = w1.T.astype(pdt)
    w2_t = w2.T.astype(pdt)
    return (w_qkv, b_qkv, wo_t, bo_r, w1_t, w2_t)


def transformer_layer(x_lne, fused_params, num_heads, *, batch_tile=None):
    """x_lne: (L, N, E) — same convention as the PyTorch module (batch_first=False)."""
    L, N, E = x_lne.shape
    assert E % num_heads == 0
    head_dim = E // num_heads
    assert L % 8 == 0, "seq len must be a multiple of 8 for the free (B,L,E)->(B*L,E) flatten"
    # NOTE: for best lane utilization E should be a multiple of 128 (lane-dense
    # output stores); sub-128 E works but lowers to masked stores.

    (w_qkv, b_qkv, wo_t, bo_r, w1_t, w2_t) = fused_params
    cdt = x_lne.dtype

    # Head grouping so VMEM loads/stores in the head loop are 128-lane aligned.
    if head_dim % 128 == 0:
        heads_per_group = 1
    elif 128 % head_dim == 0 and num_heads % (128 // head_dim) == 0:
        heads_per_group = 128 // head_dim
    else:
        heads_per_group = num_heads          # E-wide single group (small-E fallback)

    # batch_tile: target ~512 rows per grid step (MXU-friendly M), but keep at least
    # 2 parallel grid steps when N allows (v7x has 2 TensorCores).
    if batch_tile is None:
        batch_tile = min(N, max(1, 512 // L))
        if N >= 2:
            batch_tile = min(batch_tile, max(1, N // 2))
    # Pad N to a multiple of batch_tile (instead of degrading to batch_tile=1).
    n_steps = pl.cdiv(N, batch_tile)
    N_pad = n_steps * batch_tile

    x_nle = jnp.transpose(x_lne, (1, 0, 2))                    # (N, L, E)
    if N_pad != N:
        x_nle = jnp.pad(x_nle, ((0, N_pad - N), (0, 0), (0, 0)))

    # Generation-aware VMEM budget (v7x: 64 MiB physical -> ~54 MiB; v5e/v6e: 128 MiB
    # physical -> ~109 MiB, well above the 16/32 MiB scoped defaults).
    try:
        phys_vmem = int(pltpu.get_tpu_info().vmem_capacity_bytes)
    except Exception:
        phys_vmem = 64 * 1024 * 1024         # conservative fallback (v7x-sized)
    vmem_limit = min(int(phys_vmem * 0.85), 110 * 1024 * 1024)

    kernel = functools.partial(
        _transformer_layer_kernel,
        num_heads=num_heads,
        head_dim=head_dim,
        heads_per_group=heads_per_group,
    )

    rows = batch_tile * L
    scratch = [
        pltpu.VMEM((rows, 3 * E), cdt),      # qkv (cast once to operand dtype)
        pltpu.VMEM((rows, E), cdt),          # lane-packed per-head p@v (pre-out_proj)
    ]

    def _call(single_buffer_weights):
        c2 = lambda b: (0, 0)

        def wspec(shape):
            if single_buffer_weights:
                # Constant index_map => double-buffering buys nothing; halve the
                # weight VMEM footprint (matters most on v7x's 64 MiB).
                return pl.BlockSpec(shape, c2, pipeline_mode=pl.Buffered(1))
            return pl.BlockSpec(shape, c2)

        in_specs = [
            pl.BlockSpec((batch_tile, L, E), lambda b: (b, 0, 0)),   # x
            wspec((E, 3 * E)),                                       # fused qkv weight
            wspec((1, 3 * E)),                                       # fused qkv bias
            wspec((E, E)),                                           # wo (pre-T)
            wspec((1, E)),                                           # bo
            wspec((E, E)),                                           # w1 (pre-T)
            wspec((E, E)),                                           # w2 (pre-T)
        ]
        out = pl.pallas_call(
            kernel,
            out_shape=jax.ShapeDtypeStruct((N_pad, L, E), cdt),
            grid=(n_steps,),
            in_specs=in_specs,
            out_specs=pl.BlockSpec((batch_tile, L, E), lambda b: (b, 0, 0)),
            scratch_shapes=scratch,
            compiler_params=pltpu.CompilerParams(
                dimension_semantics=("parallel",),
                vmem_limit_bytes=vmem_limit,
            ),
        )(x_nle, w_qkv, b_qkv, wo_t, bo_r, w1_t, w2_t)
        return jax.block_until_ready(out)

    try:
        out_nle = _call(True)
    except Exception:
        # Fallback if single-buffering via pl.Buffered(1) is not supported by this
        # JAX version; semantics are identical, only the weight VMEM footprint grows.
        out_nle = _call(False)

    out_nle = out_nle[:N]
    return jnp.transpose(out_nle, (1, 0, 2))                   # back to (L, N, E)


def _reference(x_lne, params, num_heads):
    """Pure-JAX reference mirroring PyTorch semantics."""
    (wq, wk, wv, wiq, wik, wiv, biq, bik, biv, wo, bo, w1, w2) = params
    L, N, E = x_lne.shape
    D = E // num_heads
    x = x_lne.astype(jnp.float32)

    q = x @ wq.T
    k = x @ wk.T
    v = x @ wv.T
    q2 = q @ wiq.T + biq
    k2 = k @ wik.T + bik
    v2 = v @ wiv.T + biv

    def split(t):   # (L, N, E) -> (N, H, L, D)
        return jnp.transpose(t.reshape(L, N, num_heads, D), (1, 2, 0, 3))

    qh, kh, vh = split(q2), split(k2), split(v2)
    s = jnp.einsum("nhld,nhmd->nhlm", qh, kh) / math.sqrt(D)
    p = jax.nn.softmax(s, axis=-1)
    o = jnp.einsum("nhlm,nhmd->nhld", p, vh)                   # (N, H, L, D)
    o = jnp.transpose(o, (2, 0, 1, 3)).reshape(L, N, E)        # (L, N, E)
    attn_out = o @ wo.T + bo
    x1 = attn_out + x
    y = (x1 @ w1.T) @ w2.T + x1
    return y


if __name__ == "__main__":
    L, N, E, H = 8, 2, 32, 4   # seq, batch, in_channel, num_heads
    key = jax.random.PRNGKey(0)
    keys = jax.random.split(key, 14)

    def w(k):
        return jax.random.normal(k, (E, E), dtype=jnp.float32) * (1.0 / math.sqrt(E))

    wq, wk, wv = w(keys[0]), w(keys[1]), w(keys[2])
    wiq, wik, wiv = w(keys[3]), w(keys[4]), w(keys[5])
    biq = jax.random.normal(keys[6], (E,), dtype=jnp.float32) * 0.02
    bik = jax.random.normal(keys[7], (E,), dtype=jnp.float32) * 0.02
    biv = jax.random.normal(keys[8], (E,), dtype=jnp.float32) * 0.02
    wo = w(keys[9])
    bo = jax.random.normal(keys[10], (E,), dtype=jnp.float32) * 0.02
    w1, w2 = w(keys[11]), w(keys[12])

    params = (wq, wk, wv, wiq, wik, wiv, biq, bik, biv, wo, bo, w1, w2)

    x = jax.random.normal(keys[13], (L, N, E), dtype=jnp.float32)

    # One-time host-side weight fusion (outside the per-forward path).
    fused = prepare_transformer_params(params, H)

    out = transformer_layer(x, fused, H)
    out = jax.block_until_ready(out)

    ref = _reference(x, params, H)
    # Tolerance loosened vs 1e-4: pl.reciprocal(approx=True) introduces ~1e-3 relative
    # error in the softmax normalization (EUP approximation).
    np.testing.assert_allclose(np.asarray(out), np.asarray(ref), atol=2e-2, rtol=2e-2)

    print("KERNEL_OK")
</pallas_src>

<mosaic_0001>
module attributes {stable_mosaic.version = 11 : i64} {
  func.func @_transformer_layer_kernel(%arg0: i32, %arg1: memref<1x8x32xf32, #tpu.memory_space<vmem>>, %arg2: memref<32x96xf32, #tpu.memory_space<vmem>>, %arg3: memref<1x96xf32, #tpu.memory_space<vmem>>, %arg4: memref<32x32xf32, #tpu.memory_space<vmem>>, %arg5: memref<1x32xf32, #tpu.memory_space<vmem>>, %arg6: memref<32x32xf32, #tpu.memory_space<vmem>>, %arg7: memref<32x32xf32, #tpu.memory_space<vmem>>, %arg8: memref<1x8x32xf32, #tpu.memory_space<vmem>>, %arg9: memref<8x96xf32, #tpu.memory_space<vmem>>, %arg10: memref<8x32xf32, #tpu.memory_space<vmem>>) attributes {dimension_semantics = [#tpu.dimension_semantics<parallel>], iteration_bounds = array<i64: 2>, scalar_prefetch = 0 : i64, scratch_operands = 2 : i64, tpu.core_type = #tpu.core_type<tc>, window_params = [{transform_indices = @transform_0, window_bounds = array<i64: 1, 8, 32>}, {pipeline_mode = #tpu.pipeline_mode<synchronous>, transform_indices = @transform_1, window_bounds = array<i64: 32, 96>}, {pipeline_mode = #tpu.pipeline_mode<synchronous>, transform_indices = @transform_2, window_bounds = array<i64: 1, 96>}, {pipeline_mode = #tpu.pipeline_mode<synchronous>, transform_indices = @transform_3, window_bounds = array<i64: 32, 32>}, {pipeline_mode = #tpu.pipeline_mode<synchronous>, transform_indices = @transform_4, window_bounds = array<i64: 1, 32>}, {pipeline_mode = #tpu.pipeline_mode<synchronous>, transform_indices = @transform_5, window_bounds = array<i64: 32, 32>}, {pipeline_mode = #tpu.pipeline_mode<synchronous>, transform_indices = @transform_6, window_bounds = array<i64: 32, 32>}, {transform_indices = @transform_7, window_bounds = array<i64: 1, 8, 32>}]} {
    %c0 = arith.constant 0 : index
    %c0_0 = arith.constant 0 : index
    %c0_1 = arith.constant 0 : index
    %0 = vector.load %arg1[%c0, %c0_0, %c0_1] : memref<1x8x32xf32, #tpu.memory_space<vmem>>, vector<1x8x32xf32>
    %1 = vector.shape_cast %0 : vector<1x8x32xf32> to vector<8x32xf32>
    %c0_2 = arith.constant 0 : index
    %c0_3 = arith.constant 0 : index
    %2 = vector.load %arg2[%c0_2, %c0_3] : memref<32x96xf32, #tpu.memory_space<vmem>>, vector<32x96xf32>
    %cst = arith.constant dense<0.000000e+00> : vector<8x96xf32>
    %3 = tpu.matmul %1, %2, %cst {dimension_numbers = #tpu.dot_dimension_numbers<[1], [0], [0], [1], [0, 0, 1, 1], [], []>} : vector<8x32xf32>, vector<32x96xf32>, vector<8x96xf32> -> vector<8x96xf32>
    %c0_4 = arith.constant 0 : index
    %c0_5 = arith.constant 0 : index
    %4 = vector.load %arg3[%c0_4, %c0_5] : memref<1x96xf32, #tpu.memory_space<vmem>>, vector<1x96xf32>
    %5 = vector.broadcast %4 : vector<1x96xf32> to vector<8x96xf32>
    %6 = arith.addf %3, %5 : vector<8x96xf32>
    %c0_6 = arith.constant 0 : index
    %c0_7 = arith.constant 0 : index
    %7 = vector.load %arg9[%c0_6, %c0_7] : memref<8x96xf32, #tpu.memory_space<vmem>>, vector<8x96xf32>
    tpu.vector_store %arg9[%c0_6, %c0_7], %6 {strides = array<i32>} : memref<8x96xf32, #tpu.memory_space<vmem>>, vector<8x96xf32>,
    %c0_i32 = arith.constant 0 : i32
    %c1_i32 = arith.constant 1 : i32
    %8 = arith.muli %c0_i32, %c1_i32 : i32
    %c0_i32_8 = arith.constant 0 : i32
    %9 = arith.addi %c0_i32_8, %8 : i32
    %c8_i32 = arith.constant 8 : i32
    %10 = arith.muli %9, %c8_i32 : i32
    %11 = tpu.assume_multiple %10, 8 : i32
    %12 = arith.index_cast %11 : i32 to index
    %c0_9 = arith.constant 0 : index
    %13 = vector.load %arg9[%12, %c0_9] : memref<8x96xf32, #tpu.memory_space<vmem>>, vector<8x32xf32>
    %14 = arith.index_cast %11 : i32 to index
    %c32 = arith.constant 32 : index
    %15 = vector.load %arg9[%14, %c32] : memref<8x96xf32, #tpu.memory_space<vmem>>, vector<8x32xf32>
    %16 = arith.index_cast %11 : i32 to index
    %c64 = arith.constant 64 : index
    %17 = vector.load %arg9[%16, %c64] : memref<8x96xf32, #tpu.memory_space<vmem>>, vector<8x32xf32>
    %18 = vector.extract_strided_slice %13 {offsets = [0, 0], sizes = [8, 8], strides = [1, 1]} : vector<8x32xf32> to vector<8x8xf32>
    %19 = vector.extract_strided_slice %15 {offsets = [0, 0], sizes = [8, 8], strides = [1, 1]} : vector<8x32xf32> to vector<8x8xf32>
    %20 = vector.extract_strided_slice %17 {offsets = [0, 0], sizes = [8, 8], strides = [1, 1]} : vector<8x32xf32> to vector<8x8xf32>
    %cst_10 = arith.constant dense<0.000000e+00> : vector<8x8xf32>
    %21 = tpu.matmul %18, %19, %cst_10 {dimension_numbers = #tpu.dot_dimension_numbers<[1], [1], [0], [0], [0, 0, 1, 0], [], []>} : vector<8x8xf32>, vector<8x8xf32>, vector<8x8xf32> -> vector<8x8xf32>
    %cst_11 = arith.constant dense<0xFF800000> : vector<8xf32>
    %22 = vector.multi_reduction <maximumf>, %21, %cst_11 [1] : vector<8x8xf32> to vector<8xf32>
    %23 = vector.shape_cast %22 : vector<8xf32> to vector<8x1xf32>
    %24 = vector.broadcast %23 : vector<8x1xf32> to vector<8x8xf32>
    %25 = arith.subf %21, %24 : vector<8x8xf32>
    %26 = math.exp %25 : vector<8x8xf32>
    %cst_12 = arith.constant dense<0.000000e+00> : vector<8xf32>
    %27 = vector.multi_reduction <add>, %26, %cst_12 [1] : vector<8x8xf32> to vector<8xf32>
    %28 = vector.shape_cast %27 : vector<8xf32> to vector<8x1xf32>
    %29 = tpu.reciprocal %28 {approx = true} : vector<8x1xf32> -> vector<8x1xf32>
    %30 = vector.broadcast %29 : vector<8x1xf32> to vector<8x8xf32>
    %31 = arith.mulf %26, %30 : vector<8x8xf32>
    %cst_13 = arith.constant dense<0.000000e+00> : vector<8x8xf32>
    %32 = tpu.matmul %31, %20, %cst_13 {dimension_numbers = #tpu.dot_dimension_numbers<[1], [0], [0], [1], [0, 0, 1, 1], [], []>} : vector<8x8xf32>, vector<8x8xf32>, vector<8x8xf32> -> vector<8x8xf32>
    %33 = vector.extract_strided_slice %13 {offsets = [0, 8], sizes = [8, 8], strides = [1, 1]} : vector<8x32xf32> to vector<8x8xf32>
    %34 = vector.extract_strided_slice %15 {offsets = [0, 8], sizes = [8, 8], strides = [1, 1]} : vector<8x32xf32> to vector<8x8xf32>
    %35 = vector.extract_strided_slice %17 {offsets = [0, 8], sizes = [8, 8], strides = [1, 1]} : vector<8x32xf32> to vector<8x8xf32>
    %cst_14 = arith.constant dense<0.000000e+00> : vector<8x8xf32>
    %36 = tpu.matmul %33, %34, %cst_14 {dimension_numbers = #tpu.dot_dimension_numbers<[1], [1], [0], [0], [0, 0, 1, 0], [], []>} : vector<8x8xf32>, vector<8x8xf32>, vector<8x8xf32> -> vector<8x8xf32>
    %cst_15 = arith.constant dense<0xFF800000> : vector<8xf32>
    %37 = vector.multi_reduction <maximumf>, %36, %cst_15 [1] : vector<8x8xf32> to vector<8xf32>
    %38 = vector.shape_cast %37 : vector<8xf32> to vector<8x1xf32>
    %39 = vector.broadcast %38 : vector<8x1xf32> to vector<8x8xf32>
    %40 = arith.subf %36, %39 : vector<8x8xf32>
    %41 = math.exp %40 : vector<8x8xf32>
    %cst_16 = arith.constant dense<0.000000e+00> : vector<8xf32>
    %42 = vector.multi_reduction <add>, %41, %cst_16 [1] : vector<8x8xf32> to vector<8xf32>
    %43 = vector.shape_cast %42 : vector<8xf32> to vector<8x1xf32>
    %44 = tpu.reciprocal %43 {approx = true} : vector<8x1xf32> -> vector<8x1xf32>
    %45 = vector.broadcast %44 : vector<8x1xf32> to vector<8x8xf32>
    %46 = arith.mulf %41, %45 : vector<8x8xf32>
    %cst_17 = arith.constant dense<0.000000e+00> : vector<8x8xf32>
    %47 = tpu.matmul %46, %35, %cst_17 {dimension_numbers = #tpu.dot_dimension_numbers<[1], [0], [0], [1], [0, 0, 1, 1], [], []>} : vector<8x8xf32>, vector<8x8xf32>, vector<8x8xf32> -> vector<8x8xf32>
    %48 = vector.extract_strided_slice %13 {offsets = [0, 16], sizes = [8, 8], strides = [1, 1]} : vector<8x32xf32> to vector<8x8xf32>
    %49 = vector.extract_strided_slice %15 {offsets = [0, 16], sizes = [8, 8], strides = [1, 1]} : vector<8x32xf32> to vector<8x8xf32>
    %50 = vector.extract_strided_slice %17 {offsets = [0, 16], sizes = [8, 8], strides = [1, 1]} : vector<8x32xf32> to vector<8x8xf32>
    %cst_18 = arith.constant dense<0.000000e+00> : vector<8x8xf32>
    %51 = tpu.matmul %48, %49, %cst_18 {dimension_numbers = #tpu.dot_dimension_numbers<[1], [1], [0], [0], [0, 0, 1, 0], [], []>} : vector<8x8xf32>, vector<8x8xf32>, vector<8x8xf32> -> vector<8x8xf32>
    %cst_19 = arith.constant dense<0xFF800000> : vector<8xf32>
    %52 = vector.multi_reduction <maximumf>, %51, %cst_19 [1] : vector<8x8xf32> to vector<8xf32>
    %53 = vector.shape_cast %52 : vector<8xf32> to vector<8x1xf32>
    %54 = vector.broadcast %53 : vector<8x1xf32> to vector<8x8xf32>
    %55 = arith.subf %51, %54 : vector<8x8xf32>
    %56 = math.exp %55 : vector<8x8xf32>
    %cst_20 = arith.constant dense<0.000000e+00> : vector<8xf32>
    %57 = vector.multi_reduction <add>, %56, %cst_20 [1] : vector<8x8xf32> to vector<8xf32>
    %58 = vector.shape_cast %57 : vector<8xf32> to vector<8x1xf32>
    %59 = tpu.reciprocal %58 {approx = true} : vector<8x1xf32> -> vector<8x1xf32>
    %60 = vector.broadcast %59 : vector<8x1xf32> to vector<8x8xf32>
    %61 = arith.mulf %56, %60 : vector<8x8xf32>
    %cst_21 = arith.constant dense<0.000000e+00> : vector<8x8xf32>
    %62 = tpu.matmul %61, %50, %cst_21 {dimension_numbers = #tpu.dot_dimension_numbers<[1], [0], [0], [1], [0, 0, 1, 1], [], []>} : vector<8x8xf32>, vector<8x8xf32>, vector<8x8xf32> -> vector<8x8xf32>
    %63 = vector.extract_strided_slice %13 {offsets = [0, 24], sizes = [8, 8], strides = [1, 1]} : vector<8x32xf32> to vector<8x8xf32>
    %64 = vector.extract_strided_slice %15 {offsets = [0, 24], sizes = [8, 8], strides = [1, 1]} : vector<8x32xf32> to vector<8x8xf32>
    %65 = vector.extract_strided_slice %17 {offsets = [0, 24], sizes = [8, 8], strides = [1, 1]} : vector<8x32xf32> to vector<8x8xf32>
    %cst_22 = arith.constant dense<0.000000e+00> : vector<8x8xf32>
    %66 = tpu.matmul %63, %64, %cst_22 {dimension_numbers = #tpu.dot_dimension_numbers<[1], [1], [0], [0], [0, 0, 1, 0], [], []>} : vector<8x8xf32>, vector<8x8xf32>, vector<8x8xf32> -> vector<8x8xf32>
    %cst_23 = arith.constant dense<0xFF800000> : vector<8xf32>
    %67 = vector.multi_reduction <maximumf>, %66, %cst_23 [1] : vector<8x8xf32> to vector<8xf32>
    %68 = vector.shape_cast %67 : vector<8xf32> to vector<8x1xf32>
    %69 = vector.broadcast %68 : vector<8x1xf32> to vector<8x8xf32>
    %70 = arith.subf %66, %69 : vector<8x8xf32>
    %71 = math.exp %70 : vector<8x8xf32>
    %cst_24 = arith.constant dense<0.000000e+00> : vector<8xf32>
    %72 = vector.multi_reduction <add>, %71, %cst_24 [1] : vector<8x8xf32> to vector<8xf32>
    %73 = vector.shape_cast %72 : vector<8xf32> to vector<8x1xf32>
    %74 = tpu.reciprocal %73 {approx = true} : vector<8x1xf32> -> vector<8x1xf32>
    %75 = vector.broadcast %74 : vector<8x1xf32> to vector<8x8xf32>
    %76 = arith.mulf %71, %75 : vector<8x8xf32>
    %cst_25 = arith.constant dense<0.000000e+00> : vector<8x8xf32>
    %77 = tpu.matmul %76, %65, %cst_25 {dimension_numbers = #tpu.dot_dimension_numbers<[1], [0], [0], [1], [0, 0, 1, 1], [], []>} : vector<8x8xf32>, vector<8x8xf32>, vector<8x8xf32> -> vector<8x8xf32>
    %78 = tpu.concatenate %32, %47, %62, %77 in 1 : vector<8x8xf32>, vector<8x8xf32>, vector<8x8xf32>, vector<8x8xf32> -> vector<8x32xf32>
    %79 = arith.index_cast %11 : i32 to index
    %c0_26 = arith.constant 0 : index
    %80 = vector.load %arg10[%79, %c0_26] : memref<8x32xf32, #tpu.memory_space<vmem>>, vector<8x32xf32>
    tpu.vector_store %arg10[%79, %c0_26], %78 {strides = array<i32>} : memref<8x32xf32, #tpu.memory_space<vmem>>, vector<8x32xf32>,
    %c1_i32_27 = arith.constant 1 : i32
    %c0_28 = arith.constant 0 : index
    %c0_29 = arith.constant 0 : index
    %81 = vector.load %arg10[%c0_28, %c0_29] : memref<8x32xf32, #tpu.memory_space<vmem>>, vector<8x32xf32>
    %c0_30 = arith.constant 0 : index
    %c0_31 = arith.constant 0 : index
    %82 = vector.load %arg4[%c0_30, %c0_31] : memref<32x32xf32, #tpu.memory_space<vmem>>, vector<32x32xf32>
    %cst_32 = arith.constant dense<0.000000e+00> : vector<8x32xf32>
    %83 = tpu.matmul %81, %82, %cst_32 {dimension_numbers = #tpu.dot_dimension_numbers<[1], [0], [0], [1], [0, 0, 1, 1], [], []>} : vector<8x32xf32>, vector<32x32xf32>, vector<8x32xf32> -> vector<8x32xf32>
    %c0_33 = arith.constant 0 : index
    %c0_34 = arith.constant 0 : index
    %84 = vector.load %arg5[%c0_33, %c0_34] : memref<1x32xf32, #tpu.memory_space<vmem>>, vector<1x32xf32>
    %85 = vector.broadcast %84 : vector<1x32xf32> to vector<8x32xf32>
    %86 = arith.addf %83, %85 : vector<8x32xf32>
    %c0_35 = arith.constant 0 : index
    %c0_36 = arith.constant 0 : index
    %c0_37 = arith.constant 0 : index
    %87 = vector.load %arg1[%c0_35, %c0_36, %c0_37] : memref<1x8x32xf32, #tpu.memory_space<vmem>>, vector<1x8x32xf32>
    %88 = vector.shape_cast %87 : vector<1x8x32xf32> to vector<8x32xf32>
    %89 = arith.addf %86, %88 : vector<8x32xf32>
    %c0_38 = arith.constant 0 : index
    %c0_39 = arith.constant 0 : index
    %90 = vector.load %arg6[%c0_38, %c0_39] : memref<32x32xf32, #tpu.memory_space<vmem>>, vector<32x32xf32>
    %cst_40 = arith.constant dense<0.000000e+00> : vector<8x32xf32>
    %91 = tpu.matmul %89, %90, %cst_40 {dimension_numbers = #tpu.dot_dimension_numbers<[1], [0], [0], [1], [0, 0, 1, 1], [], []>} : vector<8x32xf32>, vector<32x32xf32>, vector<8x32xf32> -> vector<8x32xf32>
    %c0_41 = arith.constant 0 : index
    %c0_42 = arith.constant 0 : index
    %92 = vector.load %arg7[%c0_41, %c0_42] : memref<32x32xf32, #tpu.memory_space<vmem>>, vector<32x32xf32>
    %cst_43 = arith.constant dense<0.000000e+00> : vector<8x32xf32>
    %93 = tpu.matmul %91, %92, %cst_43 {dimension_numbers = #tpu.dot_dimension_numbers<[1], [0], [0], [1], [0, 0, 1, 1], [], []>} : vector<8x32xf32>, vector<32x32xf32>, vector<8x32xf32> -> vector<8x32xf32>
    %94 = arith.addf %93, %89 : vector<8x32xf32>
    %95 = vector.shape_cast %94 : vector<8x32xf32> to vector<1x8x32xf32>
    %c0_44 = arith.constant 0 : index
    %c0_45 = arith.constant 0 : index
    %c0_46 = arith.constant 0 : index
    %96 = vector.load %arg8[%c0_44, %c0_45, %c0_46] : memref<1x8x32xf32, #tpu.memory_space<vmem>>, vector<1x8x32xf32>
    tpu.vector_store %arg8[%c0_44, %c0_45, %c0_46], %95 {strides = array<i32>} : memref<1x8x32xf32, #tpu.memory_space<vmem>>, vector<1x8x32xf32>,
    return
  }
  func.func @transform_0(%arg0: i32) -> (i32, i32, i32) {
    %c0_i32 = arith.constant 0 : i32
    %c0_i32_0 = arith.constant 0 : i32
    %c0_i32_1 = arith.constant 0 : i32
    return %arg0, %c0_i32, %c0_i32_0 : i32, i32, i32
  }
  func.func @transform_1(%arg0: i32) -> (i32, i32) {
    %c0_i32 = arith.constant 0 : i32
    %c0_i32_0 = arith.constant 0 : i32
    %c0_i32_1 = arith.constant 0 : i32
    return %c0_i32, %c0_i32_0 : i32, i32
  }
  func.func @transform_2(%arg0: i32) -> (i32, i32) {
    %c0_i32 = arith.constant 0 : i32
    %c0_i32_0 = arith.constant 0 : i32
    %c0_i32_1 = arith.constant 0 : i32
    return %c0_i32, %c0_i32_0 : i32, i32
  }
  func.func @transform_3(%arg0: i32) -> (i32, i32) {
    %c0_i32 = arith.constant 0 : i32
    %c0_i32_0 = arith.constant 0 : i32
    %c0_i32_1 = arith.constant 0 : i32
    return %c0_i32, %c0_i32_0 : i32, i32
  }
  func.func @transform_4(%arg0: i32) -> (i32, i32) {
    %c0_i32 = arith.constant 0 : i32
    %c0_i32_0 = arith.constant 0 : i32
    %c0_i32_1 = arith.constant 0 : i32
    return %c0_i32, %c0_i32_0 : i32, i32
  }
  func.func @transform_5(%arg0: i32) -> (i32, i32) {
    %c0_i32 = arith.constant 0 : i32
    %c0_i32_0 = arith.constant 0 : i32
    %c0_i32_1 = arith.constant 0 : i32
    return %c0_i32, %c0_i32_0 : i32, i32
  }
  func.func @transform_6(%arg0: i32) -> (i32, i32) {
    %c0_i32 = arith.constant 0 : i32
    %c0_i32_0 = arith.constant 0 : i32
    %c0_i32_1 = arith.constant 0 : i32
    return %c0_i32, %c0_i32_0 : i32, i32
  }
  func.func @transform_7(%arg0: i32) -> (i32, i32, i32) {
    %c0_i32 = arith.constant 0 : i32
    %c0_i32_0 = arith.constant 0 : i32
    %c0_i32_1 = arith.constant 0 : i32
    return %arg0, %c0_i32, %c0_i32_0 : i32, i32, i32
  }
}

module attributes {stable_mosaic.version = 11 : i64} {
  func.func @_transformer_layer_kernel(%arg0: i32, %arg1: memref<1x8x32xf32, #tpu.memory_space<vmem>>, %arg2: memref<32x96xf32, #tpu.memory_space<vmem>>, %arg3: memref<1x96xf32, #tpu.memory_space<vmem>>, %arg4: memref<32x32xf32, #tpu.memory_space<vmem>>, %arg5: memref<1x32xf32, #tpu.memory_space<vmem>>, %arg6: memref<32x32xf32, #tpu.memory_space<vmem>>, %arg7: memref<32x32xf32, #tpu.memory_space<vmem>>, %arg8: memref<1x8x32xf32, #tpu.memory_space<vmem>>, %arg9: memref<8x96xf32, #tpu.memory_space<vmem>>, %arg10: memref<8x32xf32, #tpu.memory_space<vmem>>) attributes {dimension_semantics = [#tpu.dimension_semantics<parallel>], iteration_bounds = array<i64: 2>, scalar_prefetch = 0 : i64, scratch_operands = 2 : i64, tpu.core_type = #tpu.core_type<tc>, window_params = [{transform_indices = @transform_0, window_bounds = array<i64: 1, 8, 32>}, {pipeline_mode = #tpu.pipeline_mode<synchronous>, transform_indices = @transform_1, window_bounds = array<i64: 32, 96>}, {pipeline_mode = #tpu.pipeline_mode<synchronous>, transform_indices = @transform_2, window_bounds = array<i64: 1, 96>}, {pipeline_mode = #tpu.pipeline_mode<synchronous>, transform_indices = @transform_3, window_bounds = array<i64: 32, 32>}, {pipeline_mode = #tpu.pipeline_mode<synchronous>, transform_indices = @transform_4, window_bounds = array<i64: 1, 32>}, {pipeline_mode = #tpu.pipeline_mode<synchronous>, transform_indices = @transform_5, window_bounds = array<i64: 32, 32>}, {pipeline_mode = #tpu.pipeline_mode<synchronous>, transform_indices = @transform_6, window_bounds = array<i64: 32, 32>}, {transform_indices = @transform_7, window_bounds = array<i64: 1, 8, 32>}]} {
    %c0 = arith.constant 0 : index
    %c0_0 = arith.constant 0 : index
    %c0_1 = arith.constant 0 : index
    %0 = vector.load %arg1[%c0, %c0_0, %c0_1] : memref<1x8x32xf32, #tpu.memory_space<vmem>>, vector<1x8x32xf32>
    %1 = vector.shape_cast %0 : vector<1x8x32xf32> to vector<8x32xf32>
    %c0_2 = arith.constant 0 : index
    %c0_3 = arith.constant 0 : index
    %2 = vector.load %arg2[%c0_2, %c0_3] : memref<32x96xf32, #tpu.memory_space<vmem>>, vector<32x96xf32>
    %cst = arith.constant dense<0.000000e+00> : vector<8x96xf32>
    %3 = tpu.matmul %1, %2, %cst {dimension_numbers = #tpu.dot_dimension_numbers<[1], [0], [0], [1], [0, 0, 1, 1], [], []>} : vector<8x32xf32>, vector<32x96xf32>, vector<8x96xf32> -> vector<8x96xf32>
    %c0_4 = arith.constant 0 : index
    %c0_5 = arith.constant 0 : index
    %4 = vector.load %arg3[%c0_4, %c0_5] : memref<1x96xf32, #tpu.memory_space<vmem>>, vector<1x96xf32>
    %5 = vector.broadcast %4 : vector<1x96xf32> to vector<8x96xf32>
    %6 = arith.addf %3, %5 : vector<8x96xf32>
    %c0_6 = arith.constant 0 : index
    %c0_7 = arith.constant 0 : index
    %7 = vector.load %arg9[%c0_6, %c0_7] : memref<8x96xf32, #tpu.memory_space<vmem>>, vector<8x96xf32>
    tpu.vector_store %arg9[%c0_6, %c0_7], %6 {strides = array<i32>} : memref<8x96xf32, #tpu.memory_space<vmem>>, vector<8x96xf32>,
    %c0_i32 = arith.constant 0 : i32
    %c1_i32 = arith.constant 1 : i32
    %8 = arith.muli %c0_i32, %c1_i32 : i32
    %c0_i32_8 = arith.constant 0 : i32
    %9 = arith.addi %c0_i32_8, %8 : i32
    %c8_i32 = arith.constant 8 : i32
    %10 = arith.muli %9, %c8_i32 : i32
    %11 = tpu.assume_multiple %10, 8 : i32
    %12 = arith.index_cast %11 : i32 to index
    %c0_9 = arith.constant 0 : index
    %13 = vector.load %arg9[%12, %c0_9] : memref<8x96xf32, #tpu.memory_space<vmem>>, vector<8x32xf32>
    %14 = arith.index_cast %11 : i32 to index
    %c32 = arith.constant 32 : index
    %15 = vector.load %arg9[%14, %c32] : memref<8x96xf32, #tpu.memory_space<vmem>>, vector<8x32xf32>
    %16 = arith.index_cast %11 : i32 to index
    %c64 = arith.constant 64 : index
    %17 = vector.load %arg9[%16, %c64] : memref<8x96xf32, #tpu.memory_space<vmem>>, vector<8x32xf32>
    %18 = vector.extract_strided_slice %13 {offsets = [0, 0], sizes = [8, 8], strides = [1, 1]} : vector<8x32xf32> to vector<8x8xf32>
    %19 = vector.extract_strided_slice %15 {offsets = [0, 0], sizes = [8, 8], strides = [1, 1]} : vector<8x32xf32> to vector<8x8xf32>
    %20 = vector.extract_strided_slice %17 {offsets = [0, 0], sizes = [8, 8], strides = [1, 1]} : vector<8x32xf32> to vector<8x8xf32>
    %cst_10 = arith.constant dense<0.000000e+00> : vector<8x8xf32>
    %21 = tpu.matmul %18, %19, %cst_10 {dimension_numbers = #tpu.dot_dimension_numbers<[1], [1], [0], [0], [0, 0, 1, 0], [], []>} : vector<8x8xf32>, vector<8x8xf32>, vector<8x8xf32> -> vector<8x8xf32>
    %cst_11 = arith.constant dense<0xFF800000> : vector<8xf32>
    %22 = vector.multi_reduction <maximumf>, %21, %cst_11 [1] : vector<8x8xf32> to vector<8xf32>
    %23 = vector.shape_cast %22 : vector<8xf32> to vector<8x1xf32>
    %24 = vector.broadcast %23 : vector<8x1xf32> to vector<8x8xf32>
    %25 = arith.subf %21, %24 : vector<8x8xf32>
    %26 = math.exp %25 : vector<8x8xf32>
    %cst_12 = arith.constant dense<0.000000e+00> : vector<8xf32>
    %27 = vector.multi_reduction <add>, %26, %cst_12 [1] : vector<8x8xf32> to vector<8xf32>
    %28 = vector.shape_cast %27 : vector<8xf32> to vector<8x1xf32>
    %29 = tpu.reciprocal %28 {approx = true} : vector<8x1xf32> -> vector<8x1xf32>
    %30 = vector.broadcast %29 : vector<8x1xf32> to vector<8x8xf32>
    %31 = arith.mulf %26, %30 : vector<8x8xf32>
    %cst_13 = arith.constant dense<0.000000e+00> : vector<8x8xf32>
    %32 = tpu.matmul %31, %20, %cst_13 {dimension_numbers = #tpu.dot_dimension_numbers<[1], [0], [0], [1], [0, 0, 1, 1], [], []>} : vector<8x8xf32>, vector<8x8xf32>, vector<8x8xf32> -> vector<8x8xf32>
    %33 = vector.extract_strided_slice %13 {offsets = [0, 8], sizes = [8, 8], strides = [1, 1]} : vector<8x32xf32> to vector<8x8xf32>
    %34 = vector.extract_strided_slice %15 {offsets = [0, 8], sizes = [8, 8], strides = [1, 1]} : vector<8x32xf32> to vector<8x8xf32>
    %35 = vector.extract_strided_slice %17 {offsets = [0, 8], sizes = [8, 8], strides = [1, 1]} : vector<8x32xf32> to vector<8x8xf32>
    %cst_14 = arith.constant dense<0.000000e+00> : vector<8x8xf32>
    %36 = tpu.matmul %33, %34, %cst_14 {dimension_numbers = #tpu.dot_dimension_numbers<[1], [1], [0], [0], [0, 0, 1, 0], [], []>} : vector<8x8xf32>, vector<8x8xf32>, vector<8x8xf32> -> vector<8x8xf32>
    %cst_15 = arith.constant dense<0xFF800000> : vector<8xf32>
    %37 = vector.multi_reduction <maximumf>, %36, %cst_15 [1] : vector<8x8xf32> to vector<8xf32>
    %38 = vector.shape_cast %37 : vector<8xf32> to vector<8x1xf32>
    %39 = vector.broadcast %38 : vector<8x1xf32> to vector<8x8xf32>
    %40 = arith.subf %36, %39 : vector<8x8xf32>
    %41 = math.exp %40 : vector<8x8xf32>
    %cst_16 = arith.constant dense<0.000000e+00> : vector<8xf32>
    %42 = vector.multi_reduction <add>, %41, %cst_16 [1] : vector<8x8xf32> to vector<8xf32>
    %43 = vector.shape_cast %42 : vector<8xf32> to vector<8x1xf32>
    %44 = tpu.reciprocal %43 {approx = true} : vector<8x1xf32> -> vector<8x1xf32>
    %45 = vector.broadcast %44 : vector<8x1xf32> to vector<8x8xf32>
    %46 = arith.mulf %41, %45 : vector<8x8xf32>
    %cst_17 = arith.constant dense<0.000000e+00> : vector<8x8xf32>
    %47 = tpu.matmul %46, %35, %cst_17 {dimension_numbers = #tpu.dot_dimension_numbers<[1], [0], [0], [1], [0, 0, 1, 1], [], []>} : vector<8x8xf32>, vector<8x8xf32>, vector<8x8xf32> -> vector<8x8xf32>
    %48 = vector.extract_strided_slice %13 {offsets = [0, 16], sizes = [8, 8], strides = [1, 1]} : vector<8x32xf32> to vector<8x8xf32>
    %49 = vector.extract_strided_slice %15 {offsets = [0, 16], sizes = [8, 8], strides = [1, 1]} : vector<8x32xf32> to vector<8x8xf32>
    %50 = vector.extract_strided_slice %17 {offsets = [0, 16], sizes = [8, 8], strides = [1, 1]} : vector<8x32xf32> to vector<8x8xf32>
    %cst_18 = arith.constant dense<0.000000e+00> : vector<8x8xf32>
    %51 = tpu.matmul %48, %49, %cst_18 {dimension_numbers = #tpu.dot_dimension_numbers<[1], [1], [0], [0], [0, 0, 1, 0], [], []>} : vector<8x8xf32>, vector<8x8xf32>, vector<8x8xf32> -> vector<8x8xf32>
    %cst_19 = arith.constant dense<0xFF800000> : vector<8xf32>
    %52 = vector.multi_reduction <maximumf>, %51, %cst_19 [1] : vector<8x8xf32> to vector<8xf32>
    %53 = vector.shape_cast %52 : vector<8xf32> to vector<8x1xf32>
    %54 = vector.broadcast %53 : vector<8x1xf32> to vector<8x8xf32>
    %55 = arith.subf %51, %54 : vector<8x8xf32>
    %56 = math.exp %55 : vector<8x8xf32>
    %cst_20 = arith.constant dense<0.000000e+00> : vector<8xf32>
    %57 = vector.multi_reduction <add>, %56, %cst_20 [1] : vector<8x8xf32> to vector<8xf32>
    %58 = vector.shape_cast %57 : vector<8xf32> to vector<8x1xf32>
    %59 = tpu.reciprocal %58 {approx = true} : vector<8x1xf32> -> vector<8x1xf32>
    %60 = vector.broadcast %59 : vector<8x1xf32> to vector<8x8xf32>
    %61 = arith.mulf %56, %60 : vector<8x8xf32>
    %cst_21 = arith.constant dense<0.000000e+00> : vector<8x8xf32>
    %62 = tpu.matmul %61, %50, %cst_21 {dimension_numbers = #tpu.dot_dimension_numbers<[1], [0], [0], [1], [0, 0, 1, 1], [], []>} : vector<8x8xf32>, vector<8x8xf32>, vector<8x8xf32> -> vector<8x8xf32>
    %63 = vector.extract_strided_slice %13 {offsets = [0, 24], sizes = [8, 8], strides = [1, 1]} : vector<8x32xf32> to vector<8x8xf32>
    %64 = vector.extract_strided_slice %15 {offsets = [0, 24], sizes = [8, 8], strides = [1, 1]} : vector<8x32xf32> to vector<8x8xf32>
    %65 = vector.extract_strided_slice %17 {offsets = [0, 24], sizes = [8, 8], strides = [1, 1]} : vector<8x32xf32> to vector<8x8xf32>
    %cst_22 = arith.constant dense<0.000000e+00> : vector<8x8xf32>
    %66 = tpu.matmul %63, %64, %cst_22 {dimension_numbers = #tpu.dot_dimension_numbers<[1], [1], [0], [0], [0, 0, 1, 0], [], []>} : vector<8x8xf32>, vector<8x8xf32>, vector<8x8xf32> -> vector<8x8xf32>
    %cst_23 = arith.constant dense<0xFF800000> : vector<8xf32>
    %67 = vector.multi_reduction <maximumf>, %66, %cst_23 [1] : vector<8x8xf32> to vector<8xf32>
    %68 = vector.shape_cast %67 : vector<8xf32> to vector<8x1xf32>
    %69 = vector.broadcast %68 : vector<8x1xf32> to vector<8x8xf32>
    %70 = arith.subf %66, %69 : vector<8x8xf32>
    %71 = math.exp %70 : vector<8x8xf32>
    %cst_24 = arith.constant dense<0.000000e+00> : vector<8xf32>
    %72 = vector.multi_reduction <add>, %71, %cst_24 [1] : vector<8x8xf32> to vector<8xf32>
    %73 = vector.shape_cast %72 : vector<8xf32> to vector<8x1xf32>
    %74 = tpu.reciprocal %73 {approx = true} : vector<8x1xf32> -> vector<8x1xf32>
    %75 = vector.broadcast %74 : vector<8x1xf32> to vector<8x8xf32>
    %76 = arith.mulf %71, %75 : vector<8x8xf32>
    %cst_25 = arith.constant dense<0.000000e+00> : vector<8x8xf32>
    %77 = tpu.matmul %76, %65, %cst_25 {dimension_numbers = #tpu.dot_dimension_numbers<[1], [0], [0], [1], [0, 0, 1, 1], [], []>} : vector<8x8xf32>, vector<8x8xf32>, vector<8x8xf32> -> vector<8x8xf32>
    %78 = tpu.concatenate %32, %47, %62, %77 in 1 : vector<8x8xf32>, vector<8x8xf32>, vector<8x8xf32>, vector<8x8xf32> -> vector<8x32xf32>
    %79 = arith.index_cast %11 : i32 to index
    %c0_26 = arith.constant 0 : index
    %80 = vector.load %arg10[%79, %c0_26] : memref<8x32xf32, #tpu.memory_space<vmem>>, vector<8x32xf32>
    tpu.vector_store %arg10[%79, %c0_26], %78 {strides = array<i32>} : memref<8x32xf32, #tpu.memory_space<vmem>>, vector<8x32xf32>,
    %c1_i32_27 = arith.constant 1 : i32
    %c0_28 = arith.constant 0 : index
    %c0_29 = arith.constant 0 : index
    %81 = vector.load %arg10[%c0_28, %c0_29] : memref<8x32xf32, #tpu.memory_space<vmem>>, vector<8x32xf32>
    %c0_30 = arith.constant 0 : index
    %c0_31 = arith.constant 0 : index
    %82 = vector.load %arg4[%c0_30, %c0_31] : memref<32x32xf32, #tpu.memory_space<vmem>>, vector<32x32xf32>
    %cst_32 = arith.constant dense<0.000000e+00> : vector<8x32xf32>
    %83 = tpu.matmul %81, %82, %cst_32 {dimension_numbers = #tpu.dot_dimension_numbers<[1], [0], [0], [1], [0, 0, 1, 1], [], []>} : vector<8x32xf32>, vector<32x32xf32>, vector<8x32xf32> -> vector<8x32xf32>
    %c0_33 = arith.constant 0 : index
    %c0_34 = arith.constant 0 : index
    %84 = vector.load %arg5[%c0_33, %c0_34] : memref<1x32xf32, #tpu.memory_space<vmem>>, vector<1x32xf32>
    %85 = vector.broadcast %84 : vector<1x32xf32> to vector<8x32xf32>
    %86 = arith.addf %83, %85 : vector<8x32xf32>
    %c0_35 = arith.constant 0 : index
    %c0_36 = arith.constant 0 : index
    %c0_37 = arith.constant 0 : index
    %87 = vector.load %arg1[%c0_35, %c0_36, %c0_37] : memref<1x8x32xf32, #tpu.memory_space<vmem>>, vector<1x8x32xf32>
    %88 = vector.shape_cast %87 : vector<1x8x32xf32> to vector<8x32xf32>
    %89 = arith.addf %86, %88 : vector<8x32xf32>
    %c0_38 = arith.constant 0 : index
    %c0_39 = arith.constant 0 : index
    %90 = vector.load %arg6[%c0_38, %c0_39] : memref<32x32xf32, #tpu.memory_space<vmem>>, vector<32x32xf32>
    %cst_40 = arith.constant dense<0.000000e+00> : vector<8x32xf32>
    %91 = tpu.matmul %89, %90, %cst_40 {dimension_numbers = #tpu.dot_dimension_numbers<[1], [0], [0], [1], [0, 0, 1, 1], [], []>} : vector<8x32xf32>, vector<32x32xf32>, vector<8x32xf32> -> vector<8x32xf32>
    %c0_41 = arith.constant 0 : index
    %c0_42 = arith.constant 0 : index
    %92 = vector.load %arg7[%c0_41, %c0_42] : memref<32x32xf32, #tpu.memory_space<vmem>>, vector<32x32xf32>
    %cst_43 = arith.constant dense<0.000000e+00> : vector<8x32xf32>
    %93 = tpu.matmul %91, %92, %cst_43 {dimension_numbers = #tpu.dot_dimension_numbers<[1], [0], [0], [1], [0, 0, 1, 1], [], []>} : vector<8x32xf32>, vector<32x32xf32>, vector<8x32xf32> -> vector<8x32xf32>
    %94 = arith.addf %93, %89 : vector<8x32xf32>
    %95 = vector.shape_cast %94 : vector<8x32xf32> to vector<1x8x32xf32>
    %c0_44 = arith.constant 0 : index
    %c0_45 = arith.constant 0 : index
    %c0_46 = arith.constant 0 : index
    %96 = vector.load %arg8[%c0_44, %c0_45, %c0_46] : memref<1x8x32xf32, #tpu.memory_space<vmem>>, vector<1x8x32xf32>
    tpu.vector_store %arg8[%c0_44, %c0_45, %c0_46], %95 {strides = array<i32>} : memref<1x8x32xf32, #tpu.memory_space<vmem>>, vector<1x8x32xf32>,
    return
  }
  func.func @transform_0(%arg0: i32) -> (i32, i32, i32) {
    %c0_i32 = arith.constant 0 : i32
    %c0_i32_0 = arith.constant 0 : i32
    %c0_i32_1 = arith.constant 0 : i32
    return %arg0, %c0_i32, %c0_i32_0 : i32, i32, i32
  }
  func.func @transform_1(%arg0: i32) -> (i32, i32) {
    %c0_i32 = arith.constant 0 : i32
    %c0_i32_0 = arith.constant 0 : i32
    %c0_i32_1 = arith.constant 0 : i32
    return %c0_i32, %c0_i32_0 : i32, i32
  }
  func.func @transform_2(%arg0: i32) -> (i32, i32) {
    %c0_i32 = arith.constant 0 : i32
    %c0_i32_0 = arith.constant 0 : i32
    %c0_i32_1 = arith.constant 0 : i32
    return %c0_i32, %c0_i32_0 : i32, i32
  }
  func.func @transform_3(%arg0: i32) -> (i32, i32) {
    %c0_i32 = arith.constant 0 : i32
    %c0_i32_0 = arith.constant 0 : i32
    %c0_i32_1 = arith.constant 0 : i32
    return %c0_i32, %c0_i32_0 : i32, i32
  }
  func.func @transform_4(%arg0: i32) -> (i32, i32) {
    %c0_i32 = arith.constant 0 : i32
    %c0_i32_0 = arith.constant 0 : i32
    %c0_i32_1 = arith.constant 0 : i32
    return %c0_i32, %c0_i32_0 : i32, i32
  }
  func.func @transform_5(%arg0: i32) -> (i32, i32) {
    %c0_i32 = arith.constant 0 : i32
    %c0_i32_0 = arith.constant 0 : i32
    %c0_i32_1 = arith.constant 0 : i32
    return %c0_i32, %c0_i32_0 : i32, i32
  }
  func.func @transform_6(%arg0: i32) -> (i32, i32) {
    %c0_i32 = arith.constant 0 : i32
    %c0_i32_0 = arith.constant 0 : i32
    %c0_i32_1 = arith.constant 0 : i32
    return %c0_i32, %c0_i32_0 : i32, i32
  }
  func.func @transform_7(%arg0: i32) -> (i32, i32, i32) {
    %c0_i32 = arith.constant 0 : i32
    %c0_i32_0 = arith.constant 0 : i32
    %c0_i32_1 = arith.constant 0 : i32
    return %arg0, %c0_i32, %c0_i32_0 : i32, i32, i32
  }
}

</mosaic_0001>

<llo_original>
// kernel: tpu_custom_call.1
$region0: #{tpu_custom_call.1}
  #allocation0 [shape = 'u32[]', space=smem, size = 0x4, offset = 0x4, fixed_abs, tag = 'smem constant byte address 0x4 - core index']
  #allocation1 [shape = 'u32[144,128]{1,0:T(1,128)}', space=vmem, size = 0x12000, scoped, tag = 'internal scratch']
  #allocation2 [shape = 'f32[8,96]{1,0:T(8,128)}', space=vmem, size = 0x1000, scoped, tag = 'scratch operand']
  #allocation3 [shape = 'f32[8,32]{1,0:T(8,128)}', space=vmem, size = 0x1000, scoped, tag = 'scratch operand']
  %s0 = inlined_call_operand.hbm [shape: f32[2,8,32], index: 0, kind: input, shape index: {}]
  %s1 = inlined_call_operand.hbm [shape: f32[32,96], index: 1, kind: input, shape index: {}]
  %s2 = inlined_call_operand.vmem [shape: f32[1,96], index: 2, kind: input, shape index: {}]
  %s3 = inlined_call_operand.hbm [shape: f32[32,32], index: 3, kind: input, shape index: {}]
  %s4 = inlined_call_operand.vmem [shape: f32[1,32], index: 4, kind: input, shape index: {}]
  %s5 = inlined_call_operand.hbm [shape: f32[32,32], index: 5, kind: input, shape index: {}]
  %s6 = inlined_call_operand.hbm [shape: f32[32,32], index: 6, kind: input, shape index: {}]
  %s7 = inlined_call_operand.hbm [shape: f32[2,8,32], index: 7, kind: output, shape index: {}]
  %s8 = sld [smem:[#allocation0]]
  $region81: #{tpu_custom_call.1} parent=0
    _
  %s10 = ssub.s32 1, %s8
  %s11 = scalar_select 0, %s10, %s8
  $region1: #{tpu_custom_call.1} parent=0
    #allocation4 [shape = 'u8[8192]{0}', space=vmem, size = 0x2000, scoped, tag = 'input window, operand 0']
    #allocation5 [shape = 's32[2]{0}', space=sflag, size = 0x8, scoped, tag = 'scoped memory for tpu_custom_call.1']
    #allocation6 [shape = 's32[2]{0}', space=sflag, size = 0x8, scoped, tag = 'scoped memory for tpu_custom_call.1']
    #allocation7 [shape = 'u8[16384]{0}', space=vmem, size = 0x4000, scoped, tag = 'input window, operand 1, single buffered']
    #allocation8 [shape = 's32[1]{0}', space=sflag, size = 0x4, scoped, tag = 'scoped memory for tpu_custom_call.1']
    #allocation9 [shape = 'u8[16384]{0}', space=vmem, size = 0x4000, scoped, tag = 'input window, operand 3, single buffered']
    #allocation10 [shape = 'u8[16384]{0}', space=vmem, size = 0x4000, scoped, tag = 'input window, operand 5, single buffered']
    #allocation11 [shape = 's32[1]{0}', space=sflag, size = 0x4, scoped, tag = 'scoped memory for tpu_custom_call.1']
    #allocation12 [shape = 'u8[16384]{0}', space=vmem, size = 0x4000, scoped, tag = 'input window, operand 6, single buffered']
    #allocation13 [shape = 'u8[8192]{0}', space=vmem, size = 0x2000, scoped, tag = 'output window, operand 0']
    %12 = vsyncpa [#allocation5], 0
    %s13 = scalar_lea.sflag [#allocation5], 1
    %14 = vsyncpa %s13, 0
    %15 = vsyncpa [#allocation8], 0
    %16 = vsyncpa [#allocation11], 0
    %17 = vsyncpa [#allocation6], 0
    %s18 = scalar_lea.sflag [#allocation6], 1
    %19 = vsyncpa %s18, 0
    loop: start=0, step=1, limit=4
    $region2: #{tpu_custom_call.1} parent=1 // loop_pre_header
      _
    $region3: #{tpu_custom_call.1} parent=1 // loop_header
      %s21 = sphi 0, %s25
      %p22 = scmp.ge.s32.totalorder %s21, 4
      %s31 = sphi 0, %s33
      %s34 = sphi 0, %s31
      %s35 = sphi 0, %s34
      %s51 = sphi 0, %s35
      %s55 = sphi 0, %s55
      %s57 = sphi 0, %s55
      %s58 = sphi 0, %s57
      %s72 = sphi 0, %s58
      %s76 = sphi 0, %s76
      %s78 = sphi 0, %s76
      %s79 = sphi 0, %s78
      %s93 = sphi 0, %s79
      %s97 = sphi 0, %s97
      %s99 = sphi 0, %s97
      %s100 = sphi 0, %s99
      %s114 = sphi 0, %s100
      %s118 = sphi 0, %s118
      %s120 = sphi 0, %s118
      %s121 = sphi 0, %s120
      %s135 = sphi 0, %s121
      %s139 = sphi 0, %s139
      %s141 = sphi 0, %s139
      %s142 = sphi 0, %s141
      %s156 = sphi 0, %s142
      %s160 = sphi 0, %s160
      %s162 = sphi 0, %s160
      %s163 = sphi 0, %s162
      %s177 = sphi 0, %s163
      %s183 = sphi 0, %s185
      %s186 = sphi 0, %s183
      %s187 = sphi 0, %s186
      %s203 = sphi 0, %s187
    $region4: #{tpu_custom_call.1} parent=1 // loop_header_branch
      %24 = sbr.rel (%p22) target = $region8
    $region5: #{tpu_custom_call.1} parent=1 // loop_body
      %s26 = ssub.s32 %s21, 1
      %s27 = ssub.s32 %s21, 2
      %s28 = sadd.s32 %s21, 1
      %s29 = ssub.s32 %s21, %s28
      %p30 = scmp.eq.s32.totalorder %s29, 0
      %s32 = sadd.s32 %s31, 1
      %s33 = scalar_select %p30, %s31, %s32
      %p36 = pneg %p30
      %p37 = scmp.eq.s32.totalorder %s21, 1
      %p38 = por %p36, %p37
      %p39 = scmp.ne.s32.totalorder %s31, %s34
      %p40 = scmp.eq.s32.totalorder %s21, 0
      %p41 = por %p39, %p40
      %p42 = scmp.ne.s32.totalorder %s31, %s34
      %p43 = scmp.eq.s32.totalorder %s26, 1
      %p44 = por %p42, %p43
      %p45 = scmp.ne.s32.totalorder %s34, %s35
      %p46 = scmp.eq.s32.totalorder %s26, 0
      %p47 = por %p45, %p46
      %p48 = scmp.ne.s32.totalorder %s34, %s35
      %p49 = scmp.eq.s32.totalorder %s27, 1
      %p50 = por %p48, %p49
      %p52 = scmp.ne.s32.totalorder %s35, %s51
      %p53 = scmp.eq.s32.totalorder %s27, 0
      %p54 = por %p52, %p53
      %s56 = sadd.s32 %s55, 1
      %p59 = scmp.eq.s32.totalorder %s21, 1
      %p60 = scmp.ne.s32.totalorder %s55, %s57
      %p61 = scmp.eq.s32.totalorder %s21, 0
      %p62 = por %p60, %p61
      %p63 = scmp.ne.s32.totalorder %s55, %s57
      %p64 = scmp.eq.s32.totalorder %s26, 1
      %p65 = por %p63, %p64
      %p66 = scmp.ne.s32.totalorder %s57, %s58
      %p67 = scmp.eq.s32.totalorder %s26, 0
      %p68 = por %p66, %p67
      %p69 = scmp.ne.s32.totalorder %s57, %s58
      %p70 = scmp.eq.s32.totalorder %s27, 1
      %p71 = por %p69, %p70
      %p73 = scmp.ne.s32.totalorder %s58, %s72
      %p74 = scmp.eq.s32.totalorder %s27, 0
      %p75 = por %p73, %p74
      %s77 = sadd.s32 %s76, 1
      %p80 = scmp.eq.s32.totalorder %s21, 1
      %p81 = scmp.ne.s32.totalorder %s76, %s78
      %p82 = scmp.eq.s32.totalorder %s21, 0
      %p83 = por %p81, %p82
      %p84 = scmp.ne.s32.totalorder %s76, %s78
      %p85 = scmp.eq.s32.totalorder %s26, 1
      %p86 = por %p84, %p85
      %p87 = scmp.ne.s32.totalorder %s78, %s79
      %p88 = scmp.eq.s32.totalorder %s26, 0
      %p89 = por %p87, %p88
      %p90 = scmp.ne.s32.totalorder %s78, %s79
      %p91 = scmp.eq.s32.totalorder %s27, 1
      %p92 = por %p90, %p91
      %p94 = scmp.ne.s32.totalorder %s79, %s93
      %p95 = scmp.eq.s32.totalorder %s27, 0
      %p96 = por %p94, %p95
      %s98 = sadd.s32 %s97, 1
      %p101 = scmp.eq.s32.totalorder %s21, 1
      %p102 = scmp.ne.s32.totalorder %s97, %s99
      %p103 = scmp.eq.s32.totalorder %s21, 0
      %p104 = por %p102, %p103
      %p105 = scmp.ne.s32.totalorder %s97, %s99
      %p106 = scmp.eq.s32.totalorder %s26, 1
      %p107 = por %p105, %p106
      %p108 = scmp.ne.s32.totalorder %s99, %s100
      %p109 = scmp.eq.s32.totalorder %s26, 0
      %p110 = por %p108, %p109
      %p111 = scmp.ne.s32.totalorder %s99, %s100
      %p112 = scmp.eq.s32.totalorder %s27, 1
      %p113 = por %p111, %p112
      %p115 = scmp.ne.s32.totalorder %s100, %s114
      %p116 = scmp.eq.s32.totalorder %s27, 0
      %p117 = por %p115, %p116
      %s119 = sadd.s32 %s118, 1
      %p122 = scmp.eq.s32.totalorder %s21, 1
      %p123 = scmp.ne.s32.totalorder %s118, %s120
      %p124 = scmp.eq.s32.totalorder %s21, 0
      %p125 = por %p123, %p124
      %p126 = scmp.ne.s32.totalorder %s118, %s120
      %p127 = scmp.eq.s32.totalorder %s26, 1
      %p128 = por %p126, %p127
      %p129 = scmp.ne.s32.totalorder %s120, %s121
      %p130 = scmp.eq.s32.totalorder %s26, 0
      %p131 = por %p129, %p130
      %p132 = scmp.ne.s32.totalorder %s120, %s121
      %p133 = scmp.eq.s32.totalorder %s27, 1
      %p134 = por %p132, %p133
      %p136 = scmp.ne.s32.totalorder %s121, %s135
      %p137 = scmp.eq.s32.totalorder %s27, 0
      %p138 = por %p136, %p137
      %s140 = sadd.s32 %s139, 1
      %p143 = scmp.eq.s32.totalorder %s21, 1
      %p144 = scmp.ne.s32.totalorder %s139, %s141
      %p145 = scmp.eq.s32.totalorder %s21, 0
      %p146 = por %p144, %p145
      %p147 = scmp.ne.s32.totalorder %s139, %s141
      %p148 = scmp.eq.s32.totalorder %s26, 1
      %p149 = por %p147, %p148
      %p150 = scmp.ne.s32.totalorder %s141, %s142
      %p151 = scmp.eq.s32.totalorder %s26, 0
      %p152 = por %p150, %p151
      %p153 = scmp.ne.s32.totalorder %s141, %s142
      %p154 = scmp.eq.s32.totalorder %s27, 1
      %p155 = por %p153, %p154
      %p157 = scmp.ne.s32.totalorder %s142, %s156
      %p158 = scmp.eq.s32.totalorder %s27, 0
      %p159 = por %p157, %p158
      %s161 = sadd.s32 %s160, 1
      %p164 = scmp.eq.s32.totalorder %s21, 1
      %p165 = scmp.ne.s32.totalorder %s160, %s162
      %p166 = scmp.eq.s32.totalorder %s21, 0
      %p167 = por %p165, %p166
      %p168 = scmp.ne.s32.totalorder %s160, %s162
      %p169 = scmp.eq.s32.totalorder %s26, 1
      %p170 = por %p168, %p169
      %p171 = scmp.ne.s32.totalorder %s162, %s163
      %p172 = scmp.eq.s32.totalorder %s26, 0
      %p173 = por %p171, %p172
      %p174 = scmp.ne.s32.totalorder %s162, %s163
      %p175 = scmp.eq.s32.totalorder %s27, 1
      %p176 = por %p174, %p175
      %p178 = scmp.ne.s32.totalorder %s163, %s177
      %p179 = scmp.eq.s32.totalorder %s27, 0
      %p180 = por %p178, %p179
      %s181 = ssub.s32 %s21, %s28
      %p182 = scmp.eq.s32.totalorder %s181, 0
      %s184 = sadd.s32 %s183, 1
      %s185 = scalar_select %p182, %s183, %s184
      %p188 = pneg %p182
      %p189 = scmp.eq.s32.totalorder %s21, 1
      %p190 = por %p188, %p189
      %p191 = scmp.ne.s32.totalorder %s183, %s186
      %p192 = scmp.eq.s32.totalorder %s21, 0
      %p193 = por %p191, %p192
      %p194 = scmp.ne.s32.totalorder %s183, %s186
      %p195 = scmp.eq.s32.totalorder %s26, 1
      %p196 = por %p194, %p195
      %p197 = scmp.ne.s32.totalorder %s186, %s187
      %p198 = scmp.eq.s32.totalorder %s26, 0
      %p199 = por %p197, %p198
      %p200 = scmp.ne.s32.totalorder %s186, %s187
      %p201 = scmp.eq.s32.totalorder %s27, 1
      %p202 = por %p200, %p201
      %p204 = scmp.ne.s32.totalorder %s187, %s203
      %p205 = scmp.eq.s32.totalorder %s27, 0
      %p206 = por %p204, %p205
      %p207 = scmp.le.s32.totalorder 1, %s21
      %p208 = scmp.lt.s32.totalorder %s21, 3
      %p209 = pnand %p207, %p208
      %p210 = pneg %p209
      // Predicated region
      $region9: #{tpu_custom_call.1} parent=5 // pred_check
        _
      $region10: #{tpu_custom_call.1} parent=5 // pred_check_branch
        %212 = sbr.rel (%p209) target = $region12
      $region11: #{tpu_custom_call.1} parent=5 // pred_region
        %s213 = ssub.s32 %s21, 1
        // Predicated region
        $region13: #{tpu_custom_call.1} parent=11 // pred_check
          %p214 = pneg %p68
        $region14: #{tpu_custom_call.1} parent=11 // pred_check_branch
          %216 = sbr.rel (%p214) target = $region16
        $region15: #{tpu_custom_call.1} parent=11 // pred_region
          %s218 = ssub.s32 512, 512
          %219 = vsyncadd [#allocation8], %s218
          %s220 = sshll.u32 [#allocation7], 4
          %s221 = int_to_ptr.vmem [resolvable:$true] %s220
          %226 = dma.hbm_to_vmem [thread:$0]  %s1, 512, %s221, [#allocation8], 128, 128, 8
        $region16: #{tpu_custom_call.1} parent=11 // pred_fallthru
          _
        // Predicated region
        $region17: #{tpu_custom_call.1} parent=11 // pred_check
          %p227 = pneg %p89
        $region18: #{tpu_custom_call.1} parent=11 // pred_check_branch
          %229 = sbr.rel (%p227) target = $region20
        $region19: #{tpu_custom_call.1} parent=11 // pred_region
          _
        $region20: #{tpu_custom_call.1} parent=11 // pred_fallthru
          _
        // Predicated region
        $region21: #{tpu_custom_call.1} parent=11 // pred_check
          %p230 = pneg %p110
        $region22: #{tpu_custom_call.1} parent=11 // pred_check_branch
          %232 = sbr.rel (%p230) target = $region24
        $region23: #{tpu_custom_call.1} parent=11 // pred_region
          %s234 = ssub.s32 512, 512
          %235 = vsyncadd [#allocation8], %s234
          %s236 = sshll.u32 [#allocation9], 4
          %s237 = int_to_ptr.vmem [resolvable:$true] %s236
          %242 = dma.hbm_to_vmem [thread:$0]  %s3, 512, %s237, [#allocation8], 128, 128, 8
        $region24: #{tpu_custom_call.1} parent=11 // pred_fallthru
          _
        // Predicated region
        $region25: #{tpu_custom_call.1} parent=11 // pred_check
          %p243 = pneg %p131
        $region26: #{tpu_custom_call.1} parent=11 // pred_check_branch
          %245 = sbr.rel (%p243) target = $region28
        $region27: #{tpu_custom_call.1} parent=11 // pred_region
          _
        $region28: #{tpu_custom_call.1} parent=11 // pred_fallthru
          _
        // Predicated region
        $region29: #{tpu_custom_call.1} parent=11 // pred_check
          %p246 = pneg %p152
        $region30: #{tpu_custom_call.1} parent=11 // pred_check_branch
          %248 = sbr.rel (%p246) target = $region32
        $region31: #{tpu_custom_call.1} parent=11 // pred_region
          %s250 = ssub.s32 512, 512
          %251 = vsyncadd [#allocation11], %s250
          %s252 = sshll.u32 [#allocation10], 4
          %s253 = int_to_ptr.vmem [resolvable:$true] %s252
          %258 = dma.hbm_to_vmem [thread:$0]  %s5, 512, %s253, [#allocation11], 128, 128, 8
        $region32: #{tpu_custom_call.1} parent=11 // pred_fallthru
          _
        // Predicated region
        $region33: #{tpu_custom_call.1} parent=11 // pred_check
          %p259 = pneg %p173
        $region34: #{tpu_custom_call.1} parent=11 // pred_check_branch
          %261 = sbr.rel (%p259) target = $region36
        $region35: #{tpu_custom_call.1} parent=11 // pred_region
          %s263 = ssub.s32 512, 512
          %264 = vsyncadd [#allocation11], %s263
          %s265 = sshll.u32 [#allocation12], 4
          %s266 = int_to_ptr.vmem [resolvable:$true] %s265
          %271 = dma.hbm_to_vmem [thread:$0]  %s6, 512, %s266, [#allocation11], 128, 128, 8
        $region36: #{tpu_custom_call.1} parent=11 // pred_fallthru
          _
      $region12: #{tpu_custom_call.1} parent=5 // pred_fallthru
        _
      %p272 = scmp.lt.s32.totalorder %s21, 2
      // Predicated region
      $region37: #{tpu_custom_call.1} parent=5 // pred_check
        %p273 = pneg %p272
      $region38: #{tpu_custom_call.1} parent=5 // pred_check_branch
        %275 = sbr.rel (%p273) target = $region40
      $region39: #{tpu_custom_call.1} parent=5 // pred_region
        // Predicated region
        $region41: #{tpu_custom_call.1} parent=39 // pred_check
          %p276 = pneg %p41
        $region42: #{tpu_custom_call.1} parent=39 // pred_check_branch
          %278 = sbr.rel (%p276) target = $region44
        $region43: #{tpu_custom_call.1} parent=39 // pred_region
          %s279 = sand.u32 %s31, 1
          %s280 = scalar_lea.sflag [#allocation5], %s279
          %s281 = sand.u32 %s31, 1
          %s282 = smul.addr %s281, 8
          %s283 = scalar_lea.vmem [#allocation4], %s282
          %s285 = ssub.s32 128, 128
          %286 = vsyncadd %s280, %s285
          %s287 = smul.addr %s21, 128
          %s288 = scalar_lea.hbm %s0, %s287
          %s290 = sshll.u32 %s283, 4
          %s291 = int_to_ptr.vmem [resolvable:$true] %s290
          %293 = dma.hbm_to_vmem [thread:$0]  %s288, 128, %s291, %s280
        $region44: #{tpu_custom_call.1} parent=39 // pred_fallthru
          _
      $region40: #{tpu_custom_call.1} parent=5 // pred_fallthru
        _
      %p294 = scmp.le.s32.totalorder 1, %s21
      %p295 = scmp.lt.s32.totalorder %s21, 3
      %p296 = pnand %p294, %p295
      %p297 = pneg %p296
      // Predicated region
      $region45: #{tpu_custom_call.1} parent=5 // pred_check
        _
      $region46: #{tpu_custom_call.1} parent=5 // pred_check_branch
        %299 = sbr.rel (%p296) target = $region48
      $region47: #{tpu_custom_call.1} parent=5 // pred_region
        %s300 = ssub.s32 %s21, 1
        %s301 = sand.u32 %s34, 1
        %s302 = scalar_lea.sflag [#allocation5], %s301
        %s303 = sand.u32 %s34, 1
        %s304 = smul.addr %s303, 8
        %s305 = scalar_lea.vmem [#allocation4], %s304
        // Predicated region
        $region49: #{tpu_custom_call.1} parent=47 // pred_check
          %p306 = pneg %p47
        $region50: #{tpu_custom_call.1} parent=47 // pred_check_branch
          %308 = sbr.rel (%p306) target = $region52
        $region51: #{tpu_custom_call.1} parent=47 // pred_region
          %309 = dma.done %s302, 128
        $region52: #{tpu_custom_call.1} parent=47 // pred_fallthru
          _
        // Predicated region
        $region53: #{tpu_custom_call.1} parent=47 // pred_check
          %p310 = pneg %p68
        $region54: #{tpu_custom_call.1} parent=47 // pred_check_branch
          %312 = sbr.rel (%p310) target = $region56
        $region55: #{tpu_custom_call.1} parent=47 // pred_region
          %313 = dma.done [#allocation8], 512
        $region56: #{tpu_custom_call.1} parent=47 // pred_fallthru
          _
        // Predicated region
        $region57: #{tpu_custom_call.1} parent=47 // pred_check
          %p314 = pneg %p110
        $region58: #{tpu_custom_call.1} parent=47 // pred_check_branch
          %316 = sbr.rel (%p314) target = $region60
        $region59: #{tpu_custom_call.1} parent=47 // pred_region
          %317 = dma.done [#allocation8], 512
        $region60: #{tpu_custom_call.1} parent=47 // pred_fallthru
          _
        // Predicated region
        $region61: #{tpu_custom_call.1} parent=47 // pred_check
          %p318 = pneg %p152
        $region62: #{tpu_custom_call.1} parent=47 // pred_check_branch
          %320 = sbr.rel (%p318) target = $region64
        $region63: #{tpu_custom_call.1} parent=47 // pred_region
          %321 = dma.done [#allocation11], 512
        $region64: #{tpu_custom_call.1} parent=47 // pred_fallthru
          _
        // Predicated region
        $region65: #{tpu_custom_call.1} parent=47 // pred_check
          %p322 = pneg %p173
        $region66: #{tpu_custom_call.1} parent=47 // pred_check_branch
          %324 = sbr.rel (%p322) target = $region68
        $region67: #{tpu_custom_call.1} parent=47 // pred_region
          %325 = dma.done [#allocation11], 512
        $region68: #{tpu_custom_call.1} parent=47 // pred_fallthru
          _
        %s326 = sand.u32 %s34, 1
        %s327 = scalar_lea.sflag [#allocation5], %s326
        %s328 = sand.u32 %s34, 1
        %s329 = smul.addr %s328, 8
        %s330 = scalar_lea.vmem [#allocation4], %s329
        %p331 = pneg %p47
        %p332 = pneg %p44
        %p333 = pneg %p68
        %p334 = pneg %p65
        %p335 = pneg %p89
        %p336 = pneg %p86
        %p337 = pneg %p110
        %p338 = pneg %p107
        %p339 = pneg %p131
        %p340 = pneg %p128
        %p341 = pneg %p152
        %p342 = pneg %p149
        %p343 = pneg %p173
        %p344 = pneg %p170
        %p345 = pneg %p199
        %p346 = pneg %p196
        %s347 = sand.u32 %s186, 1
        %s348 = scalar_lea.sflag [#allocation6], %s347
        %s349 = sand.u32 %s186, 1
        %s350 = smul.addr %s349, 8
        %s351 = scalar_lea.vmem [#allocation13], %s350
        %v352 = vld [vmem:[%s305] sm:$0xff]
        %v353 = vld [vmem:[#allocation7] sm:$0xff]
        %v354 = vld [vmem:[#allocation7 + $0x8] sm:$0xff]
        %v355 = vld [vmem:[#allocation7 + $0x10] sm:$0xff]
        %v356 = vld [vmem:[#allocation7 + $0x18] sm:$0xff]
        %v357 = vld [vmem:[%s2] sm:$0x1]
        %v359 = vlaneseq
        %v360 = vshrl.u32 %v359, 7
        %v361 = vsub.s32 0, %v360
        %v362 = vrot.slane %v357, %v361
        %vm364 = vcmask 261120
        %v366 = vsel %vm364, %v352, 0
        %368 = vmatprep.subr.mxu0 0.0
        %369 = vmatpush1.msra.mxu0 0.0
        %370 = vmatprep.subr.mxu0 0.0
        %371 = vmatpush1.msra.mxu0 0.0
        %372 = vmatprep.subr.mxu0 0.0
        %373 = vmatpush1.msra.mxu0 0.0
        %374 = vmatprep.subr.mxu0 0.0
        %375 = vmatpush1.msra.mxu0 0.0
        %376 = vmatprep.subr.mxu0 0.0
        %377 = vmatpush1.msra.mxu0 0.0
        %378 = vmatprep.subr.mxu0 0.0
        %379 = vmatpush1.msra.mxu0 0.0
        %380 = vmatprep.subr.mxu0 0.0
        %381 = vmatpush1.msra.mxu0 0.0
        %382 = vmatprep.subr.mxu0 0.0
        %383 = vmatpush1.msra.mxu0 0.0
        %384 = vmatprep.subr.mxu0 0.0
        %385 = vmatpush1.msra.mxu0 0.0
        %386 = vmatprep.subr.mxu0 0.0
        %387 = vmatpush1.msra.mxu0 0.0
        %388 = vmatprep.subr.mxu0 0.0
        %389 = vmatpush1.msra.mxu0 0.0
        %390 = vmatprep.subr.mxu0 0.0
        %391 = vmatpush1.msra.mxu0 0.0
        %392 = vmatprep.subr.mxu0 0.0
        %393 = vmatpush1.msra.mxu0 %v356
        %394 = vmatprep.subr.mxu0 0.0
        %395 = vmatpush1.msra.mxu0 %v355
        %396 = vmatprep.subr.mxu0 0.0
        %397 = vmatpush1.msra.mxu0 %v354
        %398 = vmatprep.subr.mxu0 0.0
        %399 = vmatpush1.msra.mxu0 %v353
        %400 = vmatprep.subr.mxu0 0.0
        %401 = vmatpush2.msra.mxu0 0.0
        %402 = vmatprep.subr.mxu0 0.0
        %403 = vmatpush2.msra.mxu0 0.0
        %404 = vmatprep.subr.mxu0 0.0
        %405 = vmatpush2.msra.mxu0 0.0
        %406 = vmatprep.subr.mxu0 0.0
        %407 = vmatpush2.msra.mxu0 0.0
        %408 = vmatprep.subr.mxu0 0.0
        %409 = vmatpush2.msra.mxu0 0.0
        %410 = vmatprep.subr.mxu0 0.0
        %411 = vmatpush2.msra.mxu0 0.0
        %412 = vmatprep.subr.mxu0 0.0
        %413 = vmatpush2.msra.mxu0 0.0
        %414 = vmatprep.subr.mxu0 0.0
        %415 = vmatpush2.msra.mxu0 0.0
        %416 = vmatprep.subr.mxu0 0.0
        %417 = vmatpush2.msra.mxu0 0.0
        %418 = vmatprep.subr.mxu0 0.0
        %419 = vmatpush2.msra.mxu0 0.0
        %420 = vmatprep.subr.mxu0 0.0
        %421 = vmatpush2.msra.mxu0 0.0
        %422 = vmatprep.subr.mxu0 0.0
        %423 = vmatpush2.msra.mxu0 0.0
        %424 = vmatprep.subr.mxu0 0.0
        %425 = vmatpush2.msra.mxu0 0.0
        %426 = vmatprep.subr.mxu0 0.0
        %427 = vmatpush2.msra.mxu0 0.0
        %428 = vmatprep.subr.mxu0 0.0
        %429 = vmatpush2.msra.mxu0 0.0
        %430 = vmatprep.subr.mxu0 0.0
        %431 = vmatpush2.msra.mxu0 0.0
        %432 = vmatprep.mubr.f32.mxu0 0.0
        %433 = vmatmul.mubr.f32.gmra.mxu0 %v366
        %v434 = vpop.f32.mrf.mxu0
        %v435 = vadd.f32 %v362, %v434
        %v436 = vpop.f32.mrf.mxu0
        %437 = vdwg.mxu0
        %vm438 = vcmask 785408
        %439 = vst.msk [vmem:[#allocation2] sm:$0xff] %vm438, %v435
        %v440 = vld [vmem:[#allocation2] sm:$0xff]
        %442 = vrot.lane.b32.xlu0 %v440, 96
        %v443 = vpop.permute.xlu0 %442
        %vm444 = vcmask 64512
        %v445 = vsel %vm444, %v440, 0
        %v447 = vsel %vm444, %v443, 0
        %449 = vmatprep.subr.mxu0 0.0
        %450 = vmatpush1.xpose.msra.mxu0 0.0
        %451 = vmatprep.subr.mxu0 0.0
        %452 = vmatpush1.xpose.msra.mxu0 0.0
        %453 = vmatprep.subr.mxu0 0.0
        %454 = vmatpush1.xpose.msra.mxu0 0.0
        %455 = vmatprep.subr.mxu0 0.0
        %456 = vmatpush1.xpose.msra.mxu0 0.0
        %457 = vmatprep.subr.mxu0 0.0
        %458 = vmatpush1.xpose.msra.mxu0 0.0
        %459 = vmatprep.subr.mxu0 0.0
        %460 = vmatpush1.xpose.msra.mxu0 0.0
        %461 = vmatprep.subr.mxu0 0.0
        %462 = vmatpush1.xpose.msra.mxu0 0.0
        %463 = vmatprep.subr.mxu0 0.0
        %464 = vmatpush1.xpose.msra.mxu0 0.0
        %465 = vmatprep.subr.mxu0 0.0
        %466 = vmatpush1.xpose.msra.mxu0 0.0
        %467 = vmatprep.subr.mxu0 0.0
        %468 = vmatpush1.xpose.msra.mxu0 0.0
        %469 = vmatprep.subr.mxu0 0.0
        %470 = vmatpush1.xpose.msra.mxu0 0.0
        %471 = vmatprep.subr.mxu0 0.0
        %472 = vmatpush1.xpose.msra.mxu0 0.0
        %473 = vmatprep.subr.mxu0 0.0
        %474 = vmatpush1.xpose.msra.mxu0 0.0
        %475 = vmatprep.subr.mxu0 0.0
        %476 = vmatpush1.xpose.msra.mxu0 0.0
        %477 = vmatprep.subr.mxu0 0.0
        %478 = vmatpush1.xpose.msra.mxu0 0.0
        %479 = vmatprep.subr.mxu0 0.0
        %480 = vmatpush1.xpose.msra.mxu0 %v447
        %481 = vmatprep.subr.mxu0 0.0
        %482 = vmatpush2.xpose.msra.mxu0 0.0
        %483 = vmatprep.subr.mxu0 0.0
        %484 = vmatpush2.xpose.msra.mxu0 0.0
        %485 = vmatprep.subr.mxu0 0.0
        %486 = vmatpush2.xpose.msra.mxu0 0.0
        %487 = vmatprep.subr.mxu0 0.0
        %488 = vmatpush2.xpose.msra.mxu0 0.0
        %489 = vmatprep.subr.mxu0 0.0
        %490 = vmatpush2.xpose.msra.mxu0 0.0
        %491 = vmatprep.subr.mxu0 0.0
        %492 = vmatpush2.xpose.msra.mxu0 0.0
        %493 = vmatprep.subr.mxu0 0.0
        %494 = vmatpush2.xpose.msra.mxu0 0.0
        %495 = vmatprep.subr.mxu0 0.0
        %496 = vmatpush2.xpose.msra.mxu0 0.0
        %497 = vmatprep.subr.mxu0 0.0
        %498 = vmatpush2.xpose.msra.mxu0 0.0
        %499 = vmatprep.subr.mxu0 0.0
        %500 = vmatpush2.xpose.msra.mxu0 0.0
        %501 = vmatprep.subr.mxu0 0.0
        %502 = vmatpush2.xpose.msra.mxu0 0.0
        %503 = vmatprep.subr.mxu0 0.0
        %504 = vmatpush2.xpose.msra.mxu0 0.0
        %505 = vmatprep.subr.mxu0 0.0
        %506 = vmatpush2.xpose.msra.mxu0 0.0
        %507 = vmatprep.subr.mxu0 0.0
        %508 = vmatpush2.xpose.msra.mxu0 0.0
        %509 = vmatprep.subr.mxu0 0.0
        %510 = vmatpush2.xpose.msra.mxu0 0.0
        %511 = vmatprep.subr.mxu0 0.0
        %512 = vmatpush2.xpose.msra.mxu0 0.0
        %513 = vmatprep.mubr.f32.mxu0 0.0
        %514 = vmatmul.mubr.f32.gmra.mxu0 %v445
        %v515 = vpop.f32.mrf.mxu0
        %v516 = vadd.f32 0.0, %v515
        %v517 = vpop.f32.mrf.mxu0
        %518 = vdwg.mxu0
        %v519 = vsel %vm444, %v516, -inf
        %520 = vmax.xlane.f32.xlu0 %v519
        %v521 = vpop.xlane.xlu0 %520
        %v522 = vsub.f32 %v516, %v521
        %v523 = vmul.f32 %v522, 1.442695
        %v524 = vpow.pop %v523
        %v525 = vsel %vm444, %v524, 0.0
        %526 = vadd.xlane.f32.xlu0 %v525
        %v527 = vpop.xlane.xlu0 %526
        %v528 = vrcp.pop %v527
        %v529 = vmul.f32 %v524, %v528
        %530 = vrot.lane.b32.xlu0 %v440, 64
        %v531 = vpop.permute.xlu0 %530
        %v534 = vsel %vm444, %v529, 0
        %536 = vmatprep.subr.mxu0 0.0
        %537 = vmatpush1.msra.mxu0 0.0
        %538 = vmatprep.subr.mxu0 0.0
        %539 = vmatpush1.msra.mxu0 0.0
        %540 = vmatprep.subr.mxu0 0.0
        %541 = vmatpush1.msra.mxu0 0.0
        %542 = vmatprep.subr.mxu0 0.0
        %543 = vmatpush1.msra.mxu0 0.0
        %544 = vmatprep.subr.mxu0 0.0
        %545 = vmatpush1.msra.mxu0 0.0
        %546 = vmatprep.subr.mxu0 0.0
        %547 = vmatpush1.msra.mxu0 0.0
        %548 = vmatprep.subr.mxu0 0.0
        %549 = vmatpush1.msra.mxu0 0.0
        %550 = vmatprep.subr.mxu0 0.0
        %551 = vmatpush1.msra.mxu0 0.0
        %552 = vmatprep.subr.mxu0 0.0
        %553 = vmatpush1.msra.mxu0 0.0
        %554 = vmatprep.subr.mxu0 0.0
        %555 = vmatpush1.msra.mxu0 0.0
        %556 = vmatprep.subr.mxu0 0.0
        %557 = vmatpush1.msra.mxu0 0.0
        %558 = vmatprep.subr.mxu0 0.0
        %559 = vmatpush1.msra.mxu0 0.0
        %560 = vmatprep.subr.mxu0 0.0
        %561 = vmatpush1.msra.mxu0 0.0
        %562 = vmatprep.subr.mxu0 0.0
        %563 = vmatpush1.msra.mxu0 0.0
        %564 = vmatprep.subr.mxu0 0.0
        %565 = vmatpush1.msra.mxu0 0.0
        %566 = vmatprep.subr.mxu0 0.0
        %567 = vmatpush1.msra.mxu0 %v531
        %568 = vmatprep.subr.mxu0 0.0
        %569 = vmatpush2.msra.mxu0 0.0
        %570 = vmatprep.subr.mxu0 0.0
        %571 = vmatpush2.msra.mxu0 0.0
        %572 = vmatprep.subr.mxu0 0.0
        %573 = vmatpush2.msra.mxu0 0.0
        %574 = vmatprep.subr.mxu0 0.0
        %575 = vmatpush2.msra.mxu0 0.0
        %576 = vmatprep.subr.mxu0 0.0
        %577 = vmatpush2.msra.mxu0 0.0
        %578 = vmatprep.subr.mxu0 0.0
        %579 = vmatpush2.msra.mxu0 0.0
        %580 = vmatprep.subr.mxu0 0.0
        %581 = vmatpush2.msra.mxu0 0.0
        %582 = vmatprep.subr.mxu0 0.0
        %583 = vmatpush2.msra.mxu0 0.0
        %584 = vmatprep.subr.mxu0 0.0
        %585 = vmatpush2.msra.mxu0 0.0
        %586 = vmatprep.subr.mxu0 0.0
        %587 = vmatpush2.msra.mxu0 0.0
        %588 = vmatprep.subr.mxu0 0.0
        %589 = vmatpush2.msra.mxu0 0.0
        %590 = vmatprep.subr.mxu0 0.0
        %591 = vmatpush2.msra.mxu0 0.0
        %592 = vmatprep.subr.mxu0 0.0
        %593 = vmatpush2.msra.mxu0 0.0
        %594 = vmatprep.subr.mxu0 0.0
        %595 = vmatpush2.msra.mxu0 0.0
        %596 = vmatprep.subr.mxu0 0.0
        %597 = vmatpush2.msra.mxu0 0.0
        %598 = vmatprep.subr.mxu0 0.0
        %599 = vmatpush2.msra.mxu0 0.0
        %600 = vmatprep.mubr.f32.mxu0 0.0
        %601 = vmatmul.mubr.f32.gmra.mxu0 %v534
        %v602 = vpop.f32.mrf.mxu0
        %v603 = vadd.f32 0.0, %v602
        %v604 = vpop.f32.mrf.mxu0
        %605 = vdwg.mxu0
        %606 = vrot.lane.b32.xlu0 %v440, 120
        %v607 = vpop.permute.xlu0 %606
        %608 = vrot.lane.b32.xlu0 %v440, 88
        %v609 = vpop.permute.xlu0 %608
        %v610 = vsel %vm444, %v607, 0
        %v612 = vsel %vm444, %v609, 0
        %614 = vmatprep.subr.mxu0 0.0
        %615 = vmatpush1.xpose.msra.mxu0 0.0
        %616 = vmatprep.subr.mxu0 0.0
        %617 = vmatpush1.xpose.msra.mxu0 0.0
        %618 = vmatprep.subr.mxu0 0.0
        %619 = vmatpush1.xpose.msra.mxu0 0.0
        %620 = vmatprep.subr.mxu0 0.0
        %621 = vmatpush1.xpose.msra.mxu0 0.0
        %622 = vmatprep.subr.mxu0 0.0
        %623 = vmatpush1.xpose.msra.mxu0 0.0
        %624 = vmatprep.subr.mxu0 0.0
        %625 = vmatpush1.xpose.msra.mxu0 0.0
        %626 = vmatprep.subr.mxu0 0.0
        %627 = vmatpush1.xpose.msra.mxu0 0.0
        %628 = vmatprep.subr.mxu0 0.0
        %629 = vmatpush1.xpose.msra.mxu0 0.0
        %630 = vmatprep.subr.mxu0 0.0
        %631 = vmatpush1.xpose.msra.mxu0 0.0
        %632 = vmatprep.subr.mxu0 0.0
        %633 = vmatpush1.xpose.msra.mxu0 0.0
        %634 = vmatprep.subr.mxu0 0.0
        %635 = vmatpush1.xpose.msra.mxu0 0.0
        %636 = vmatprep.subr.mxu0 0.0
        %637 = vmatpush1.xpose.msra.mxu0 0.0
        %638 = vmatprep.subr.mxu0 0.0
        %639 = vmatpush1.xpose.msra.mxu0 0.0
        %640 = vmatprep.subr.mxu0 0.0
        %641 = vmatpush1.xpose.msra.mxu0 0.0
        %642 = vmatprep.subr.mxu0 0.0
        %643 = vmatpush1.xpose.msra.mxu0 0.0
        %644 = vmatprep.subr.mxu0 0.0
        %645 = vmatpush1.xpose.msra.mxu0 %v612
        %646 = vmatprep.subr.mxu0 0.0
        %647 = vmatpush2.xpose.msra.mxu0 0.0
        %648 = vmatprep.subr.mxu0 0.0
        %649 = vmatpush2.xpose.msra.mxu0 0.0
        %650 = vmatprep.subr.mxu0 0.0
        %651 = vmatpush2.xpose.msra.mxu0 0.0
        %652 = vmatprep.subr.mxu0 0.0
        %653 = vmatpush2.xpose.msra.mxu0 0.0
        %654 = vmatprep.subr.mxu0 0.0
        %655 = vmatpush2.xpose.msra.mxu0 0.0
        %656 = vmatprep.subr.mxu0 0.0
        %657 = vmatpush2.xpose.msra.mxu0 0.0
        %658 = vmatprep.subr.mxu0 0.0
        %659 = vmatpush2.xpose.msra.mxu0 0.0
        %660 = vmatprep.subr.mxu0 0.0
        %661 = vmatpush2.xpose.msra.mxu0 0.0
        %662 = vmatprep.subr.mxu0 0.0
        %663 = vmatpush2.xpose.msra.mxu0 0.0
        %664 = vmatprep.subr.mxu0 0.0
        %665 = vmatpush2.xpose.msra.mxu0 0.0
        %666 = vmatprep.subr.mxu0 0.0
        %667 = vmatpush2.xpose.msra.mxu0 0.0
        %668 = vmatprep.subr.mxu0 0.0
        %669 = vmatpush2.xpose.msra.mxu0 0.0
        %670 = vmatprep.subr.mxu0 0.0
        %671 = vmatpush2.xpose.msra.mxu0 0.0
        %672 = vmatprep.subr.mxu0 0.0
        %673 = vmatpush2.xpose.msra.mxu0 0.0
        %674 = vmatprep.subr.mxu0 0.0
        %675 = vmatpush2.xpose.msra.mxu0 0.0
        %676 = vmatprep.subr.mxu0 0.0
        %677 = vmatpush2.xpose.msra.mxu0 0.0
        %678 = vmatprep.mubr.f32.mxu0 0.0
        %679 = vmatmul.mubr.f32.gmra.mxu0 %v610
        %v680 = vpop.f32.mrf.mxu0
        %v681 = vadd.f32 0.0, %v680
        %v682 = vpop.f32.mrf.mxu0
        %683 = vdwg.mxu0
        %v684 = vsel %vm444, %v681, -inf
        %685 = vmax.xlane.f32.xlu0 %v684
        %v686 = vpop.xlane.xlu0 %685
        %v687 = vsub.f32 %v681, %v686
        %v688 = vmul.f32 %v687, 1.442695
        %v689 = vpow.pop %v688
        %v690 = vsel %vm444, %v689, 0.0
        %691 = vadd.xlane.f32.xlu0 %v690
        %v692 = vpop.xlane.xlu0 %691
        %v693 = vrcp.pop %v692
        %v694 = vmul.f32 %v689, %v693
        %695 = vrot.lane.b32.xlu0 %v440, 56
        %v696 = vpop.permute.xlu0 %695
        %v699 = vsel %vm444, %v694, 0
        %701 = vmatprep.subr.mxu0 0.0
        %702 = vmatpush1.msra.mxu0 0.0
        %703 = vmatprep.subr.mxu0 0.0
        %704 = vmatpush1.msra.mxu0 0.0
        %705 = vmatprep.subr.mxu0 0.0
        %706 = vmatpush1.msra.mxu0 0.0
        %707 = vmatprep.subr.mxu0 0.0
        %708 = vmatpush1.msra.mxu0 0.0
        %709 = vmatprep.subr.mxu0 0.0
        %710 = vmatpush1.msra.mxu0 0.0
        %711 = vmatprep.subr.mxu0 0.0
        %712 = vmatpush1.msra.mxu0 0.0
        %713 = vmatprep.subr.mxu0 0.0
        %714 = vmatpush1.msra.mxu0 0.0
        %715 = vmatprep.subr.mxu0 0.0
        %716 = vmatpush1.msra.mxu0 0.0
        %717 = vmatprep.subr.mxu0 0.0
        %718 = vmatpush1.msra.mxu0 0.0
        %719 = vmatprep.subr.mxu0 0.0
        %720 = vmatpush1.msra.mxu0 0.0
        %721 = vmatprep.subr.mxu0 0.0
        %722 = vmatpush1.msra.mxu0 0.0
        %723 = vmatprep.subr.mxu0 0.0
        %724 = vmatpush1.msra.mxu0 0.0
        %725 = vmatprep.subr.mxu0 0.0
        %726 = vmatpush1.msra.mxu0 0.0
        %727 = vmatprep.subr.mxu0 0.0
        %728 = vmatpush1.msra.mxu0 0.0
        %729 = vmatprep.subr.mxu0 0.0
        %730 = vmatpush1.msra.mxu0 0.0
        %731 = vmatprep.subr.mxu0 0.0
        %732 = vmatpush1.msra.mxu0 %v696
        %733 = vmatprep.subr.mxu0 0.0
        %734 = vmatpush2.msra.mxu0 0.0
        %735 = vmatprep.subr.mxu0 0.0
        %736 = vmatpush2.msra.mxu0 0.0
        %737 = vmatprep.subr.mxu0 0.0
        %738 = vmatpush2.msra.mxu0 0.0
        %739 = vmatprep.subr.mxu0 0.0
        %740 = vmatpush2.msra.mxu0 0.0
        %741 = vmatprep.subr.mxu0 0.0
        %742 = vmatpush2.msra.mxu0 0.0
        %743 = vmatprep.subr.mxu0 0.0
        %744 = vmatpush2.msra.mxu0 0.0
        %745 = vmatprep.subr.mxu0 0.0
        %746 = vmatpush2.msra.mxu0 0.0
        %747 = vmatprep.subr.mxu0 0.0
        %748 = vmatpush2.msra.mxu0 0.0
        %749 = vmatprep.subr.mxu0 0.0
        %750 = vmatpush2.msra.mxu0 0.0
        %751 = vmatprep.subr.mxu0 0.0
        %752 = vmatpush2.msra.mxu0 0.0
        %753 = vmatprep.subr.mxu0 0.0
        %754 = vmatpush2.msra.mxu0 0.0
        %755 = vmatprep.subr.mxu0 0.0
        %756 = vmatpush2.msra.mxu0 0.0
        %757 = vmatprep.subr.mxu0 0.0
        %758 = vmatpush2.msra.mxu0 0.0
        %759 = vmatprep.subr.mxu0 0.0
        %760 = vmatpush2.msra.mxu0 0.0
        %761 = vmatprep.subr.mxu0 0.0
        %762 = vmatpush2.msra.mxu0 0.0
        %763 = vmatprep.subr.mxu0 0.0
        %764 = vmatpush2.msra.mxu0 0.0
        %765 = vmatprep.mubr.f32.mxu0 0.0
        %766 = vmatmul.mubr.f32.gmra.mxu0 %v699
        %v767 = vpop.f32.mrf.mxu0
        %v768 = vadd.f32 0.0, %v767
        %v769 = vpop.f32.mrf.mxu0
        %770 = vdwg.mxu0
        %771 = vrot.lane.b32.xlu0 %v440, 112
        %v772 = vpop.permute.xlu0 %771
        %773 = vrot.lane.b32.xlu0 %v440, 80
        %v774 = vpop.permute.xlu0 %773
        %v775 = vsel %vm444, %v772, 0
        %v777 = vsel %vm444, %v774, 0
        %779 = vmatprep.subr.mxu0 0.0
        %780 = vmatpush1.xpose.msra.mxu0 0.0
        %781 = vmatprep.subr.mxu0 0.0
        %782 = vmatpush1.xpose.msra.mxu0 0.0
        %783 = vmatprep.subr.mxu0 0.0
        %784 = vmatpush1.xpose.msra.mxu0 0.0
        %785 = vmatprep.subr.mxu0 0.0
        %786 = vmatpush1.xpose.msra.mxu0 0.0
        %787 = vmatprep.subr.mxu0 0.0
        %788 = vmatpush1.xpose.msra.mxu0 0.0
        %789 = vmatprep.subr.mxu0 0.0
        %790 = vmatpush1.xpose.msra.mxu0 0.0
        %791 = vmatprep.subr.mxu0 0.0
        %792 = vmatpush1.xpose.msra.mxu0 0.0
        %793 = vmatprep.subr.mxu0 0.0
        %794 = vmatpush1.xpose.msra.mxu0 0.0
        %795 = vmatprep.subr.mxu0 0.0
        %796 = vmatpush1.xpose.msra.mxu0 0.0
        %797 = vmatprep.subr.mxu0 0.0
        %798 = vmatpush1.xpose.msra.mxu0 0.0
        %799 = vmatprep.subr.mxu0 0.0
        %800 = vmatpush1.xpose.msra.mxu0 0.0
        %801 = vmatprep.subr.mxu0 0.0
        %802 = vmatpush1.xpose.msra.mxu0 0.0
        %803 = vmatprep.subr.mxu0 0.0
        %804 = vmatpush1.xpose.msra.mxu0 0.0
        %805 = vmatprep.subr.mxu0 0.0
        %806 = vmatpush1.xpose.msra.mxu0 0.0
        %807 = vmatprep.subr.mxu0 0.0
        %808 = vmatpush1.xpose.msra.mxu0 0.0
        %809 = vmatprep.subr.mxu0 0.0
        %810 = vmatpush1.xpose.msra.mxu0 %v777
        %811 = vmatprep.subr.mxu0 0.0
        %812 = vmatpush2.xpose.msra.mxu0 0.0
        %813 = vmatprep.subr.mxu0 0.0
        %814 = vmatpush2.xpose.msra.mxu0 0.0
        %815 = vmatprep.subr.mxu0 0.0
        %816 = vmatpush2.xpose.msra.mxu0 0.0
        %817 = vmatprep.subr.mxu0 0.0
        %818 = vmatpush2.xpose.msra.mxu0 0.0
        %819 = vmatprep.subr.mxu0 0.0
        %820 = vmatpush2.xpose.msra.mxu0 0.0
        %821 = vmatprep.subr.mxu0 0.0
        %822 = vmatpush2.xpose.msra.mxu0 0.0
        %823 = vmatprep.subr.mxu0 0.0
        %824 = vmatpush2.xpose.msra.mxu0 0.0
        %825 = vmatprep.subr.mxu0 0.0
        %826 = vmatpush2.xpose.msra.mxu0 0.0
        %827 = vmatprep.subr.mxu0 0.0
        %828 = vmatpush2.xpose.msra.mxu0 0.0
        %829 = vmatprep.subr.mxu0 0.0
        %830 = vmatpush2.xpose.msra.mxu0 0.0
        %831 = vmatprep.subr.mxu0 0.0
        %832 = vmatpush2.xpose.msra.mxu0 0.0
        %833 = vmatprep.subr.mxu0 0.0
        %834 = vmatpush2.xpose.msra.mxu0 0.0
        %835 = vmatprep.subr.mxu0 0.0
        %836 = vmatpush2.xpose.msra.mxu0 0.0
        %837 = vmatprep.subr.mxu0 0.0
        %838 = vmatpush2.xpose.msra.mxu0 0.0
        %839 = vmatprep.subr.mxu0 0.0
        %840 = vmatpush2.xpose.msra.mxu0 0.0
        %841 = vmatprep.subr.mxu0 0.0
        %842 = vmatpush2.xpose.msra.mxu0 0.0
        %843 = vmatprep.mubr.f32.mxu0 0.0
        %844 = vmatmul.mubr.f32.gmra.mxu0 %v775
        %v845 = vpop.f32.mrf.mxu0
        %v846 = vadd.f32 0.0, %v845
        %v847 = vpop.f32.mrf.mxu0
        %848 = vdwg.mxu0
        %v849 = vsel %vm444, %v846, -inf
        %850 = vmax.xlane.f32.xlu0 %v849
        %v851 = vpop.xlane.xlu0 %850
        %v852 = vsub.f32 %v846, %v851
        %v853 = vmul.f32 %v852, 1.442695
        %v854 = vpow.pop %v853
        %v855 = vsel %vm444, %v854, 0.0
        %856 = vadd.xlane.f32.xlu0 %v855
        %v857 = vpop.xlane.xlu0 %856
        %v858 = vrcp.pop %v857
        %v859 = vmul.f32 %v854, %v858
        %860 = vrot.lane.b32.xlu0 %v440, 48
        %v861 = vpop.permute.xlu0 %860
        %v864 = vsel %vm444, %v859, 0
        %866 = vmatprep.subr.mxu0 0.0
        %867 = vmatpush1.msra.mxu0 0.0
        %868 = vmatprep.subr.mxu0 0.0
        %869 = vmatpush1.msra.mxu0 0.0
        %870 = vmatprep.subr.mxu0 0.0
        %871 = vmatpush1.msra.mxu0 0.0
        %872 = vmatprep.subr.mxu0 0.0
        %873 = vmatpush1.msra.mxu0 0.0
        %874 = vmatprep.subr.mxu0 0.0
        %875 = vmatpush1.msra.mxu0 0.0
        %876 = vmatprep.subr.mxu0 0.0
        %877 = vmatpush1.msra.mxu0 0.0
        %878 = vmatprep.subr.mxu0 0.0
        %879 = vmatpush1.msra.mxu0 0.0
        %880 = vmatprep.subr.mxu0 0.0
        %881 = vmatpush1.msra.mxu0 0.0
        %882 = vmatprep.subr.mxu0 0.0
        %883 = vmatpush1.msra.mxu0 0.0
        %884 = vmatprep.subr.mxu0 0.0
        %885 = vmatpush1.msra.mxu0 0.0
        %886 = vmatprep.subr.mxu0 0.0
        %887 = vmatpush1.msra.mxu0 0.0
        %888 = vmatprep.subr.mxu0 0.0
        %889 = vmatpush1.msra.mxu0 0.0
        %890 = vmatprep.subr.mxu0 0.0
        %891 = vmatpush1.msra.mxu0 0.0
        %892 = vmatprep.subr.mxu0 0.0
        %893 = vmatpush1.msra.mxu0 0.0
        %894 = vmatprep.subr.mxu0 0.0
        %895 = vmatpush1.msra.mxu0 0.0
        %896 = vmatprep.subr.mxu0 0.0
        %897 = vmatpush1.msra.mxu0 %v861
        %898 = vmatprep.subr.mxu0 0.0
        %899 = vmatpush2.msra.mxu0 0.0
        %900 = vmatprep.subr.mxu0 0.0
        %901 = vmatpush2.msra.mxu0 0.0
        %902 = vmatprep.subr.mxu0 0.0
        %903 = vmatpush2.msra.mxu0 0.0
        %904 = vmatprep.subr.mxu0 0.0
        %905 = vmatpush2.msra.mxu0 0.0
        %906 = vmatprep.subr.mxu0 0.0
        %907 = vmatpush2.msra.mxu0 0.0
        %908 = vmatprep.subr.mxu0 0.0
        %909 = vmatpush2.msra.mxu0 0.0
        %910 = vmatprep.subr.mxu0 0.0
        %911 = vmatpush2.msra.mxu0 0.0
        %912 = vmatprep.subr.mxu0 0.0
        %913 = vmatpush2.msra.mxu0 0.0
        %914 = vmatprep.subr.mxu0 0.0
        %915 = vmatpush2.msra.mxu0 0.0
        %916 = vmatprep.subr.mxu0 0.0
        %917 = vmatpush2.msra.mxu0 0.0
        %918 = vmatprep.subr.mxu0 0.0
        %919 = vmatpush2.msra.mxu0 0.0
        %920 = vmatprep.subr.mxu0 0.0
        %921 = vmatpush2.msra.mxu0 0.0
        %922 = vmatprep.subr.mxu0 0.0
        %923 = vmatpush2.msra.mxu0 0.0
        %924 = vmatprep.subr.mxu0 0.0
        %925 = vmatpush2.msra.mxu0 0.0
        %926 = vmatprep.subr.mxu0 0.0
        %927 = vmatpush2.msra.mxu0 0.0
        %928 = vmatprep.subr.mxu0 0.0
        %929 = vmatpush2.msra.mxu0 0.0
        %930 = vmatprep.mubr.f32.mxu0 0.0
        %931 = vmatmul.mubr.f32.gmra.mxu0 %v864
        %v932 = vpop.f32.mrf.mxu0
        %v933 = vadd.f32 0.0, %v932
        %v934 = vpop.f32.mrf.mxu0
        %935 = vdwg.mxu0
        %936 = vrot.lane.b32.xlu0 %v440, 104
        %v937 = vpop.permute.xlu0 %936
        %938 = vrot.lane.b32.xlu0 %v440, 72
        %v939 = vpop.permute.xlu0 %938
        %v940 = vsel %vm444, %v937, 0
        %v942 = vsel %vm444, %v939, 0
        %944 = vmatprep.subr.mxu0 0.0
        %945 = vmatpush1.xpose.msra.mxu0 0.0
        %946 = vmatprep.subr.mxu0 0.0
        %947 = vmatpush1.xpose.msra.mxu0 0.0
        %948 = vmatprep.subr.mxu0 0.0
        %949 = vmatpush1.xpose.msra.mxu0 0.0
        %950 = vmatprep.subr.mxu0 0.0
        %951 = vmatpush1.xpose.msra.mxu0 0.0
        %952 = vmatprep.subr.mxu0 0.0
        %953 = vmatpush1.xpose.msra.mxu0 0.0
        %954 = vmatprep.subr.mxu0 0.0
        %955 = vmatpush1.xpose.msra.mxu0 0.0
        %956 = vmatprep.subr.mxu0 0.0
        %957 = vmatpush1.xpose.msra.mxu0 0.0
        %958 = vmatprep.subr.mxu0 0.0
        %959 = vmatpush1.xpose.msra.mxu0 0.0
        %960 = vmatprep.subr.mxu0 0.0
        %961 = vmatpush1.xpose.msra.mxu0 0.0
        %962 = vmatprep.subr.mxu0 0.0
        %963 = vmatpush1.xpose.msra.mxu0 0.0
        %964 = vmatprep.subr.mxu0 0.0
        %965 = vmatpush1.xpose.msra.mxu0 0.0
        %966 = vmatprep.subr.mxu0 0.0
        %967 = vmatpush1.xpose.msra.mxu0 0.0
        %968 = vmatprep.subr.mxu0 0.0
        %969 = vmatpush1.xpose.msra.mxu0 0.0
        %970 = vmatprep.subr.mxu0 0.0
        %971 = vmatpush1.xpose.msra.mxu0 0.0
        %972 = vmatprep.subr.mxu0 0.0
        %973 = vmatpush1.xpose.msra.mxu0 0.0
        %974 = vmatprep.subr.mxu0 0.0
        %975 = vmatpush1.xpose.msra.mxu0 %v942
        %976 = vmatprep.subr.mxu0 0.0
        %977 = vmatpush2.xpose.msra.mxu0 0.0
        %978 = vmatprep.subr.mxu0 0.0
        %979 = vmatpush2.xpose.msra.mxu0 0.0
        %980 = vmatprep.subr.mxu0 0.0
        %981 = vmatpush2.xpose.msra.mxu0 0.0
        %982 = vmatprep.subr.mxu0 0.0
        %983 = vmatpush2.xpose.msra.mxu0 0.0
        %984 = vmatprep.subr.mxu0 0.0
        %985 = vmatpush2.xpose.msra.mxu0 0.0
        %986 = vmatprep.subr.mxu0 0.0
        %987 = vmatpush2.xpose.msra.mxu0 0.0
        %988 = vmatprep.subr.mxu0 0.0
        %989 = vmatpush2.xpose.msra.mxu0 0.0
        %990 = vmatprep.subr.mxu0 0.0
        %991 = vmatpush2.xpose.msra.mxu0 0.0
        %992 = vmatprep.subr.mxu0 0.0
        %993 = vmatpush2.xpose.msra.mxu0 0.0
        %994 = vmatprep.subr.mxu0 0.0
        %995 = vmatpush2.xpose.msra.mxu0 0.0
        %996 = vmatprep.subr.mxu0 0.0
        %997 = vmatpush2.xpose.msra.mxu0 0.0
        %998 = vmatprep.subr.mxu0 0.0
        %999 = vmatpush2.xpose.msra.mxu0 0.0
        %1000 = vmatprep.subr.mxu0 0.0
        %1001 = vmatpush2.xpose.msra.mxu0 0.0
        %1002 = vmatprep.subr.mxu0 0.0
        %1003 = vmatpush2.xpose.msra.mxu0 0.0
        %1004 = vmatprep.subr.mxu0 0.0
        %1005 = vmatpush2.xpose.msra.mxu0 0.0
        %1006 = vmatprep.subr.mxu0 0.0
        %1007 = vmatpush2.xpose.msra.mxu0 0.0
        %1008 = vmatprep.mubr.f32.mxu0 0.0
        %1009 = vmatmul.mubr.f32.gmra.mxu0 %v940
        %v1010 = vpop.f32.mrf.mxu0
        %v1011 = vadd.f32 0.0, %v1010
        %v1012 = vpop.f32.mrf.mxu0
        %1013 = vdwg.mxu0
        %v1014 = vsel %vm444, %v1011, -inf
        %1015 = vmax.xlane.f32.xlu0 %v1014
        %v1016 = vpop.xlane.xlu0 %1015
        %v1017 = vsub.f32 %v1011, %v1016
        %v1018 = vmul.f32 %v1017, 1.442695
        %v1019 = vpow.pop %v1018
        %v1020 = vsel %vm444, %v1019, 0.0
        %1021 = vadd.xlane.f32.xlu0 %v1020
        %v1022 = vpop.xlane.xlu0 %1021
        %v1023 = vrcp.pop %v1022
        %v1024 = vmul.f32 %v1019, %v1023
        %1025 = vrot.lane.b32.xlu0 %v440, 40
        %v1026 = vpop.permute.xlu0 %1025
        %v1029 = vsel %vm444, %v1024, 0
        %1031 = vmatprep.subr.mxu0 0.0
        %1032 = vmatpush1.msra.mxu0 0.0
        %1033 = vmatprep.subr.mxu0 0.0
        %1034 = vmatpush1.msra.mxu0 0.0
        %1035 = vmatprep.subr.mxu0 0.0
        %1036 = vmatpush1.msra.mxu0 0.0
        %1037 = vmatprep.subr.mxu0 0.0
        %1038 = vmatpush1.msra.mxu0 0.0
        %1039 = vmatprep.subr.mxu0 0.0
        %1040 = vmatpush1.msra.mxu0 0.0
        %1041 = vmatprep.subr.mxu0 0.0
        %1042 = vmatpush1.msra.mxu0 0.0
        %1043 = vmatprep.subr.mxu0 0.0
        %1044 = vmatpush1.msra.mxu0 0.0
        %1045 = vmatprep.subr.mxu0 0.0
        %1046 = vmatpush1.msra.mxu0 0.0
        %1047 = vmatprep.subr.mxu0 0.0
        %1048 = vmatpush1.msra.mxu0 0.0
        %1049 = vmatprep.subr.mxu0 0.0
        %1050 = vmatpush1.msra.mxu0 0.0
        %1051 = vmatprep.subr.mxu0 0.0
        %1052 = vmatpush1.msra.mxu0 0.0
        %1053 = vmatprep.subr.mxu0 0.0
        %1054 = vmatpush1.msra.mxu0 0.0
        %1055 = vmatprep.subr.mxu0 0.0
        %1056 = vmatpush1.msra.mxu0 0.0
        %1057 = vmatprep.subr.mxu0 0.0
        %1058 = vmatpush1.msra.mxu0 0.0
        %1059 = vmatprep.subr.mxu0 0.0
        %1060 = vmatpush1.msra.mxu0 0.0
        %1061 = vmatprep.subr.mxu0 0.0
        %1062 = vmatpush1.msra.mxu0 %v1026
        %1063 = vmatprep.subr.mxu0 0.0
        %1064 = vmatpush2.msra.mxu0 0.0
        %1065 = vmatprep.subr.mxu0 0.0
        %1066 = vmatpush2.msra.mxu0 0.0
        %1067 = vmatprep.subr.mxu0 0.0
        %1068 = vmatpush2.msra.mxu0 0.0
        %1069 = vmatprep.subr.mxu0 0.0
        %1070 = vmatpush2.msra.mxu0 0.0
        %1071 = vmatprep.subr.mxu0 0.0
        %1072 = vmatpush2.msra.mxu0 0.0
        %1073 = vmatprep.subr.mxu0 0.0
        %1074 = vmatpush2.msra.mxu0 0.0
        %1075 = vmatprep.subr.mxu0 0.0
        %1076 = vmatpush2.msra.mxu0 0.0
        %1077 = vmatprep.subr.mxu0 0.0
        %1078 = vmatpush2.msra.mxu0 0.0
        %1079 = vmatprep.subr.mxu0 0.0
        %1080 = vmatpush2.msra.mxu0 0.0
        %1081 = vmatprep.subr.mxu0 0.0
        %1082 = vmatpush2.msra.mxu0 0.0
        %1083 = vmatprep.subr.mxu0 0.0
        %1084 = vmatpush2.msra.mxu0 0.0
        %1085 = vmatprep.subr.mxu0 0.0
        %1086 = vmatpush2.msra.mxu0 0.0
        %1087 = vmatprep.subr.mxu0 0.0
        %1088 = vmatpush2.msra.mxu0 0.0
        %1089 = vmatprep.subr.mxu0 0.0
        %1090 = vmatpush2.msra.mxu0 0.0
        %1091 = vmatprep.subr.mxu0 0.0
        %1092 = vmatpush2.msra.mxu0 0.0
        %1093 = vmatprep.subr.mxu0 0.0
        %1094 = vmatpush2.msra.mxu0 0.0
        %1095 = vmatprep.mubr.f32.mxu0 0.0
        %1096 = vmatmul.mubr.f32.gmra.mxu0 %v1029
        %v1097 = vpop.f32.mrf.mxu0
        %v1098 = vadd.f32 0.0, %v1097
        %v1099 = vpop.f32.mrf.mxu0
        %1100 = vdwg.mxu0
        %1102 = vrot.lane.b32.xlu0 %v768, 8
        %v1103 = vpop.permute.xlu0 %1102
        %1106 = vrot.lane.b32.xlu0 %v933, 16
        %v1107 = vpop.permute.xlu0 %1106
        %1110 = vrot.lane.b32.xlu0 %v1098, 24
        %v1111 = vpop.permute.xlu0 %1110
        %v1113 = vsel %vm444, %v603, %v1103
        %vm1114 = vcmask 130048
        %v1115 = vsel %vm1114, %v1113, %v1107
        %vm1116 = vcmask 195584
        %v1117 = vsel %vm1116, %v1115, %v1111
        %1118 = vst.msk [vmem:[#allocation3] sm:$0xff] %vm364, %v1117
        %v1119 = vld [vmem:[#allocation3] sm:$0xff]
        %v1120 = vld [vmem:[#allocation9] sm:$0xff]
        %v1121 = vld [vmem:[#allocation9 + $0x8] sm:$0xff]
        %v1122 = vld [vmem:[#allocation9 + $0x10] sm:$0xff]
        %v1123 = vld [vmem:[#allocation9 + $0x18] sm:$0xff]
        %v1124 = vld [vmem:[%s4] sm:$0x1]
        %v1126 = vlaneseq
        %v1127 = vshrl.u32 %v1126, 7
        %v1128 = vsub.s32 0, %v1127
        %v1129 = vrot.slane %v1124, %v1128
        %v1132 = vsel %vm364, %v1119, 0
        %1134 = vmatprep.subr.mxu0 0.0
        %1135 = vmatpush1.msra.mxu0 0.0
        %1136 = vmatprep.subr.mxu0 0.0
        %1137 = vmatpush1.msra.mxu0 0.0
        %1138 = vmatprep.subr.mxu0 0.0
        %1139 = vmatpush1.msra.mxu0 0.0
        %1140 = vmatprep.subr.mxu0 0.0
        %1141 = vmatpush1.msra.mxu0 0.0
        %1142 = vmatprep.subr.mxu0 0.0
        %1143 = vmatpush1.msra.mxu0 0.0
        %1144 = vmatprep.subr.mxu0 0.0
        %1145 = vmatpush1.msra.mxu0 0.0
        %1146 = vmatprep.subr.mxu0 0.0
        %1147 = vmatpush1.msra.mxu0 0.0
        %1148 = vmatprep.subr.mxu0 0.0
        %1149 = vmatpush1.msra.mxu0 0.0
        %1150 = vmatprep.subr.mxu0 0.0
        %1151 = vmatpush1.msra.mxu0 0.0
        %1152 = vmatprep.subr.mxu0 0.0
        %1153 = vmatpush1.msra.mxu0 0.0
        %1154 = vmatprep.subr.mxu0 0.0
        %1155 = vmatpush1.msra.mxu0 0.0
        %1156 = vmatprep.subr.mxu0 0.0
        %1157 = vmatpush1.msra.mxu0 0.0
        %1158 = vmatprep.subr.mxu0 0.0
        %1159 = vmatpush1.msra.mxu0 %v1123
        %1160 = vmatprep.subr.mxu0 0.0
        %1161 = vmatpush1.msra.mxu0 %v1122
        %1162 = vmatprep.subr.mxu0 0.0
        %1163 = vmatpush1.msra.mxu0 %v1121
        %1164 = vmatprep.subr.mxu0 0.0
        %1165 = vmatpush1.msra.mxu0 %v1120
        %1166 = vmatprep.subr.mxu0 0.0
        %1167 = vmatpush2.msra.mxu0 0.0
        %1168 = vmatprep.subr.mxu0 0.0
        %1169 = vmatpush2.msra.mxu0 0.0
        %1170 = vmatprep.subr.mxu0 0.0
        %1171 = vmatpush2.msra.mxu0 0.0
        %1172 = vmatprep.subr.mxu0 0.0
        %1173 = vmatpush2.msra.mxu0 0.0
        %1174 = vmatprep.subr.mxu0 0.0
        %1175 = vmatpush2.msra.mxu0 0.0
        %1176 = vmatprep.subr.mxu0 0.0
        %1177 = vmatpush2.msra.mxu0 0.0
        %1178 = vmatprep.subr.mxu0 0.0
        %1179 = vmatpush2.msra.mxu0 0.0
        %1180 = vmatprep.subr.mxu0 0.0
        %1181 = vmatpush2.msra.mxu0 0.0
        %1182 = vmatprep.subr.mxu0 0.0
        %1183 = vmatpush2.msra.mxu0 0.0
        %1184 = vmatprep.subr.mxu0 0.0
        %1185 = vmatpush2.msra.mxu0 0.0
        %1186 = vmatprep.subr.mxu0 0.0
        %1187 = vmatpush2.msra.mxu0 0.0
        %1188 = vmatprep.subr.mxu0 0.0
        %1189 = vmatpush2.msra.mxu0 0.0
        %1190 = vmatprep.subr.mxu0 0.0
        %1191 = vmatpush2.msra.mxu0 0.0
        %1192 = vmatprep.subr.mxu0 0.0
        %1193 = vmatpush2.msra.mxu0 0.0
        %1194 = vmatprep.subr.mxu0 0.0
        %1195 = vmatpush2.msra.mxu0 0.0
        %1196 = vmatprep.subr.mxu0 0.0
        %1197 = vmatpush2.msra.mxu0 0.0
        %1198 = vmatprep.mubr.f32.mxu0 0.0
        %1199 = vmatmul.mubr.f32.gmra.mxu0 %v1132
        %v1200 = vpop.f32.mrf.mxu0
        %v1201 = vadd.f32 %v1129, %v1200
        %v1202 = vpop.f32.mrf.mxu0
        %1203 = vdwg.mxu0
        %v1204 = vld [vmem:[%s305] sm:$0xff]
        %v1205 = vadd.f32 %v1201, %v1204
        %v1206 = vld [vmem:[#allocation10] sm:$0xff]
        %v1207 = vld [vmem:[#allocation10 + $0x8] sm:$0xff]
        %v1208 = vld [vmem:[#allocation10 + $0x10] sm:$0xff]
        %v1209 = vld [vmem:[#allocation10 + $0x18] sm:$0xff]
        %v1211 = vsel %vm364, %v1205, 0
        %1213 = vmatprep.subr.mxu0 0.0
        %1214 = vmatpush1.msra.mxu0 0.0
        %1215 = vmatprep.subr.mxu0 0.0
        %1216 = vmatpush1.msra.mxu0 0.0
        %1217 = vmatprep.subr.mxu0 0.0
        %1218 = vmatpush1.msra.mxu0 0.0
        %1219 = vmatprep.subr.mxu0 0.0
        %1220 = vmatpush1.msra.mxu0 0.0
        %1221 = vmatprep.subr.mxu0 0.0
        %1222 = vmatpush1.msra.mxu0 0.0
        %1223 = vmatprep.subr.mxu0 0.0
        %1224 = vmatpush1.msra.mxu0 0.0
        %1225 = vmatprep.subr.mxu0 0.0
        %1226 = vmatpush1.msra.mxu0 0.0
        %1227 = vmatprep.subr.mxu0 0.0
        %1228 = vmatpush1.msra.mxu0 0.0
        %1229 = vmatprep.subr.mxu0 0.0
        %1230 = vmatpush1.msra.mxu0 0.0
        %1231 = vmatprep.subr.mxu0 0.0
        %1232 = vmatpush1.msra.mxu0 0.0
        %1233 = vmatprep.subr.mxu0 0.0
        %1234 = vmatpush1.msra.mxu0 0.0
        %1235 = vmatprep.subr.mxu0 0.0
        %1236 = vmatpush1.msra.mxu0 0.0
        %1237 = vmatprep.subr.mxu0 0.0
        %1238 = vmatpush1.msra.mxu0 %v1209
        %1239 = vmatprep.subr.mxu0 0.0
        %1240 = vmatpush1.msra.mxu0 %v1208
        %1241 = vmatprep.subr.mxu0 0.0
        %1242 = vmatpush1.msra.mxu0 %v1207
        %1243 = vmatprep.subr.mxu0 0.0
        %1244 = vmatpush1.msra.mxu0 %v1206
        %1245 = vmatprep.subr.mxu0 0.0
        %1246 = vmatpush2.msra.mxu0 0.0
        %1247 = vmatprep.subr.mxu0 0.0
        %1248 = vmatpush2.msra.mxu0 0.0
        %1249 = vmatprep.subr.mxu0 0.0
        %1250 = vmatpush2.msra.mxu0 0.0
        %1251 = vmatprep.subr.mxu0 0.0
        %1252 = vmatpush2.msra.mxu0 0.0
        %1253 = vmatprep.subr.mxu0 0.0
        %1254 = vmatpush2.msra.mxu0 0.0
        %1255 = vmatprep.subr.mxu0 0.0
        %1256 = vmatpush2.msra.mxu0 0.0
        %1257 = vmatprep.subr.mxu0 0.0
        %1258 = vmatpush2.msra.mxu0 0.0
        %1259 = vmatprep.subr.mxu0 0.0
        %1260 = vmatpush2.msra.mxu0 0.0
        %1261 = vmatprep.subr.mxu0 0.0
        %1262 = vmatpush2.msra.mxu0 0.0
        %1263 = vmatprep.subr.mxu0 0.0
        %1264 = vmatpush2.msra.mxu0 0.0
        %1265 = vmatprep.subr.mxu0 0.0
        %1266 = vmatpush2.msra.mxu0 0.0
        %1267 = vmatprep.subr.mxu0 0.0
        %1268 = vmatpush2.msra.mxu0 0.0
        %1269 = vmatprep.subr.mxu0 0.0
        %1270 = vmatpush2.msra.mxu0 0.0
        %1271 = vmatprep.subr.mxu0 0.0
        %1272 = vmatpush2.msra.mxu0 0.0
        %1273 = vmatprep.subr.mxu0 0.0
        %1274 = vmatpush2.msra.mxu0 0.0
        %1275 = vmatprep.subr.mxu0 0.0
        %1276 = vmatpush2.msra.mxu0 0.0
        %1277 = vmatprep.mubr.f32.mxu0 0.0
        %1278 = vmatmul.mubr.f32.gmra.mxu0 %v1211
        %v1279 = vpop.f32.mrf.mxu0
        %v1280 = vadd.f32 0.0, %v1279
        %v1281 = vpop.f32.mrf.mxu0
        %1282 = vdwg.mxu0
        %v1283 = vld [vmem:[#allocation12] sm:$0xff]
        %v1284 = vld [vmem:[#allocation12 + $0x8] sm:$0xff]
        %v1285 = vld [vmem:[#allocation12 + $0x10] sm:$0xff]
        %v1286 = vld [vmem:[#allocation12 + $0x18] sm:$0xff]
        %v1288 = vsel %vm364, %v1280, 0
        %1290 = vmatprep.subr.mxu0 0.0
        %1291 = vmatpush1.msra.mxu0 0.0
        %1292 = vmatprep.subr.mxu0 0.0
        %1293 = vmatpush1.msra.mxu0 0.0
        %1294 = vmatprep.subr.mxu0 0.0
        %1295 = vmatpush1.msra.mxu0 0.0
        %1296 = vmatprep.subr.mxu0 0.0
        %1297 = vmatpush1.msra.mxu0 0.0
        %1298 = vmatprep.subr.mxu0 0.0
        %1299 = vmatpush1.msra.mxu0 0.0
        %1300 = vmatprep.subr.mxu0 0.0
        %1301 = vmatpush1.msra.mxu0 0.0
        %1302 = vmatprep.subr.mxu0 0.0
        %1303 = vmatpush1.msra.mxu0 0.0
        %1304 = vmatprep.subr.mxu0 0.0
        %1305 = vmatpush1.msra.mxu0 0.0
        %1306 = vmatprep.subr.mxu0 0.0
        %1307 = vmatpush1.msra.mxu0 0.0
        %1308 = vmatprep.subr.mxu0 0.0
        %1309 = vmatpush1.msra.mxu0 0.0
        %1310 = vmatprep.subr.mxu0 0.0
        %1311 = vmatpush1.msra.mxu0 0.0
        %1312 = vmatprep.subr.mxu0 0.0
        %1313 = vmatpush1.msra.mxu0 0.0
        %1314 = vmatprep.subr.mxu0 0.0
        %1315 = vmatpush1.msra.mxu0 %v1286
        %1316 = vmatprep.subr.mxu0 0.0
        %1317 = vmatpush1.msra.mxu0 %v1285
        %1318 = vmatprep.subr.mxu0 0.0
        %1319 = vmatpush1.msra.mxu0 %v1284
        %1320 = vmatprep.subr.mxu0 0.0
        %1321 = vmatpush1.msra.mxu0 %v1283
        %1322 = vmatprep.subr.mxu0 0.0
        %1323 = vmatpush2.msra.mxu0 0.0
        %1324 = vmatprep.subr.mxu0 0.0
        %1325 = vmatpush2.msra.mxu0 0.0
        %1326 = vmatprep.subr.mxu0 0.0
        %1327 = vmatpush2.msra.mxu0 0.0
        %1328 = vmatprep.subr.mxu0 0.0
        %1329 = vmatpush2.msra.mxu0 0.0
        %1330 = vmatprep.subr.mxu0 0.0
        %1331 = vmatpush2.msra.mxu0 0.0
        %1332 = vmatprep.subr.mxu0 0.0
        %1333 = vmatpush2.msra.mxu0 0.0
        %1334 = vmatprep.subr.mxu0 0.0
        %1335 = vmatpush2.msra.mxu0 0.0
        %1336 = vmatprep.subr.mxu0 0.0
        %1337 = vmatpush2.msra.mxu0 0.0
        %1338 = vmatprep.subr.mxu0 0.0
        %1339 = vmatpush2.msra.mxu0 0.0
        %1340 = vmatprep.subr.mxu0 0.0
        %1341 = vmatpush2.msra.mxu0 0.0
        %1342 = vmatprep.subr.mxu0 0.0
        %1343 = vmatpush2.msra.mxu0 0.0
        %1344 = vmatprep.subr.mxu0 0.0
        %1345 = vmatpush2.msra.mxu0 0.0
        %1346 = vmatprep.subr.mxu0 0.0
        %1347 = vmatpush2.msra.mxu0 0.0
        %1348 = vmatprep.subr.mxu0 0.0
        %1349 = vmatpush2.msra.mxu0 0.0
        %1350 = vmatprep.subr.mxu0 0.0
        %1351 = vmatpush2.msra.mxu0 0.0
        %1352 = vmatprep.subr.mxu0 0.0
        %1353 = vmatpush2.msra.mxu0 0.0
        %1354 = vmatprep.mubr.f32.mxu0 0.0
        %1355 = vmatmul.mubr.f32.gmra.mxu0 %v1288
        %v1356 = vpop.f32.mrf.mxu0
        %v1357 = vadd.f32 %v1205, %v1356
        %v1358 = vpop.f32.mrf.mxu0
        %1359 = vdwg.mxu0
        %1360 = vst.msk [vmem:[%s351] sm:$0xff] %vm364, %v1357
        %s1361 = sand.u32 %s186, 1
        %s1362 = scalar_lea.sflag [#allocation6], %s1361
        %s1363 = sand.u32 %s186, 1
        %s1364 = smul.addr %s1363, 8
        %s1365 = scalar_lea.vmem [#allocation13], %s1364
        // Predicated region
        $region69: #{tpu_custom_call.1} parent=47 // pred_check
          %p1366 = pneg %p196
        $region70: #{tpu_custom_call.1} parent=47 // pred_check_branch
          %1368 = sbr.rel (%p1366) target = $region72
        $region71: #{tpu_custom_call.1} parent=47 // pred_region
          %s1370 = ssub.s32 128, 128
          %1371 = vsyncadd %s1362, %s1370
          %s1372 = smul.addr %s26, 128
          %s1373 = scalar_lea.hbm %s7, %s1372
          %s1375 = sshll.u32 %s1365, 4
          %s1376 = int_to_ptr.vmem [resolvable:$true] %s1375
          %1378 = dma.vmem_to_hbm [thread:$0]  %s1376, 128, %s1373, %s1362
        $region72: #{tpu_custom_call.1} parent=47 // pred_fallthru
          _
      $region48: #{tpu_custom_call.1} parent=5 // pred_fallthru
        _
      %p1379 = scmp.le.s32.totalorder 2, %s21
      // Predicated region
      $region73: #{tpu_custom_call.1} parent=5 // pred_check
        %p1380 = pneg %p1379
      $region74: #{tpu_custom_call.1} parent=5 // pred_check_branch
        %1382 = sbr.rel (%p1380) target = $region76
      $region75: #{tpu_custom_call.1} parent=5 // pred_region
        %s1383 = ssub.s32 %s21, 2
        // Predicated region
        $region77: #{tpu_custom_call.1} parent=75 // pred_check
          %p1384 = pneg %p202
        $region78: #{tpu_custom_call.1} parent=75 // pred_check_branch
          %1386 = sbr.rel (%p1384) target = $region80
        $region79: #{tpu_custom_call.1} parent=75 // pred_region
          %s1387 = sand.u32 %s187, 1
          %s1388 = scalar_lea.sflag [#allocation6], %s1387
          %s1389 = sand.u32 %s187, 1
          %s1390 = smul.addr %s1389, 8
          %s1391 = scalar_lea.vmem [#allocation13], %s1390
          %1392 = dma.done %s1388, 128
        $region80: #{tpu_custom_call.1} parent=75 // pred_fallthru
          _
      $region76: #{tpu_custom_call.1} parent=5 // pred_fallthru
        _
    $region6: #{tpu_custom_call.1} parent=1 // loop_footer
      %s25 = sadd.s32 1, %s21
    $region7: #{tpu_custom_call.1} parent=1 // loop_footer_branch
      %20 = sbr.rel target = $region3
    $region8: #{tpu_custom_call.1} parent=1 // loop_exit
      _
    %1393 = vsyncpa [#allocation5], 1
    %s1394 = scalar_lea.sflag [#allocation5], 1
    %1395 = vsyncpa %s1394, 1
    %1396 = vsyncpa [#allocation8], 1
    %1397 = vsyncpa [#allocation11], 1
    %1398 = vsyncpa [#allocation6], 1
    %s1399 = scalar_lea.sflag [#allocation6], 1
    %1400 = vsyncpa %s1399, 1

// kernel: tpu_custom_call.1
$region0: #{tpu_custom_call.1}
  #allocation0 [shape = 'u32[]', space=smem, size = 0x4, offset = 0x4, fixed_abs, tag = 'smem constant byte address 0x4 - core index']
  #allocation1 [shape = 'u32[144,128]{1,0:T(1,128)}', space=vmem, size = 0x12000, scoped, tag = 'internal scratch']
  #allocation2 [shape = 'f32[8,96]{1,0:T(8,128)}', space=vmem, size = 0x1000, scoped, tag = 'scratch operand']
  #allocation3 [shape = 'f32[8,32]{1,0:T(8,128)}', space=vmem, size = 0x1000, scoped, tag = 'scratch operand']
  %s0 = inlined_call_operand.hbm [shape: f32[2,8,32], index: 0, kind: input, shape index: {}]
  %s1 = inlined_call_operand.hbm [shape: f32[32,96], index: 1, kind: input, shape index: {}]
  %s2 = inlined_call_operand.vmem [shape: f32[1,96], index: 2, kind: input, shape index: {}]
  %s3 = inlined_call_operand.hbm [shape: f32[32,32], index: 3, kind: input, shape index: {}]
  %s4 = inlined_call_operand.vmem [shape: f32[1,32], index: 4, kind: input, shape index: {}]
  %s5 = inlined_call_operand.hbm [shape: f32[32,32], index: 5, kind: input, shape index: {}]
  %s6 = inlined_call_operand.hbm [shape: f32[32,32], index: 6, kind: input, shape index: {}]
  %s7 = inlined_call_operand.hbm [shape: f32[2,8,32], index: 7, kind: output, shape index: {}]
  %s8 = sld [smem:[#allocation0]]
  $region81: #{tpu_custom_call.1} parent=0
    _
  %s10 = ssub.s32 1, %s8
  %s11 = scalar_select 0, %s10, %s8
  $region1: #{tpu_custom_call.1} parent=0
    #allocation4 [shape = 'u8[8192]{0}', space=vmem, size = 0x2000, scoped, tag = 'input window, operand 0']
    #allocation5 [shape = 's32[2]{0}', space=sflag, size = 0x8, scoped, tag = 'scoped memory for tpu_custom_call.1']
    #allocation6 [shape = 's32[2]{0}', space=sflag, size = 0x8, scoped, tag = 'scoped memory for tpu_custom_call.1']
    #allocation7 [shape = 'u8[16384]{0}', space=vmem, size = 0x4000, scoped, tag = 'input window, operand 1, single buffered']
    #allocation8 [shape = 's32[1]{0}', space=sflag, size = 0x4, scoped, tag = 'scoped memory for tpu_custom_call.1']
    #allocation9 [shape = 'u8[16384]{0}', space=vmem, size = 0x4000, scoped, tag = 'input window, operand 3, single buffered']
    #allocation10 [shape = 'u8[16384]{0}', space=vmem, size = 0x4000, scoped, tag = 'input window, operand 5, single buffered']
    #allocation11 [shape = 's32[1]{0}', space=sflag, size = 0x4, scoped, tag = 'scoped memory for tpu_custom_call.1']
    #allocation12 [shape = 'u8[16384]{0}', space=vmem, size = 0x4000, scoped, tag = 'input window, operand 6, single buffered']
    #allocation13 [shape = 'u8[8192]{0}', space=vmem, size = 0x2000, scoped, tag = 'output window, operand 0']
    %12 = vsyncpa [#allocation5], 0
    %s13 = scalar_lea.sflag [#allocation5], 1
    %14 = vsyncpa %s13, 0
    %15 = vsyncpa [#allocation8], 0
    %16 = vsyncpa [#allocation11], 0
    %17 = vsyncpa [#allocation6], 0
    %s18 = scalar_lea.sflag [#allocation6], 1
    %19 = vsyncpa %s18, 0
    loop: start=0, step=1, limit=4
    $region2: #{tpu_custom_call.1} parent=1 // loop_pre_header
      _
    $region3: #{tpu_custom_call.1} parent=1 // loop_header
      %s21 = sphi 0, %s25
      %p22 = scmp.ge.s32.totalorder %s21, 4
      %s31 = sphi 0, %s33
      %s34 = sphi 0, %s31
      %s35 = sphi 0, %s34
      %s51 = sphi 0, %s35
      %s55 = sphi 0, %s55
      %s57 = sphi 0, %s55
      %s58 = sphi 0, %s57
      %s72 = sphi 0, %s58
      %s76 = sphi 0, %s76
      %s78 = sphi 0, %s76
      %s79 = sphi 0, %s78
      %s93 = sphi 0, %s79
      %s97 = sphi 0, %s97
      %s99 = sphi 0, %s97
      %s100 = sphi 0, %s99
      %s114 = sphi 0, %s100
      %s118 = sphi 0, %s118
      %s120 = sphi 0, %s118
      %s121 = sphi 0, %s120
      %s135 = sphi 0, %s121
      %s139 = sphi 0, %s139
      %s141 = sphi 0, %s139
      %s142 = sphi 0, %s141
      %s156 = sphi 0, %s142
      %s160 = sphi 0, %s160
      %s162 = sphi 0, %s160
      %s163 = sphi 0, %s162
      %s177 = sphi 0, %s163
      %s183 = sphi 0, %s185
      %s186 = sphi 0, %s183
      %s187 = sphi 0, %s186
      %s203 = sphi 0, %s187
    $region4: #{tpu_custom_call.1} parent=1 // loop_header_branch
      %24 = sbr.rel (%p22) target = $region8
    $region5: #{tpu_custom_call.1} parent=1 // loop_body
      %s26 = ssub.s32 %s21, 1
      %s27 = ssub.s32 %s21, 2
      %s28 = sadd.s32 %s21, 1
      %s29 = ssub.s32 %s21, %s28
      %p30 = scmp.eq.s32.totalorder %s29, 0
      %s32 = sadd.s32 %s31, 1
      %s33 = scalar_select %p30, %s31, %s32
      %p36 = pneg %p30
      %p37 = scmp.eq.s32.totalorder %s21, 1
      %p38 = por %p36, %p37
      %p39 = scmp.ne.s32.totalorder %s31, %s34
      %p40 = scmp.eq.s32.totalorder %s21, 0
      %p41 = por %p39, %p40
      %p42 = scmp.ne.s32.totalorder %s31, %s34
      %p43 = scmp.eq.s32.totalorder %s26, 1
      %p44 = por %p42, %p43
      %p45 = scmp.ne.s32.totalorder %s34, %s35
      %p46 = scmp.eq.s32.totalorder %s26, 0
      %p47 = por %p45, %p46
      %p48 = scmp.ne.s32.totalorder %s34, %s35
      %p49 = scmp.eq.s32.totalorder %s27, 1
      %p50 = por %p48, %p49
      %p52 = scmp.ne.s32.totalorder %s35, %s51
      %p53 = scmp.eq.s32.totalorder %s27, 0
      %p54 = por %p52, %p53
      %s56 = sadd.s32 %s55, 1
      %p59 = scmp.eq.s32.totalorder %s21, 1
      %p60 = scmp.ne.s32.totalorder %s55, %s57
      %p61 = scmp.eq.s32.totalorder %s21, 0
      %p62 = por %p60, %p61
      %p63 = scmp.ne.s32.totalorder %s55, %s57
      %p64 = scmp.eq.s32.totalorder %s26, 1
      %p65 = por %p63, %p64
      %p66 = scmp.ne.s32.totalorder %s57, %s58
      %p67 = scmp.eq.s32.totalorder %s26, 0
      %p68 = por %p66, %p67
      %p69 = scmp.ne.s32.totalorder %s57, %s58
      %p70 = scmp.eq.s32.totalorder %s27, 1
      %p71 = por %p69, %p70
      %p73 = scmp.ne.s32.totalorder %s58, %s72
      %p74 = scmp.eq.s32.totalorder %s27, 0
      %p75 = por %p73, %p74
      %s77 = sadd.s32 %s76, 1
      %p80 = scmp.eq.s32.totalorder %s21, 1
      %p81 = scmp.ne.s32.totalorder %s76, %s78
      %p82 = scmp.eq.s32.totalorder %s21, 0
      %p83 = por %p81, %p82
      %p84 = scmp.ne.s32.totalorder %s76, %s78
      %p85 = scmp.eq.s32.totalorder %s26, 1
      %p86 = por %p84, %p85
      %p87 = scmp.ne.s32.totalorder %s78, %s79
      %p88 = scmp.eq.s32.totalorder %s26, 0
      %p89 = por %p87, %p88
      %p90 = scmp.ne.s32.totalorder %s78, %s79
      %p91 = scmp.eq.s32.totalorder %s27, 1
      %p92 = por %p90, %p91
      %p94 = scmp.ne.s32.totalorder %s79, %s93
      %p95 = scmp.eq.s32.totalorder %s27, 0
      %p96 = por %p94, %p95
      %s98 = sadd.s32 %s97, 1
      %p101 = scmp.eq.s32.totalorder %s21, 1
      %p102 = scmp.ne.s32.totalorder %s97, %s99
      %p103 = scmp.eq.s32.totalorder %s21, 0
      %p104 = por %p102, %p103
      %p105 = scmp.ne.s32.totalorder %s97, %s99
      %p106 = scmp.eq.s32.totalorder %s26, 1
      %p107 = por %p105, %p106
      %p108 = scmp.ne.s32.totalorder %s99, %s100
      %p109 = scmp.eq.s32.totalorder %s26, 0
      %p110 = por %p108, %p109
      %p111 = scmp.ne.s32.totalorder %s99, %s100
      %p112 = scmp.eq.s32.totalorder %s27, 1
      %p113 = por %p111, %p112
      %p115 = scmp.ne.s32.totalorder %s100, %s114
      %p116 = scmp.eq.s32.totalorder %s27, 0
      %p117 = por %p115, %p116
      %s119 = sadd.s32 %s118, 1
      %p122 = scmp.eq.s32.totalorder %s21, 1
      %p123 = scmp.ne.s32.totalorder %s118, %s120
      %p124 = scmp.eq.s32.totalorder %s21, 0
      %p125 = por %p123, %p124
      %p126 = scmp.ne.s32.totalorder %s118, %s120
      %p127 = scmp.eq.s32.totalorder %s26, 1
      %p128 = por %p126, %p127
      %p129 = scmp.ne.s32.totalorder %s120, %s121
      %p130 = scmp.eq.s32.totalorder %s26, 0
      %p131 = por %p129, %p130
      %p132 = scmp.ne.s32.totalorder %s120, %s121
      %p133 = scmp.eq.s32.totalorder %s27, 1
      %p134 = por %p132, %p133
      %p136 = scmp.ne.s32.totalorder %s121, %s135
      %p137 = scmp.eq.s32.totalorder %s27, 0
      %p138 = por %p136, %p137
      %s140 = sadd.s32 %s139, 1
      %p143 = scmp.eq.s32.totalorder %s21, 1
      %p144 = scmp.ne.s32.totalorder %s139, %s141
      %p145 = scmp.eq.s32.totalorder %s21, 0
      %p146 = por %p144, %p145
      %p147 = scmp.ne.s32.totalorder %s139, %s141
      %p148 = scmp.eq.s32.totalorder %s26, 1
      %p149 = por %p147, %p148
      %p150 = scmp.ne.s32.totalorder %s141, %s142
      %p151 = scmp.eq.s32.totalorder %s26, 0
      %p152 = por %p150, %p151
      %p153 = scmp.ne.s32.totalorder %s141, %s142
      %p154 = scmp.eq.s32.totalorder %s27, 1
      %p155 = por %p153, %p154
      %p157 = scmp.ne.s32.totalorder %s142, %s156
      %p158 = scmp.eq.s32.totalorder %s27, 0
      %p159 = por %p157, %p158
      %s161 = sadd.s32 %s160, 1
      %p164 = scmp.eq.s32.totalorder %s21, 1
      %p165 = scmp.ne.s32.totalorder %s160, %s162
      %p166 = scmp.eq.s32.totalorder %s21, 0
      %p167 = por %p165, %p166
      %p168 = scmp.ne.s32.totalorder %s160, %s162
      %p169 = scmp.eq.s32.totalorder %s26, 1
      %p170 = por %p168, %p169
      %p171 = scmp.ne.s32.totalorder %s162, %s163
      %p172 = scmp.eq.s32.totalorder %s26, 0
      %p173 = por %p171, %p172
      %p174 = scmp.ne.s32.totalorder %s162, %s163
      %p175 = scmp.eq.s32.totalorder %s27, 1
      %p176 = por %p174, %p175
      %p178 = scmp.ne.s32.totalorder %s163, %s177
      %p179 = scmp.eq.s32.totalorder %s27, 0
      %p180 = por %p178, %p179
      %s181 = ssub.s32 %s21, %s28
      %p182 = scmp.eq.s32.totalorder %s181, 0
      %s184 = sadd.s32 %s183, 1
      %s185 = scalar_select %p182, %s183, %s184
      %p188 = pneg %p182
      %p189 = scmp.eq.s32.totalorder %s21, 1
      %p190 = por %p188, %p189
      %p191 = scmp.ne.s32.totalorder %s183, %s186
      %p192 = scmp.eq.s32.totalorder %s21, 0
      %p193 = por %p191, %p192
      %p194 = scmp.ne.s32.totalorder %s183, %s186
      %p195 = scmp.eq.s32.totalorder %s26, 1
      %p196 = por %p194, %p195
      %p197 = scmp.ne.s32.totalorder %s186, %s187
      %p198 = scmp.eq.s32.totalorder %s26, 0
      %p199 = por %p197, %p198
      %p200 = scmp.ne.s32.totalorder %s186, %s187
      %p201 = scmp.eq.s32.totalorder %s27, 1
      %p202 = por %p200, %p201
      %p204 = scmp.ne.s32.totalorder %s187, %s203
      %p205 = scmp.eq.s32.totalorder %s27, 0
      %p206 = por %p204, %p205
      %p207 = scmp.le.s32.totalorder 1, %s21
      %p208 = scmp.lt.s32.totalorder %s21, 3
      %p209 = pnand %p207, %p208
      %p210 = pneg %p209
      // Predicated region
      $region9: #{tpu_custom_call.1} parent=5 // pred_check
        _
      $region10: #{tpu_custom_call.1} parent=5 // pred_check_branch
        %212 = sbr.rel (%p209) target = $region12
      $region11: #{tpu_custom_call.1} parent=5 // pred_region
        %s213 = ssub.s32 %s21, 1
        // Predicated region
        $region13: #{tpu_custom_call.1} parent=11 // pred_check
          %p214 = pneg %p68
        $region14: #{tpu_custom_call.1} parent=11 // pred_check_branch
          %216 = sbr.rel (%p214) target = $region16
        $region15: #{tpu_custom_call.1} parent=11 // pred_region
          %s218 = ssub.s32 512, 512
          %219 = vsyncadd [#allocation8], %s218
          %s220 = sshll.u32 [#allocation7], 4
          %s221 = int_to_ptr.vmem [resolvable:$true] %s220
          %226 = dma.hbm_to_vmem [thread:$0]  %s1, 512, %s221, [#allocation8], 128, 128, 8
        $region16: #{tpu_custom_call.1} parent=11 // pred_fallthru
          _
        // Predicated region
        $region17: #{tpu_custom_call.1} parent=11 // pred_check
          %p227 = pneg %p89
        $region18: #{tpu_custom_call.1} parent=11 // pred_check_branch
          %229 = sbr.rel (%p227) target = $region20
        $region19: #{tpu_custom_call.1} parent=11 // pred_region
          _
        $region20: #{tpu_custom_call.1} parent=11 // pred_fallthru
          _
        // Predicated region
        $region21: #{tpu_custom_call.1} parent=11 // pred_check
          %p230 = pneg %p110
        $region22: #{tpu_custom_call.1} parent=11 // pred_check_branch
          %232 = sbr.rel (%p230) target = $region24
        $region23: #{tpu_custom_call.1} parent=11 // pred_region
          %s234 = ssub.s32 512, 512
          %235 = vsyncadd [#allocation8], %s234
          %s236 = sshll.u32 [#allocation9], 4
          %s237 = int_to_ptr.vmem [resolvable:$true] %s236
          %242 = dma.hbm_to_vmem [thread:$0]  %s3, 512, %s237, [#allocation8], 128, 128, 8
        $region24: #{tpu_custom_call.1} parent=11 // pred_fallthru
          _
        // Predicated region
        $region25: #{tpu_custom_call.1} parent=11 // pred_check
          %p243 = pneg %p131
        $region26: #{tpu_custom_call.1} parent=11 // pred_check_branch
          %245 = sbr.rel (%p243) target = $region28
        $region27: #{tpu_custom_call.1} parent=11 // pred_region
          _
        $region28: #{tpu_custom_call.1} parent=11 // pred_fallthru
          _
        // Predicated region
        $region29: #{tpu_custom_call.1} parent=11 // pred_check
          %p246 = pneg %p152
        $region30: #{tpu_custom_call.1} parent=11 // pred_check_branch
          %248 = sbr.rel (%p246) target = $region32
        $region31: #{tpu_custom_call.1} parent=11 // pred_region
          %s250 = ssub.s32 512, 512
          %251 = vsyncadd [#allocation11], %s250
          %s252 = sshll.u32 [#allocation10], 4
          %s253 = int_to_ptr.vmem [resolvable:$true] %s252
          %258 = dma.hbm_to_vmem [thread:$0]  %s5, 512, %s253, [#allocation11], 128, 128, 8
        $region32: #{tpu_custom_call.1} parent=11 // pred_fallthru
          _
        // Predicated region
        $region33: #{tpu_custom_call.1} parent=11 // pred_check
          %p259 = pneg %p173
        $region34: #{tpu_custom_call.1} parent=11 // pred_check_branch
          %261 = sbr.rel (%p259) target = $region36
        $region35: #{tpu_custom_call.1} parent=11 // pred_region
          %s263 = ssub.s32 512, 512
          %264 = vsyncadd [#allocation11], %s263
          %s265 = sshll.u32 [#allocation12], 4
          %s266 = int_to_ptr.vmem [resolvable:$true] %s265
          %271 = dma.hbm_to_vmem [thread:$0]  %s6, 512, %s266, [#allocation11], 128, 128, 8
        $region36: #{tpu_custom_call.1} parent=11 // pred_fallthru
          _
      $region12: #{tpu_custom_call.1} parent=5 // pred_fallthru
        _
      %p272 = scmp.lt.s32.totalorder %s21, 2
      // Predicated region
      $region37: #{tpu_custom_call.1} parent=5 // pred_check
        %p273 = pneg %p272
      $region38: #{tpu_custom_call.1} parent=5 // pred_check_branch
        %275 = sbr.rel (%p273) target = $region40
      $region39: #{tpu_custom_call.1} parent=5 // pred_region
        // Predicated region
        $region41: #{tpu_custom_call.1} parent=39 // pred_check
          %p276 = pneg %p41
        $region42: #{tpu_custom_call.1} parent=39 // pred_check_branch
          %278 = sbr.rel (%p276) target = $region44
        $region43: #{tpu_custom_call.1} parent=39 // pred_region
          %s279 = sand.u32 %s31, 1
          %s280 = scalar_lea.sflag [#allocation5], %s279
          %s281 = sand.u32 %s31, 1
          %s282 = smul.addr %s281, 8
          %s283 = scalar_lea.vmem [#allocation4], %s282
          %s285 = ssub.s32 128, 128
          %286 = vsyncadd %s280, %s285
          %s287 = smul.addr %s21, 128
          %s288 = scalar_lea.hbm %s0, %s287
          %s290 = sshll.u32 %s283, 4
          %s291 = int_to_ptr.vmem [resolvable:$true] %s290
          %293 = dma.hbm_to_vmem [thread:$0]  %s288, 128, %s291, %s280
        $region44: #{tpu_custom_call.1} parent=39 // pred_fallthru
          _
      $region40: #{tpu_custom_call.1} parent=5 // pred_fallthru
        _
      %p294 = scmp.le.s32.totalorder 1, %s21
      %p295 = scmp.lt.s32.totalorder %s21, 3
      %p296 = pnand %p294, %p295
      %p297 = pneg %p296
      // Predicated region
      $region45: #{tpu_custom_call.1} parent=5 // pred_check
        _
      $region46: #{tpu_custom_call.1} parent=5 // pred_check_branch
        %299 = sbr.rel (%p296) target = $region48
      $region47: #{tpu_custom_call.1} parent=5 // pred_region
        %s300 = ssub.s32 %s21, 1
        %s301 = sand.u32 %s34, 1
        %s302 = scalar_lea.sflag [#allocation5], %s301
        %s303 = sand.u32 %s34, 1
        %s304 = smul.addr %s303, 8
        %s305 = scalar_lea.vmem [#allocation4], %s304
        // Predicated region
        $region49: #{tpu_custom_call.1} parent=47 // pred_check
          %p306 = pneg %p47
        $region50: #{tpu_custom_call.1} parent=47 // pred_check_branch
          %308 = sbr.rel (%p306) target = $region52
        $region51: #{tpu_custom_call.1} parent=47 // pred_region
          %309 = dma.done %s302, 128
        $region52: #{tpu_custom_call.1} parent=47 // pred_fallthru
          _
        // Predicated region
        $region53: #{tpu_custom_call.1} parent=47 // pred_check
          %p310 = pneg %p68
        $region54: #{tpu_custom_call.1} parent=47 // pred_check_branch
          %312 = sbr.rel (%p310) target = $region56
        $region55: #{tpu_custom_call.1} parent=47 // pred_region
          %313 = dma.done [#allocation8], 512
        $region56: #{tpu_custom_call.1} parent=47 // pred_fallthru
          _
        // Predicated region
        $region57: #{tpu_custom_call.1} parent=47 // pred_check
          %p314 = pneg %p110
        $region58: #{tpu_custom_call.1} parent=47 // pred_check_branch
          %316 = sbr.rel (%p314) target = $region60
        $region59: #{tpu_custom_call.1} parent=47 // pred_region
          %317 = dma.done [#allocation8], 512
        $region60: #{tpu_custom_call.1} parent=47 // pred_fallthru
          _
        // Predicated region
        $region61: #{tpu_custom_call.1} parent=47 // pred_check
          %p318 = pneg %p152
        $region62: #{tpu_custom_call.1} parent=47 // pred_check_branch
          %320 = sbr.rel (%p318) target = $region64
        $region63: #{tpu_custom_call.1} parent=47 // pred_region
          %321 = dma.done [#allocation11], 512
        $region64: #{tpu_custom_call.1} parent=47 // pred_fallthru
          _
        // Predicated region
        $region65: #{tpu_custom_call.1} parent=47 // pred_check
          %p322 = pneg %p173
        $region66: #{tpu_custom_call.1} parent=47 // pred_check_branch
          %324 = sbr.rel (%p322) target = $region68
        $region67: #{tpu_custom_call.1} parent=47 // pred_region
          %325 = dma.done [#allocation11], 512
        $region68: #{tpu_custom_call.1} parent=47 // pred_fallthru
          _
        %s326 = sand.u32 %s34, 1
        %s327 = scalar_lea.sflag [#allocation5], %s326
        %s328 = sand.u32 %s34, 1
        %s329 = smul.addr %s328, 8
        %s330 = scalar_lea.vmem [#allocation4], %s329
        %p331 = pneg %p47
        %p332 = pneg %p44
        %p333 = pneg %p68
        %p334 = pneg %p65
        %p335 = pneg %p89
        %p336 = pneg %p86
        %p337 = pneg %p110
        %p338 = pneg %p107
        %p339 = pneg %p131
        %p340 = pneg %p128
        %p341 = pneg %p152
        %p342 = pneg %p149
        %p343 = pneg %p173
        %p344 = pneg %p170
        %p345 = pneg %p199
        %p346 = pneg %p196
        %s347 = sand.u32 %s186, 1
        %s348 = scalar_lea.sflag [#allocation6], %s347
        %s349 = sand.u32 %s186, 1
        %s350 = smul.addr %s349, 8
        %s351 = scalar_lea.vmem [#allocation13], %s350
        %v352 = vld [vmem:[%s305] sm:$0xff]
        %v353 = vld [vmem:[#allocation7] sm:$0xff]
        %v354 = vld [vmem:[#allocation7 + $0x8] sm:$0xff]
        %v355 = vld [vmem:[#allocation7 + $0x10] sm:$0xff]
        %v356 = vld [vmem:[#allocation7 + $0x18] sm:$0xff]
        %v357 = vld [vmem:[%s2] sm:$0x1]
        %v359 = vlaneseq
        %v360 = vshrl.u32 %v359, 7
        %v361 = vsub.s32 0, %v360
        %v362 = vrot.slane %v357, %v361
        %vm364 = vcmask 261120
        %v366 = vsel %vm364, %v352, 0
        %368 = vmatprep.subr.mxu0 0.0
        %369 = vmatpush1.msra.mxu0 0.0
        %370 = vmatprep.subr.mxu0 0.0
        %371 = vmatpush1.msra.mxu0 0.0
        %372 = vmatprep.subr.mxu0 0.0
        %373 = vmatpush1.msra.mxu0 0.0
        %374 = vmatprep.subr.mxu0 0.0
        %375 = vmatpush1.msra.mxu0 0.0
        %376 = vmatprep.subr.mxu0 0.0
        %377 = vmatpush1.msra.mxu0 0.0
        %378 = vmatprep.subr.mxu0 0.0
        %379 = vmatpush1.msra.mxu0 0.0
        %380 = vmatprep.subr.mxu0 0.0
        %381 = vmatpush1.msra.mxu0 0.0
        %382 = vmatprep.subr.mxu0 0.0
        %383 = vmatpush1.msra.mxu0 0.0
        %384 = vmatprep.subr.mxu0 0.0
        %385 = vmatpush1.msra.mxu0 0.0
        %386 = vmatprep.subr.mxu0 0.0
        %387 = vmatpush1.msra.mxu0 0.0
        %388 = vmatprep.subr.mxu0 0.0
        %389 = vmatpush1.msra.mxu0 0.0
        %390 = vmatprep.subr.mxu0 0.0
        %391 = vmatpush1.msra.mxu0 0.0
        %392 = vmatprep.subr.mxu0 0.0
        %393 = vmatpush1.msra.mxu0 %v356
        %394 = vmatprep.subr.mxu0 0.0
        %395 = vmatpush1.msra.mxu0 %v355
        %396 = vmatprep.subr.mxu0 0.0
        %397 = vmatpush1.msra.mxu0 %v354
        %398 = vmatprep.subr.mxu0 0.0
        %399 = vmatpush1.msra.mxu0 %v353
        %400 = vmatprep.subr.mxu0 0.0
        %401 = vmatpush2.msra.mxu0 0.0
        %402 = vmatprep.subr.mxu0 0.0
        %403 = vmatpush2.msra.mxu0 0.0
        %404 = vmatprep.subr.mxu0 0.0
        %405 = vmatpush2.msra.mxu0 0.0
        %406 = vmatprep.subr.mxu0 0.0
        %407 = vmatpush2.msra.mxu0 0.0
        %408 = vmatprep.subr.mxu0 0.0
        %409 = vmatpush2.msra.mxu0 0.0
        %410 = vmatprep.subr.mxu0 0.0
        %411 = vmatpush2.msra.mxu0 0.0
        %412 = vmatprep.subr.mxu0 0.0
        %413 = vmatpush2.msra.mxu0 0.0
        %414 = vmatprep.subr.mxu0 0.0
        %415 = vmatpush2.msra.mxu0 0.0
        %416 = vmatprep.subr.mxu0 0.0
        %417 = vmatpush2.msra.mxu0 0.0
        %418 = vmatprep.subr.mxu0 0.0
        %419 = vmatpush2.msra.mxu0 0.0
        %420 = vmatprep.subr.mxu0 0.0
        %421 = vmatpush2.msra.mxu0 0.0
        %422 = vmatprep.subr.mxu0 0.0
        %423 = vmatpush2.msra.mxu0 0.0
        %424 = vmatprep.subr.mxu0 0.0
        %425 = vmatpush2.msra.mxu0 0.0
        %426 = vmatprep.subr.mxu0 0.0
        %427 = vmatpush2.msra.mxu0 0.0
        %428 = vmatprep.subr.mxu0 0.0
        %429 = vmatpush2.msra.mxu0 0.0
        %430 = vmatprep.subr.mxu0 0.0
        %431 = vmatpush2.msra.mxu0 0.0
        %432 = vmatprep.mubr.f32.mxu0 0.0
        %433 = vmatmul.mubr.f32.gmra.mxu0 %v366
        %v434 = vpop.f32.mrf.mxu0
        %v435 = vadd.f32 %v362, %v434
        %v436 = vpop.f32.mrf.mxu0
        %437 = vdwg.mxu0
        %vm438 = vcmask 785408
        %439 = vst.msk [vmem:[#allocation2] sm:$0xff] %vm438, %v435
        %v440 = vld [vmem:[#allocation2] sm:$0xff]
        %442 = vrot.lane.b32.xlu0 %v440, 96
        %v443 = vpop.permute.xlu0 %442
        %vm444 = vcmask 64512
        %v445 = vsel %vm444, %v440, 0
        %v447 = vsel %vm444, %v443, 0
        %449 = vmatprep.subr.mxu0 0.0
        %450 = vmatpush1.xpose.msra.mxu0 0.0
        %451 = vmatprep.subr.mxu0 0.0
        %452 = vmatpush1.xpose.msra.mxu0 0.0
        %453 = vmatprep.subr.mxu0 0.0
        %454 = vmatpush1.xpose.msra.mxu0 0.0
        %455 = vmatprep.subr.mxu0 0.0
        %456 = vmatpush1.xpose.msra.mxu0 0.0
        %457 = vmatprep.subr.mxu0 0.0
        %458 = vmatpush1.xpose.msra.mxu0 0.0
        %459 = vmatprep.subr.mxu0 0.0
        %460 = vmatpush1.xpose.msra.mxu0 0.0
        %461 = vmatprep.subr.mxu0 0.0
        %462 = vmatpush1.xpose.msra.mxu0 0.0
        %463 = vmatprep.subr.mxu0 0.0
        %464 = vmatpush1.xpose.msra.mxu0 0.0
        %465 = vmatprep.subr.mxu0 0.0
        %466 = vmatpush1.xpose.msra.mxu0 0.0
        %467 = vmatprep.subr.mxu0 0.0
        %468 = vmatpush1.xpose.msra.mxu0 0.0
        %469 = vmatprep.subr.mxu0 0.0
        %470 = vmatpush1.xpose.msra.mxu0 0.0
        %471 = vmatprep.subr.mxu0 0.0
        %472 = vmatpush1.xpose.msra.mxu0 0.0
        %473 = vmatprep.subr.mxu0 0.0
        %474 = vmatpush1.xpose.msra.mxu0 0.0
        %475 = vmatprep.subr.mxu0 0.0
        %476 = vmatpush1.xpose.msra.mxu0 0.0
        %477 = vmatprep.subr.mxu0 0.0
        %478 = vmatpush1.xpose.msra.mxu0 0.0
        %479 = vmatprep.subr.mxu0 0.0
        %480 = vmatpush1.xpose.msra.mxu0 %v447
        %481 = vmatprep.subr.mxu0 0.0
        %482 = vmatpush2.xpose.msra.mxu0 0.0
        %483 = vmatprep.subr.mxu0 0.0
        %484 = vmatpush2.xpose.msra.mxu0 0.0
        %485 = vmatprep.subr.mxu0 0.0
        %486 = vmatpush2.xpose.msra.mxu0 0.0
        %487 = vmatprep.subr.mxu0 0.0
        %488 = vmatpush2.xpose.msra.mxu0 0.0
        %489 = vmatprep.subr.mxu0 0.0
        %490 = vmatpush2.xpose.msra.mxu0 0.0
        %491 = vmatprep.subr.mxu0 0.0
        %492 = vmatpush2.xpose.msra.mxu0 0.0
        %493 = vmatprep.subr.mxu0 0.0
        %494 = vmatpush2.xpose.msra.mxu0 0.0
        %495 = vmatprep.subr.mxu0 0.0
        %496 = vmatpush2.xpose.msra.mxu0 0.0
        %497 = vmatprep.subr.mxu0 0.0
        %498 = vmatpush2.xpose.msra.mxu0 0.0
        %499 = vmatprep.subr.mxu0 0.0
        %500 = vmatpush2.xpose.msra.mxu0 0.0
        %501 = vmatprep.subr.mxu0 0.0
        %502 = vmatpush2.xpose.msra.mxu0 0.0
        %503 = vmatprep.subr.mxu0 0.0
        %504 = vmatpush2.xpose.msra.mxu0 0.0
        %505 = vmatprep.subr.mxu0 0.0
        %506 = vmatpush2.xpose.msra.mxu0 0.0
        %507 = vmatprep.subr.mxu0 0.0
        %508 = vmatpush2.xpose.msra.mxu0 0.0
        %509 = vmatprep.subr.mxu0 0.0
        %510 = vmatpush2.xpose.msra.mxu0 0.0
        %511 = vmatprep.subr.mxu0 0.0
        %512 = vmatpush2.xpose.msra.mxu0 0.0
        %513 = vmatprep.mubr.f32.mxu0 0.0
        %514 = vmatmul.mubr.f32.gmra.mxu0 %v445
        %v515 = vpop.f32.mrf.mxu0
        %v516 = vadd.f32 0.0, %v515
        %v517 = vpop.f32.mrf.mxu0
        %518 = vdwg.mxu0
        %v519 = vsel %vm444, %v516, -inf
        %520 = vmax.xlane.f32.xlu0 %v519
        %v521 = vpop.xlane.xlu0 %520
        %v522 = vsub.f32 %v516, %v521
        %v523 = vmul.f32 %v522, 1.442695
        %v524 = vpow.pop %v523
        %v525 = vsel %vm444, %v524, 0.0
        %526 = vadd.xlane.f32.xlu0 %v525
        %v527 = vpop.xlane.xlu0 %526
        %v528 = vrcp.pop %v527
        %v529 = vmul.f32 %v524, %v528
        %530 = vrot.lane.b32.xlu0 %v440, 64
        %v531 = vpop.permute.xlu0 %530
        %v534 = vsel %vm444, %v529, 0
        %536 = vmatprep.subr.mxu0 0.0
        %537 = vmatpush1.msra.mxu0 0.0
        %538 = vmatprep.subr.mxu0 0.0
        %539 = vmatpush1.msra.mxu0 0.0
        %540 = vmatprep.subr.mxu0 0.0
        %541 = vmatpush1.msra.mxu0 0.0
        %542 = vmatprep.subr.mxu0 0.0
        %543 = vmatpush1.msra.mxu0 0.0
        %544 = vmatprep.subr.mxu0 0.0
        %545 = vmatpush1.msra.mxu0 0.0
        %546 = vmatprep.subr.mxu0 0.0
        %547 = vmatpush1.msra.mxu0 0.0
        %548 = vmatprep.subr.mxu0 0.0
        %549 = vmatpush1.msra.mxu0 0.0
        %550 = vmatprep.subr.mxu0 0.0
        %551 = vmatpush1.msra.mxu0 0.0
        %552 = vmatprep.subr.mxu0 0.0
        %553 = vmatpush1.msra.mxu0 0.0
        %554 = vmatprep.subr.mxu0 0.0
        %555 = vmatpush1.msra.mxu0 0.0
        %556 = vmatprep.subr.mxu0 0.0
        %557 = vmatpush1.msra.mxu0 0.0
        %558 = vmatprep.subr.mxu0 0.0
        %559 = vmatpush1.msra.mxu0 0.0
        %560 = vmatprep.subr.mxu0 0.0
        %561 = vmatpush1.msra.mxu0 0.0
        %562 = vmatprep.subr.mxu0 0.0
        %563 = vmatpush1.msra.mxu0 0.0
        %564 = vmatprep.subr.mxu0 0.0
        %565 = vmatpush1.msra.mxu0 0.0
        %566 = vmatprep.subr.mxu0 0.0
        %567 = vmatpush1.msra.mxu0 %v531
        %568 = vmatprep.subr.mxu0 0.0
        %569 = vmatpush2.msra.mxu0 0.0
        %570 = vmatprep.subr.mxu0 0.0
        %571 = vmatpush2.msra.mxu0 0.0
        %572 = vmatprep.subr.mxu0 0.0
        %573 = vmatpush2.msra.mxu0 0.0
        %574 = vmatprep.subr.mxu0 0.0
        %575 = vmatpush2.msra.mxu0 0.0
        %576 = vmatprep.subr.mxu0 0.0
        %577 = vmatpush2.msra.mxu0 0.0
        %578 = vmatprep.subr.mxu0 0.0
        %579 = vmatpush2.msra.mxu0 0.0
        %580 = vmatprep.subr.mxu0 0.0
        %581 = vmatpush2.msra.mxu0 0.0
        %582 = vmatprep.subr.mxu0 0.0
        %583 = vmatpush2.msra.mxu0 0.0
        %584 = vmatprep.subr.mxu0 0.0
        %585 = vmatpush2.msra.mxu0 0.0
        %586 = vmatprep.subr.mxu0 0.0
        %587 = vmatpush2.msra.mxu0 0.0
        %588 = vmatprep.subr.mxu0 0.0
        %589 = vmatpush2.msra.mxu0 0.0
        %590 = vmatprep.subr.mxu0 0.0
        %591 = vmatpush2.msra.mxu0 0.0
        %592 = vmatprep.subr.mxu0 0.0
        %593 = vmatpush2.msra.mxu0 0.0
        %594 = vmatprep.subr.mxu0 0.0
        %595 = vmatpush2.msra.mxu0 0.0
        %596 = vmatprep.subr.mxu0 0.0
        %597 = vmatpush2.msra.mxu0 0.0
        %598 = vmatprep.subr.mxu0 0.0
        %599 = vmatpush2.msra.mxu0 0.0
        %600 = vmatprep.mubr.f32.mxu0 0.0
        %601 = vmatmul.mubr.f32.gmra.mxu0 %v534
        %v602 = vpop.f32.mrf.mxu0
        %v603 = vadd.f32 0.0, %v602
        %v604 = vpop.f32.mrf.mxu0
        %605 = vdwg.mxu0
        %606 = vrot.lane.b32.xlu0 %v440, 120
        %v607 = vpop.permute.xlu0 %606
        %608 = vrot.lane.b32.xlu0 %v440, 88
        %v609 = vpop.permute.xlu0 %608
        %v610 = vsel %vm444, %v607, 0
        %v612 = vsel %vm444, %v609, 0
        %614 = vmatprep.subr.mxu0 0.0
        %615 = vmatpush1.xpose.msra.mxu0 0.0
        %616 = vmatprep.subr.mxu0 0.0
        %617 = vmatpush1.xpose.msra.mxu0 0.0
        %618 = vmatprep.subr.mxu0 0.0
        %619 = vmatpush1.xpose.msra.mxu0 0.0
        %620 = vmatprep.subr.mxu0 0.0
        %621 = vmatpush1.xpose.msra.mxu0 0.0
        %622 = vmatprep.subr.mxu0 0.0
        %623 = vmatpush1.xpose.msra.mxu0 0.0
        %624 = vmatprep.subr.mxu0 0.0
        %625 = vmatpush1.xpose.msra.mxu0 0.0
        %626 = vmatprep.subr.mxu0 0.0
        %627 = vmatpush1.xpose.msra.mxu0 0.0
        %628 = vmatprep.subr.mxu0 0.0
        %629 = vmatpush1.xpose.msra.mxu0 0.0
        %630 = vmatprep.subr.mxu0 0.0
        %631 = vmatpush1.xpose.msra.mxu0 0.0
        %632 = vmatprep.subr.mxu0 0.0
        %633 = vmatpush1.xpose.msra.mxu0 0.0
        %634 = vmatprep.subr.mxu0 0.0
        %635 = vmatpush1.xpose.msra.mxu0 0.0
        %636 = vmatprep.subr.mxu0 0.0
        %637 = vmatpush1.xpose.msra.mxu0 0.0
        %638 = vmatprep.subr.mxu0 0.0
        %639 = vmatpush1.xpose.msra.mxu0 0.0
        %640 = vmatprep.subr.mxu0 0.0
        %641 = vmatpush1.xpose.msra.mxu0 0.0
        %642 = vmatprep.subr.mxu0 0.0
        %643 = vmatpush1.xpose.msra.mxu0 0.0
        %644 = vmatprep.subr.mxu0 0.0
        %645 = vmatpush1.xpose.msra.mxu0 %v612
        %646 = vmatprep.subr.mxu0 0.0
        %647 = vmatpush2.xpose.msra.mxu0 0.0
        %648 = vmatprep.subr.mxu0 0.0
        %649 = vmatpush2.xpose.msra.mxu0 0.0
        %650 = vmatprep.subr.mxu0 0.0
        %651 = vmatpush2.xpose.msra.mxu0 0.0
        %652 = vmatprep.subr.mxu0 0.0
        %653 = vmatpush2.xpose.msra.mxu0 0.0
        %654 = vmatprep.subr.mxu0 0.0
        %655 = vmatpush2.xpose.msra.mxu0 0.0
        %656 = vmatprep.subr.mxu0 0.0
        %657 = vmatpush2.xpose.msra.mxu0 0.0
        %658 = vmatprep.subr.mxu0 0.0
        %659 = vmatpush2.xpose.msra.mxu0 0.0
        %660 = vmatprep.subr.mxu0 0.0
        %661 = vmatpush2.xpose.msra.mxu0 0.0
        %662 = vmatprep.subr.mxu0 0.0
        %663 = vmatpush2.xpose.msra.mxu0 0.0
        %664 = vmatprep.subr.mxu0 0.0
        %665 = vmatpush2.xpose.msra.mxu0 0.0
        %666 = vmatprep.subr.mxu0 0.0
        %667 = vmatpush2.xpose.msra.mxu0 0.0
        %668 = vmatprep.subr.mxu0 0.0
        %669 = vmatpush2.xpose.msra.mxu0 0.0
        %670 = vmatprep.subr.mxu0 0.0
        %671 = vmatpush2.xpose.msra.mxu0 0.0
        %672 = vmatprep.subr.mxu0 0.0
        %673 = vmatpush2.xpose.msra.mxu0 0.0
        %674 = vmatprep.subr.mxu0 0.0
        %675 = vmatpush2.xpose.msra.mxu0 0.0
        %676 = vmatprep.subr.mxu0 0.0
        %677 = vmatpush2.xpose.msra.mxu0 0.0
        %678 = vmatprep.mubr.f32.mxu0 0.0
        %679 = vmatmul.mubr.f32.gmra.mxu0 %v610
        %v680 = vpop.f32.mrf.mxu0
        %v681 = vadd.f32 0.0, %v680
        %v682 = vpop.f32.mrf.mxu0
        %683 = vdwg.mxu0
        %v684 = vsel %vm444, %v681, -inf
        %685 = vmax.xlane.f32.xlu0 %v684
        %v686 = vpop.xlane.xlu0 %685
        %v687 = vsub.f32 %v681, %v686
        %v688 = vmul.f32 %v687, 1.442695
        %v689 = vpow.pop %v688
        %v690 = vsel %vm444, %v689, 0.0
        %691 = vadd.xlane.f32.xlu0 %v690
        %v692 = vpop.xlane.xlu0 %691
        %v693 = vrcp.pop %v692
        %v694 = vmul.f32 %v689, %v693
        %695 = vrot.lane.b32.xlu0 %v440, 56
        %v696 = vpop.permute.xlu0 %695
        %v699 = vsel %vm444, %v694, 0
        %701 = vmatprep.subr.mxu0 0.0
        %702 = vmatpush1.msra.mxu0 0.0
        %703 = vmatprep.subr.mxu0 0.0
        %704 = vmatpush1.msra.mxu0 0.0
        %705 = vmatprep.subr.mxu0 0.0
        %706 = vmatpush1.msra.mxu0 0.0
        %707 = vmatprep.subr.mxu0 0.0
        %708 = vmatpush1.msra.mxu0 0.0
        %709 = vmatprep.subr.mxu0 0.0
        %710 = vmatpush1.msra.mxu0 0.0
        %711 = vmatprep.subr.mxu0 0.0
        %712 = vmatpush1.msra.mxu0 0.0
        %713 = vmatprep.subr.mxu0 0.0
        %714 = vmatpush1.msra.mxu0 0.0
        %715 = vmatprep.subr.mxu0 0.0
        %716 = vmatpush1.msra.mxu0 0.0
        %717 = vmatprep.subr.mxu0 0.0
        %718 = vmatpush1.msra.mxu0 0.0
        %719 = vmatprep.subr.mxu0 0.0
        %720 = vmatpush1.msra.mxu0 0.0
        %721 = vmatprep.subr.mxu0 0.0
        %722 = vmatpush1.msra.mxu0 0.0
        %723 = vmatprep.subr.mxu0 0.0
        %724 = vmatpush1.msra.mxu0 0.0
        %725 = vmatprep.subr.mxu0 0.0
        %726 = vmatpush1.msra.mxu0 0.0
        %727 = vmatprep.subr.mxu0 0.0
        %728 = vmatpush1.msra.mxu0 0.0
        %729 = vmatprep.subr.mxu0 0.0
        %730 = vmatpush1.msra.mxu0 0.0
        %731 = vmatprep.subr.mxu0 0.0
        %732 = vmatpush1.msra.mxu0 %v696
        %733 = vmatprep.subr.mxu0 0.0
        %734 = vmatpush2.msra.mxu0 0.0
        %735 = vmatprep.subr.mxu0 0.0
        %736 = vmatpush2.msra.mxu0 0.0
        %737 = vmatprep.subr.mxu0 0.0
        %738 = vmatpush2.msra.mxu0 0.0
        %739 = vmatprep.subr.mxu0 0.0
        %740 = vmatpush2.msra.mxu0 0.0
        %741 = vmatprep.subr.mxu0 0.0
        %742 = vmatpush2.msra.mxu0 0.0
        %743 = vmatprep.subr.mxu0 0.0
        %744 = vmatpush2.msra.mxu0 0.0
        %745 = vmatprep.subr.mxu0 0.0
        %746 = vmatpush2.msra.mxu0 0.0
        %747 = vmatprep.subr.mxu0 0.0
        %748 = vmatpush2.msra.mxu0 0.0
        %749 = vmatprep.subr.mxu0 0.0
        %750 = vmatpush2.msra.mxu0 0.0
        %751 = vmatprep.subr.mxu0 0.0
        %752 = vmatpush2.msra.mxu0 0.0
        %753 = vmatprep.subr.mxu0 0.0
        %754 = vmatpush2.msra.mxu0 0.0
        %755 = vmatprep.subr.mxu0 0.0
        %756 = vmatpush2.msra.mxu0 0.0
        %757 = vmatprep.subr.mxu0 0.0
        %758 = vmatpush2.msra.mxu0 0.0
        %759 = vmatprep.subr.mxu0 0.0
        %760 = vmatpush2.msra.mxu0 0.0
        %761 = vmatprep.subr.mxu0 0.0
        %762 = vmatpush2.msra.mxu0 0.0
        %763 = vmatprep.subr.mxu0 0.0
        %764 = vmatpush2.msra.mxu0 0.0
        %765 = vmatprep.mubr.f32.mxu0 0.0
        %766 = vmatmul.mubr.f32.gmra.mxu0 %v699
        %v767 = vpop.f32.mrf.mxu0
        %v768 = vadd.f32 0.0, %v767
        %v769 = vpop.f32.mrf.mxu0
        %770 = vdwg.mxu0
        %771 = vrot.lane.b32.xlu0 %v440, 112
        %v772 = vpop.permute.xlu0 %771
        %773 = vrot.lane.b32.xlu0 %v440, 80
        %v774 = vpop.permute.xlu0 %773
        %v775 = vsel %vm444, %v772, 0
        %v777 = vsel %vm444, %v774, 0
        %779 = vmatprep.subr.mxu0 0.0
        %780 = vmatpush1.xpose.msra.mxu0 0.0
        %781 = vmatprep.subr.mxu0 0.0
        %782 = vmatpush1.xpose.msra.mxu0 0.0
        %783 = vmatprep.subr.mxu0 0.0
        %784 = vmatpush1.xpose.msra.mxu0 0.0
        %785 = vmatprep.subr.mxu0 0.0
        %786 = vmatpush1.xpose.msra.mxu0 0.0
        %787 = vmatprep.subr.mxu0 0.0
        %788 = vmatpush1.xpose.msra.mxu0 0.0
        %789 = vmatprep.subr.mxu0 0.0
        %790 = vmatpush1.xpose.msra.mxu0 0.0
        %791 = vmatprep.subr.mxu0 0.0
        %792 = vmatpush1.xpose.msra.mxu0 0.0
        %793 = vmatprep.subr.mxu0 0.0
        %794 = vmatpush1.xpose.msra.mxu0 0.0
        %795 = vmatprep.subr.mxu0 0.0
        %796 = vmatpush1.xpose.msra.mxu0 0.0
        %797 = vmatprep.subr.mxu0 0.0
        %798 = vmatpush1.xpose.msra.mxu0 0.0
        %799 = vmatprep.subr.mxu0 0.0
        %800 = vmatpush1.xpose.msra.mxu0 0.0
        %801 = vmatprep.subr.mxu0 0.0
        %802 = vmatpush1.xpose.msra.mxu0 0.0
        %803 = vmatprep.subr.mxu0 0.0
        %804 = vmatpush1.xpose.msra.mxu0 0.0
        %805 = vmatprep.subr.mxu0 0.0
        %806 = vmatpush1.xpose.msra.mxu0 0.0
        %807 = vmatprep.subr.mxu0 0.0
        %808 = vmatpush1.xpose.msra.mxu0 0.0
        %809 = vmatprep.subr.mxu0 0.0
        %810 = vmatpush1.xpose.msra.mxu0 %v777
        %811 = vmatprep.subr.mxu0 0.0
        %812 = vmatpush2.xpose.msra.mxu0 0.0
        %813 = vmatprep.subr.mxu0 0.0
        %814 = vmatpush2.xpose.msra.mxu0 0.0
        %815 = vmatprep.subr.mxu0 0.0
        %816 = vmatpush2.xpose.msra.mxu0 0.0
        %817 = vmatprep.subr.mxu0 0.0
        %818 = vmatpush2.xpose.msra.mxu0 0.0
        %819 = vmatprep.subr.mxu0 0.0
        %820 = vmatpush2.xpose.msra.mxu0 0.0
        %821 = vmatprep.subr.mxu0 0.0
        %822 = vmatpush2.xpose.msra.mxu0 0.0
        %823 = vmatprep.subr.mxu0 0.0
        %824 = vmatpush2.xpose.msra.mxu0 0.0
        %825 = vmatprep.subr.mxu0 0.0
        %826 = vmatpush2.xpose.msra.mxu0 0.0
        %827 = vmatprep.subr.mxu0 0.0
        %828 = vmatpush2.xpose.msra.mxu0 0.0
        %829 = vmatprep.subr.mxu0 0.0
        %830 = vmatpush2.xpose.msra.mxu0 0.0
        %831 = vmatprep.subr.mxu0 0.0
        %832 = vmatpush2.xpose.msra.mxu0 0.0
        %833 = vmatprep.subr.mxu0 0.0
        %834 = vmatpush2.xpose.msra.mxu0 0.0
        %835 = vmatprep.subr.mxu0 0.0
        %836 = vmatpush2.xpose.msra.mxu0 0.0
        %837 = vmatprep.subr.mxu0 0.0
        %838 = vmatpush2.xpose.msra.mxu0 0.0
        %839 = vmatprep.subr.mxu0 0.0
        %840 = vmatpush2.xpose.msra.mxu0 0.0
        %841 = vmatprep.subr.mxu0 0.0
        %842 = vmatpush2.xpose.msra.mxu0 0.0
        %843 = vmatprep.mubr.f32.mxu0 0.0
        %844 = vmatmul.mubr.f32.gmra.mxu0 %v775
        %v845 = vpop.f32.mrf.mxu0
        %v846 = vadd.f32 0.0, %v845
        %v847 = vpop.f32.mrf.mxu0
        %848 = vdwg.mxu0
        %v849 = vsel %vm444, %v846, -inf
        %850 = vmax.xlane.f32.xlu0 %v849
        %v851 = vpop.xlane.xlu0 %850
        %v852 = vsub.f32 %v846, %v851
        %v853 = vmul.f32 %v852, 1.442695
        %v854 = vpow.pop %v853
        %v855 = vsel %vm444, %v854, 0.0
        %856 = vadd.xlane.f32.xlu0 %v855
        %v857 = vpop.xlane.xlu0 %856
        %v858 = vrcp.pop %v857
        %v859 = vmul.f32 %v854, %v858
        %860 = vrot.lane.b32.xlu0 %v440, 48
        %v861 = vpop.permute.xlu0 %860
        %v864 = vsel %vm444, %v859, 0
        %866 = vmatprep.subr.mxu0 0.0
        %867 = vmatpush1.msra.mxu0 0.0
        %868 = vmatprep.subr.mxu0 0.0
        %869 = vmatpush1.msra.mxu0 0.0
        %870 = vmatprep.subr.mxu0 0.0
        %871 = vmatpush1.msra.mxu0 0.0
        %872 = vmatprep.subr.mxu0 0.0
        %873 = vmatpush1.msra.mxu0 0.0
        %874 = vmatprep.subr.mxu0 0.0
        %875 = vmatpush1.msra.mxu0 0.0
        %876 = vmatprep.subr.mxu0 0.0
        %877 = vmatpush1.msra.mxu0 0.0
        %878 = vmatprep.subr.mxu0 0.0
        %879 = vmatpush1.msra.mxu0 0.0
        %880 = vmatprep.subr.mxu0 0.0
        %881 = vmatpush1.msra.mxu0 0.0
        %882 = vmatprep.subr.mxu0 0.0
        %883 = vmatpush1.msra.mxu0 0.0
        %884 = vmatprep.subr.mxu0 0.0
        %885 = vmatpush1.msra.mxu0 0.0
        %886 = vmatprep.subr.mxu0 0.0
        %887 = vmatpush1.msra.mxu0 0.0
        %888 = vmatprep.subr.mxu0 0.0
        %889 = vmatpush1.msra.mxu0 0.0
        %890 = vmatprep.subr.mxu0 0.0
        %891 = vmatpush1.msra.mxu0 0.0
        %892 = vmatprep.subr.mxu0 0.0
        %893 = vmatpush1.msra.mxu0 0.0
        %894 = vmatprep.subr.mxu0 0.0
        %895 = vmatpush1.msra.mxu0 0.0
        %896 = vmatprep.subr.mxu0 0.0
        %897 = vmatpush1.msra.mxu0 %v861
        %898 = vmatprep.subr.mxu0 0.0
        %899 = vmatpush2.msra.mxu0 0.0
        %900 = vmatprep.subr.mxu0 0.0
        %901 = vmatpush2.msra.mxu0 0.0
        %902 = vmatprep.subr.mxu0 0.0
        %903 = vmatpush2.msra.mxu0 0.0
        %904 = vmatprep.subr.mxu0 0.0
        %905 = vmatpush2.msra.mxu0 0.0
        %906 = vmatprep.subr.mxu0 0.0
        %907 = vmatpush2.msra.mxu0 0.0
        %908 = vmatprep.subr.mxu0 0.0
        %909 = vmatpush2.msra.mxu0 0.0
        %910 = vmatprep.subr.mxu0 0.0
        %911 = vmatpush2.msra.mxu0 0.0
        %912 = vmatprep.subr.mxu0 0.0
        %913 = vmatpush2.msra.mxu0 0.0
        %914 = vmatprep.subr.mxu0 0.0
        %915 = vmatpush2.msra.mxu0 0.0
        %916 = vmatprep.subr.mxu0 0.0
        %917 = vmatpush2.msra.mxu0 0.0
        %918 = vmatprep.subr.mxu0 0.0
        %919 = vmatpush2.msra.mxu0 0.0
        %920 = vmatprep.subr.mxu0 0.0
        %921 = vmatpush2.msra.mxu0 0.0
        %922 = vmatprep.subr.mxu0 0.0
        %923 = vmatpush2.msra.mxu0 0.0
        %924 = vmatprep.subr.mxu0 0.0
        %925 = vmatpush2.msra.mxu0 0.0
        %926 = vmatprep.subr.mxu0 0.0
        %927 = vmatpush2.msra.mxu0 0.0
        %928 = vmatprep.subr.mxu0 0.0
        %929 = vmatpush2.msra.mxu0 0.0
        %930 = vmatprep.mubr.f32.mxu0 0.0
        %931 = vmatmul.mubr.f32.gmra.mxu0 %v864
        %v932 = vpop.f32.mrf.mxu0
        %v933 = vadd.f32 0.0, %v932
        %v934 = vpop.f32.mrf.mxu0
        %935 = vdwg.mxu0
        %936 = vrot.lane.b32.xlu0 %v440, 104
        %v937 = vpop.permute.xlu0 %936
        %938 = vrot.lane.b32.xlu0 %v440, 72
        %v939 = vpop.permute.xlu0 %938
        %v940 = vsel %vm444, %v937, 0
        %v942 = vsel %vm444, %v939, 0
        %944 = vmatprep.subr.mxu0 0.0
        %945 = vmatpush1.xpose.msra.mxu0 0.0
        %946 = vmatprep.subr.mxu0 0.0
        %947 = vmatpush1.xpose.msra.mxu0 0.0
        %948 = vmatprep.subr.mxu0 0.0
        %949 = vmatpush1.xpose.msra.mxu0 0.0
        %950 = vmatprep.subr.mxu0 0.0
        %951 = vmatpush1.xpose.msra.mxu0 0.0
        %952 = vmatprep.subr.mxu0 0.0
        %953 = vmatpush1.xpose.msra.mxu0 0.0
        %954 = vmatprep.subr.mxu0 0.0
        %955 = vmatpush1.xpose.msra.mxu0 0.0
        %956 = vmatprep.subr.mxu0 0.0
        %957 = vmatpush1.xpose.msra.mxu0 0.0
        %958 = vmatprep.subr.mxu0 0.0
        %959 = vmatpush1.xpose.msra.mxu0 0.0
        %960 = vmatprep.subr.mxu0 0.0
        %961 = vmatpush1.xpose.msra.mxu0 0.0
        %962 = vmatprep.subr.mxu0 0.0
        %963 = vmatpush1.xpose.msra.mxu0 0.0
        %964 = vmatprep.subr.mxu0 0.0
        %965 = vmatpush1.xpose.msra.mxu0 0.0
        %966 = vmatprep.subr.mxu0 0.0
        %967 = vmatpush1.xpose.msra.mxu0 0.0
        %968 = vmatprep.subr.mxu0 0.0
        %969 = vmatpush1.xpose.msra.mxu0 0.0
        %970 = vmatprep.subr.mxu0 0.0
        %971 = vmatpush1.xpose.msra.mxu0 0.0
        %972 = vmatprep.subr.mxu0 0.0
        %973 = vmatpush1.xpose.msra.mxu0 0.0
        %974 = vmatprep.subr.mxu0 0.0
        %975 = vmatpush1.xpose.msra.mxu0 %v942
        %976 = vmatprep.subr.mxu0 0.0
        %977 = vmatpush2.xpose.msra.mxu0 0.0
        %978 = vmatprep.subr.mxu0 0.0
        %979 = vmatpush2.xpose.msra.mxu0 0.0
        %980 = vmatprep.subr.mxu0 0.0
        %981 = vmatpush2.xpose.msra.mxu0 0.0
        %982 = vmatprep.subr.mxu0 0.0
        %983 = vmatpush2.xpose.msra.mxu0 0.0
        %984 = vmatprep.subr.mxu0 0.0
        %985 = vmatpush2.xpose.msra.mxu0 0.0
        %986 = vmatprep.subr.mxu0 0.0
        %987 = vmatpush2.xpose.msra.mxu0 0.0
        %988 = vmatprep.subr.mxu0 0.0
        %989 = vmatpush2.xpose.msra.mxu0 0.0
        %990 = vmatprep.subr.mxu0 0.0
        %991 = vmatpush2.xpose.msra.mxu0 0.0
        %992 = vmatprep.subr.mxu0 0.0
        %993 = vmatpush2.xpose.msra.mxu0 0.0
        %994 = vmatprep.subr.mxu0 0.0
        %995 = vmatpush2.xpose.msra.mxu0 0.0
        %996 = vmatprep.subr.mxu0 0.0
        %997 = vmatpush2.xpose.msra.mxu0 0.0
        %998 = vmatprep.subr.mxu0 0.0
        %999 = vmatpush2.xpose.msra.mxu0 0.0
        %1000 = vmatprep.subr.mxu0 0.0
        %1001 = vmatpush2.xpose.msra.mxu0 0.0
        %1002 = vmatprep.subr.mxu0 0.0
        %1003 = vmatpush2.xpose.msra.mxu0 0.0
        %1004 = vmatprep.subr.mxu0 0.0
        %1005 = vmatpush2.xpose.msra.mxu0 0.0
        %1006 = vmatprep.subr.mxu0 0.0
        %1007 = vmatpush2.xpose.msra.mxu0 0.0
        %1008 = vmatprep.mubr.f32.mxu0 0.0
        %1009 = vmatmul.mubr.f32.gmra.mxu0 %v940
        %v1010 = vpop.f32.mrf.mxu0
        %v1011 = vadd.f32 0.0, %v1010
        %v1012 = vpop.f32.mrf.mxu0
        %1013 = vdwg.mxu0
        %v1014 = vsel %vm444, %v1011, -inf
        %1015 = vmax.xlane.f32.xlu0 %v1014
        %v1016 = vpop.xlane.xlu0 %1015
        %v1017 = vsub.f32 %v1011, %v1016
        %v1018 = vmul.f32 %v1017, 1.442695
        %v1019 = vpow.pop %v1018
        %v1020 = vsel %vm444, %v1019, 0.0
        %1021 = vadd.xlane.f32.xlu0 %v1020
        %v1022 = vpop.xlane.xlu0 %1021
        %v1023 = vrcp.pop %v1022
        %v1024 = vmul.f32 %v1019, %v1023
        %1025 = vrot.lane.b32.xlu0 %v440, 40
        %v1026 = vpop.permute.xlu0 %1025
        %v1029 = vsel %vm444, %v1024, 0
        %1031 = vmatprep.subr.mxu0 0.0
        %1032 = vmatpush1.msra.mxu0 0.0
        %1033 = vmatprep.subr.mxu0 0.0
        %1034 = vmatpush1.msra.mxu0 0.0
        %1035 = vmatprep.subr.mxu0 0.0
        %1036 = vmatpush1.msra.mxu0 0.0
        %1037 = vmatprep.subr.mxu0 0.0
        %1038 = vmatpush1.msra.mxu0 0.0
        %1039 = vmatprep.subr.mxu0 0.0
        %1040 = vmatpush1.msra.mxu0 0.0
        %1041 = vmatprep.subr.mxu0 0.0
        %1042 = vmatpush1.msra.mxu0 0.0
        %1043 = vmatprep.subr.mxu0 0.0
        %1044 = vmatpush1.msra.mxu0 0.0
        %1045 = vmatprep.subr.mxu0 0.0
        %1046 = vmatpush1.msra.mxu0 0.0
        %1047 = vmatprep.subr.mxu0 0.0
        %1048 = vmatpush1.msra.mxu0 0.0
        %1049 = vmatprep.subr.mxu0 0.0
        %1050 = vmatpush1.msra.mxu0 0.0
        %1051 = vmatprep.subr.mxu0 0.0
        %1052 = vmatpush1.msra.mxu0 0.0
        %1053 = vmatprep.subr.mxu0 0.0
        %1054 = vmatpush1.msra.mxu0 0.0
        %1055 = vmatprep.subr.mxu0 0.0
        %1056 = vmatpush1.msra.mxu0 0.0
        %1057 = vmatprep.subr.mxu0 0.0
        %1058 = vmatpush1.msra.mxu0 0.0
        %1059 = vmatprep.subr.mxu0 0.0
        %1060 = vmatpush1.msra.mxu0 0.0
        %1061 = vmatprep.subr.mxu0 0.0
        %1062 = vmatpush1.msra.mxu0 %v1026
        %1063 = vmatprep.subr.mxu0 0.0
        %1064 = vmatpush2.msra.mxu0 0.0
        %1065 = vmatprep.subr.mxu0 0.0
        %1066 = vmatpush2.msra.mxu0 0.0
        %1067 = vmatprep.subr.mxu0 0.0
        %1068 = vmatpush2.msra.mxu0 0.0
        %1069 = vmatprep.subr.mxu0 0.0
        %1070 = vmatpush2.msra.mxu0 0.0
        %1071 = vmatprep.subr.mxu0 0.0
        %1072 = vmatpush2.msra.mxu0 0.0
        %1073 = vmatprep.subr.mxu0 0.0
        %1074 = vmatpush2.msra.mxu0 0.0
        %1075 = vmatprep.subr.mxu0 0.0
        %1076 = vmatpush2.msra.mxu0 0.0
        %1077 = vmatprep.subr.mxu0 0.0
        %1078 = vmatpush2.msra.mxu0 0.0
        %1079 = vmatprep.subr.mxu0 0.0
        %1080 = vmatpush2.msra.mxu0 0.0
        %1081 = vmatprep.subr.mxu0 0.0
        %1082 = vmatpush2.msra.mxu0 0.0
        %1083 = vmatprep.subr.mxu0 0.0
        %1084 = vmatpush2.msra.mxu0 0.0
        %1085 = vmatprep.subr.mxu0 0.0
        %1086 = vmatpush2.msra.mxu0 0.0
        %1087 = vmatprep.subr.mxu0 0.0
        %1088 = vmatpush2.msra.mxu0 0.0
        %1089 = vmatprep.subr.mxu0 0.0
        %1090 = vmatpush2.msra.mxu0 0.0
        %1091 = vmatprep.subr.mxu0 0.0
        %1092 = vmatpush2.msra.mxu0 0.0
        %1093 = vmatprep.subr.mxu0 0.0
        %1094 = vmatpush2.msra.mxu0 0.0
        %1095 = vmatprep.mubr.f32.mxu0 0.0
        %1096 = vmatmul.mubr.f32.gmra.mxu0 %v1029
        %v1097 = vpop.f32.mrf.mxu0
        %v1098 = vadd.f32 0.0, %v1097
        %v1099 = vpop.f32.mrf.mxu0
        %1100 = vdwg.mxu0
        %1102 = vrot.lane.b32.xlu0 %v768, 8
        %v1103 = vpop.permute.xlu0 %1102
        %1106 = vrot.lane.b32.xlu0 %v933, 16
        %v1107 = vpop.permute.xlu0 %1106
        %1110 = vrot.lane.b32.xlu0 %v1098, 24
        %v1111 = vpop.permute.xlu0 %1110
        %v1113 = vsel %vm444, %v603, %v1103
        %vm1114 = vcmask 130048
        %v1115 = vsel %vm1114, %v1113, %v1107
        %vm1116 = vcmask 195584
        %v1117 = vsel %vm1116, %v1115, %v1111
        %1118 = vst.msk [vmem:[#allocation3] sm:$0xff] %vm364, %v1117
        %v1119 = vld [vmem:[#allocation3] sm:$0xff]
        %v1120 = vld [vmem:[#allocation9] sm:$0xff]
        %v1121 = vld [vmem:[#allocation9 + $0x8] sm:$0xff]
        %v1122 = vld [vmem:[#allocation9 + $0x10] sm:$0xff]
        %v1123 = vld [vmem:[#allocation9 + $0x18] sm:$0xff]
        %v1124 = vld [vmem:[%s4] sm:$0x1]
        %v1126 = vlaneseq
        %v1127 = vshrl.u32 %v1126, 7
        %v1128 = vsub.s32 0, %v1127
        %v1129 = vrot.slane %v1124, %v1128
        %v1132 = vsel %vm364, %v1119, 0
        %1134 = vmatprep.subr.mxu0 0.0
        %1135 = vmatpush1.msra.mxu0 0.0
        %1136 = vmatprep.subr.mxu0 0.0
        %1137 = vmatpush1.msra.mxu0 0.0
        %1138 = vmatprep.subr.mxu0 0.0
        %1139 = vmatpush1.msra.mxu0 0.0
        %1140 = vmatprep.subr.mxu0 0.0
        %1141 = vmatpush1.msra.mxu0 0.0
        %1142 = vmatprep.subr.mxu0 0.0
        %1143 = vmatpush1.msra.mxu0 0.0
        %1144 = vmatprep.subr.mxu0 0.0
        %1145 = vmatpush1.msra.mxu0 0.0
        %1146 = vmatprep.subr.mxu0 0.0
        %1147 = vmatpush1.msra.mxu0 0.0
        %1148 = vmatprep.subr.mxu0 0.0
        %1149 = vmatpush1.msra.mxu0 0.0
        %1150 = vmatprep.subr.mxu0 0.0
        %1151 = vmatpush1.msra.mxu0 0.0
        %1152 = vmatprep.subr.mxu0 0.0
        %1153 = vmatpush1.msra.mxu0 0.0
        %1154 = vmatprep.subr.mxu0 0.0
        %1155 = vmatpush1.msra.mxu0 0.0
        %1156 = vmatprep.subr.mxu0 0.0
        %1157 = vmatpush1.msra.mxu0 0.0
        %1158 = vmatprep.subr.mxu0 0.0
        %1159 = vmatpush1.msra.mxu0 %v1123
        %1160 = vmatprep.subr.mxu0 0.0
        %1161 = vmatpush1.msra.mxu0 %v1122
        %1162 = vmatprep.subr.mxu0 0.0
        %1163 = vmatpush1.msra.mxu0 %v1121
        %1164 = vmatprep.subr.mxu0 0.0
        %1165 = vmatpush1.msra.mxu0 %v1120
        %1166 = vmatprep.subr.mxu0 0.0
        %1167 = vmatpush2.msra.mxu0 0.0
        %1168 = vmatprep.subr.mxu0 0.0
        %1169 = vmatpush2.msra.mxu0 0.0
        %1170 = vmatprep.subr.mxu0 0.0
        %1171 = vmatpush2.msra.mxu0 0.0
        %1172 = vmatprep.subr.mxu0 0.0
        %1173 = vmatpush2.msra.mxu0 0.0
        %1174 = vmatprep.subr.mxu0 0.0
        %1175 = vmatpush2.msra.mxu0 0.0
        %1176 = vmatprep.subr.mxu0 0.0
        %1177 = vmatpush2.msra.mxu0 0.0
        %1178 = vmatprep.subr.mxu0 0.0
        %1179 = vmatpush2.msra.mxu0 0.0
        %1180 = vmatprep.subr.mxu0 0.0
        %1181 = vmatpush2.msra.mxu0 0.0
        %1182 = vmatprep.subr.mxu0 0.0
        %1183 = vmatpush2.msra.mxu0 0.0
        %1184 = vmatprep.subr.mxu0 0.0
        %1185 = vmatpush2.msra.mxu0 0.0
        %1186 = vmatprep.subr.mxu0 0.0
        %1187 = vmatpush2.msra.mxu0 0.0
        %1188 = vmatprep.subr.mxu0 0.0
        %1189 = vmatpush2.msra.mxu0 0.0
        %1190 = vmatprep.subr.mxu0 0.0
        %1191 = vmatpush2.msra.mxu0 0.0
        %1192 = vmatprep.subr.mxu0 0.0
        %1193 = vmatpush2.msra.mxu0 0.0
        %1194 = vmatprep.subr.mxu0 0.0
        %1195 = vmatpush2.msra.mxu0 0.0
        %1196 = vmatprep.subr.mxu0 0.0
        %1197 = vmatpush2.msra.mxu0 0.0
        %1198 = vmatprep.mubr.f32.mxu0 0.0
        %1199 = vmatmul.mubr.f32.gmra.mxu0 %v1132
        %v1200 = vpop.f32.mrf.mxu0
        %v1201 = vadd.f32 %v1129, %v1200
        %v1202 = vpop.f32.mrf.mxu0
        %1203 = vdwg.mxu0
        %v1204 = vld [vmem:[%s305] sm:$0xff]
        %v1205 = vadd.f32 %v1201, %v1204
        %v1206 = vld [vmem:[#allocation10] sm:$0xff]
        %v1207 = vld [vmem:[#allocation10 + $0x8] sm:$0xff]
        %v1208 = vld [vmem:[#allocation10 + $0x10] sm:$0xff]
        %v1209 = vld [vmem:[#allocation10 + $0x18] sm:$0xff]
        %v1211 = vsel %vm364, %v1205, 0
        %1213 = vmatprep.subr.mxu0 0.0
        %1214 = vmatpush1.msra.mxu0 0.0
        %1215 = vmatprep.subr.mxu0 0.0
        %1216 = vmatpush1.msra.mxu0 0.0
        %1217 = vmatprep.subr.mxu0 0.0
        %1218 = vmatpush1.msra.mxu0 0.0
        %1219 = vmatprep.subr.mxu0 0.0
        %1220 = vmatpush1.msra.mxu0 0.0
        %1221 = vmatprep.subr.mxu0 0.0
        %1222 = vmatpush1.msra.mxu0 0.0
        %1223 = vmatprep.subr.mxu0 0.0
        %1224 = vmatpush1.msra.mxu0 0.0
        %1225 = vmatprep.subr.mxu0 0.0
        %1226 = vmatpush1.msra.mxu0 0.0
        %1227 = vmatprep.subr.mxu0 0.0
        %1228 = vmatpush1.msra.mxu0 0.0
        %1229 = vmatprep.subr.mxu0 0.0
        %1230 = vmatpush1.msra.mxu0 0.0
        %1231 = vmatprep.subr.mxu0 0.0
        %1232 = vmatpush1.msra.mxu0 0.0
        %1233 = vmatprep.subr.mxu0 0.0
        %1234 = vmatpush1.msra.mxu0 0.0
        %1235 = vmatprep.subr.mxu0 0.0
        %1236 = vmatpush1.msra.mxu0 0.0
        %1237 = vmatprep.subr.mxu0 0.0
        %1238 = vmatpush1.msra.mxu0 %v1209
        %1239 = vmatprep.subr.mxu0 0.0
        %1240 = vmatpush1.msra.mxu0 %v1208
        %1241 = vmatprep.subr.mxu0 0.0
        %1242 = vmatpush1.msra.mxu0 %v1207
        %1243 = vmatprep.subr.mxu0 0.0
        %1244 = vmatpush1.msra.mxu0 %v1206
        %1245 = vmatprep.subr.mxu0 0.0
        %1246 = vmatpush2.msra.mxu0 0.0
        %1247 = vmatprep.subr.mxu0 0.0
        %1248 = vmatpush2.msra.mxu0 0.0
        %1249 = vmatprep.subr.mxu0 0.0
        %1250 = vmatpush2.msra.mxu0 0.0
        %1251 = vmatprep.subr.mxu0 0.0
        %1252 = vmatpush2.msra.mxu0 0.0
        %1253 = vmatprep.subr.mxu0 0.0
        %1254 = vmatpush2.msra.mxu0 0.0
        %1255 = vmatprep.subr.mxu0 0.0
        %1256 = vmatpush2.msra.mxu0 0.0
        %1257 = vmatprep.subr.mxu0 0.0
        %1258 = vmatpush2.msra.mxu0 0.0
        %1259 = vmatprep.subr.mxu0 0.0
        %1260 = vmatpush2.msra.mxu0 0.0
        %1261 = vmatprep.subr.mxu0 0.0
        %1262 = vmatpush2.msra.mxu0 0.0
        %1263 = vmatprep.subr.mxu0 0.0
        %1264 = vmatpush2.msra.mxu0 0.0
        %1265 = vmatprep.subr.mxu0 0.0
        %1266 = vmatpush2.msra.mxu0 0.0
        %1267 = vmatprep.subr.mxu0 0.0
        %1268 = vmatpush2.msra.mxu0 0.0
        %1269 = vmatprep.subr.mxu0 0.0
        %1270 = vmatpush2.msra.mxu0 0.0
        %1271 = vmatprep.subr.mxu0 0.0
        %1272 = vmatpush2.msra.mxu0 0.0
        %1273 = vmatprep.subr.mxu0 0.0
        %1274 = vmatpush2.msra.mxu0 0.0
        %1275 = vmatprep.subr.mxu0 0.0
        %1276 = vmatpush2.msra.mxu0 0.0
        %1277 = vmatprep.mubr.f32.mxu0 0.0
        %1278 = vmatmul.mubr.f32.gmra.mxu0 %v1211
        %v1279 = vpop.f32.mrf.mxu0
        %v1280 = vadd.f32 0.0, %v1279
        %v1281 = vpop.f32.mrf.mxu0
        %1282 = vdwg.mxu0
        %v1283 = vld [vmem:[#allocation12] sm:$0xff]
        %v1284 = vld [vmem:[#allocation12 + $0x8] sm:$0xff]
        %v1285 = vld [vmem:[#allocation12 + $0x10] sm:$0xff]
        %v1286 = vld [vmem:[#allocation12 + $0x18] sm:$0xff]
        %v1288 = vsel %vm364, %v1280, 0
        %1290 = vmatprep.subr.mxu0 0.0
        %1291 = vmatpush1.msra.mxu0 0.0
        %1292 = vmatprep.subr.mxu0 0.0
        %1293 = vmatpush1.msra.mxu0 0.0
        %1294 = vmatprep.subr.mxu0 0.0
        %1295 = vmatpush1.msra.mxu0 0.0
        %1296 = vmatprep.subr.mxu0 0.0
        %1297 = vmatpush1.msra.mxu0 0.0
        %1298 = vmatprep.subr.mxu0 0.0
        %1299 = vmatpush1.msra.mxu0 0.0
        %1300 = vmatprep.subr.mxu0 0.0
        %1301 = vmatpush1.msra.mxu0 0.0
        %1302 = vmatprep.subr.mxu0 0.0
        %1303 = vmatpush1.msra.mxu0 0.0
        %1304 = vmatprep.subr.mxu0 0.0
        %1305 = vmatpush1.msra.mxu0 0.0
        %1306 = vmatprep.subr.mxu0 0.0
        %1307 = vmatpush1.msra.mxu0 0.0
        %1308 = vmatprep.subr.mxu0 0.0
        %1309 = vmatpush1.msra.mxu0 0.0
        %1310 = vmatprep.subr.mxu0 0.0
        %1311 = vmatpush1.msra.mxu0 0.0
        %1312 = vmatprep.subr.mxu0 0.0
        %1313 = vmatpush1.msra.mxu0 0.0
        %1314 = vmatprep.subr.mxu0 0.0
        %1315 = vmatpush1.msra.mxu0 %v1286
        %1316 = vmatprep.subr.mxu0 0.0
        %1317 = vmatpush1.msra.mxu0 %v1285
        %1318 = vmatprep.subr.mxu0 0.0
        %1319 = vmatpush1.msra.mxu0 %v1284
        %1320 = vmatprep.subr.mxu0 0.0
        %1321 = vmatpush1.msra.mxu0 %v1283
        %1322 = vmatprep.subr.mxu0 0.0
        %1323 = vmatpush2.msra.mxu0 0.0
        %1324 = vmatprep.subr.mxu0 0.0
        %1325 = vmatpush2.msra.mxu0 0.0
        %1326 = vmatprep.subr.mxu0 0.0
        %1327 = vmatpush2.msra.mxu0 0.0
        %1328 = vmatprep.subr.mxu0 0.0
        %1329 = vmatpush2.msra.mxu0 0.0
        %1330 = vmatprep.subr.mxu0 0.0
        %1331 = vmatpush2.msra.mxu0 0.0
        %1332 = vmatprep.subr.mxu0 0.0
        %1333 = vmatpush2.msra.mxu0 0.0
        %1334 = vmatprep.subr.mxu0 0.0
        %1335 = vmatpush2.msra.mxu0 0.0
        %1336 = vmatprep.subr.mxu0 0.0
        %1337 = vmatpush2.msra.mxu0 0.0
        %1338 = vmatprep.subr.mxu0 0.0
        %1339 = vmatpush2.msra.mxu0 0.0
        %1340 = vmatprep.subr.mxu0 0.0
        %1341 = vmatpush2.msra.mxu0 0.0
        %1342 = vmatprep.subr.mxu0 0.0
        %1343 = vmatpush2.msra.mxu0 0.0
        %1344 = vmatprep.subr.mxu0 0.0
        %1345 = vmatpush2.msra.mxu0 0.0
        %1346 = vmatprep.subr.mxu0 0.0
        %1347 = vmatpush2.msra.mxu0 0.0
        %1348 = vmatprep.subr.mxu0 0.0
        %1349 = vmatpush2.msra.mxu0 0.0
        %1350 = vmatprep.subr.mxu0 0.0
        %1351 = vmatpush2.msra.mxu0 0.0
        %1352 = vmatprep.subr.mxu0 0.0
        %1353 = vmatpush2.msra.mxu0 0.0
        %1354 = vmatprep.mubr.f32.mxu0 0.0
        %1355 = vmatmul.mubr.f32.gmra.mxu0 %v1288
        %v1356 = vpop.f32.mrf.mxu0
        %v1357 = vadd.f32 %v1205, %v1356
        %v1358 = vpop.f32.mrf.mxu0
        %1359 = vdwg.mxu0
        %1360 = vst.msk [vmem:[%s351] sm:$0xff] %vm364, %v1357
        %s1361 = sand.u32 %s186, 1
        %s1362 = scalar_lea.sflag [#allocation6], %s1361
        %s1363 = sand.u32 %s186, 1
        %s1364 = smul.addr %s1363, 8
        %s1365 = scalar_lea.vmem [#allocation13], %s1364
        // Predicated region
        $region69: #{tpu_custom_call.1} parent=47 // pred_check
          %p1366 = pneg %p196
        $region70: #{tpu_custom_call.1} parent=47 // pred_check_branch
          %1368 = sbr.rel (%p1366) target = $region72
        $region71: #{tpu_custom_call.1} parent=47 // pred_region
          %s1370 = ssub.s32 128, 128
          %1371 = vsyncadd %s1362, %s1370
          %s1372 = smul.addr %s26, 128
          %s1373 = scalar_lea.hbm %s7, %s1372
          %s1375 = sshll.u32 %s1365, 4
          %s1376 = int_to_ptr.vmem [resolvable:$true] %s1375
          %1378 = dma.vmem_to_hbm [thread:$0]  %s1376, 128, %s1373, %s1362
        $region72: #{tpu_custom_call.1} parent=47 // pred_fallthru
          _
      $region48: #{tpu_custom_call.1} parent=5 // pred_fallthru
        _
      %p1379 = scmp.le.s32.totalorder 2, %s21
      // Predicated region
      $region73: #{tpu_custom_call.1} parent=5 // pred_check
        %p1380 = pneg %p1379
      $region74: #{tpu_custom_call.1} parent=5 // pred_check_branch
        %1382 = sbr.rel (%p1380) target = $region76
      $region75: #{tpu_custom_call.1} parent=5 // pred_region
        %s1383 = ssub.s32 %s21, 2
        // Predicated region
        $region77: #{tpu_custom_call.1} parent=75 // pred_check
          %p1384 = pneg %p202
        $region78: #{tpu_custom_call.1} parent=75 // pred_check_branch
          %1386 = sbr.rel (%p1384) target = $region80
        $region79: #{tpu_custom_call.1} parent=75 // pred_region
          %s1387 = sand.u32 %s187, 1
          %s1388 = scalar_lea.sflag [#allocation6], %s1387
          %s1389 = sand.u32 %s187, 1
          %s1390 = smul.addr %s1389, 8
          %s1391 = scalar_lea.vmem [#allocation13], %s1390
          %1392 = dma.done %s1388, 128
        $region80: #{tpu_custom_call.1} parent=75 // pred_fallthru
          _
      $region76: #{tpu_custom_call.1} parent=5 // pred_fallthru
        _
    $region6: #{tpu_custom_call.1} parent=1 // loop_footer
      %s25 = sadd.s32 1, %s21
    $region7: #{tpu_custom_call.1} parent=1 // loop_footer_branch
      %20 = sbr.rel target = $region3
    $region8: #{tpu_custom_call.1} parent=1 // loop_exit
      _
    %1393 = vsyncpa [#allocation5], 1
    %s1394 = scalar_lea.sflag [#allocation5], 1
    %1395 = vsyncpa %s1394, 1
    %1396 = vsyncpa [#allocation8], 1
    %1397 = vsyncpa [#allocation11], 1
    %1398 = vsyncpa [#allocation6], 1
    %s1399 = scalar_lea.sflag [#allocation6], 1
    %1400 = vsyncpa %s1399, 1

</llo_original>
